<compile_context>
chip_gen: v5e
topology: v5e:2x2
jax: 0.10.0
libtpu: 0.0.40
codegen_flags: <defaults>
</compile_context>

<pallas_src>
import functools
import math

import jax
import jax.numpy as jnp
from jax.experimental import pallas as pl
from jax.experimental.pallas import tpu as pltpu


LN_EPS_BERT = 1e-12   # BertConfig.layer_norm_eps
LN_EPS_AUDIO = 1e-5   # nn.LayerNorm default


# ----------------------------------------------------------------------------
# Small helpers
# ----------------------------------------------------------------------------

# TODO(synk): exact-erf GELU is implemented via the Abramowitz-Stegun 7.1.26
# rational approximation (|abs err| < 1.5e-7) using only exp, since a native
# erf lowering inside Mosaic is not guaranteed on all generations.
def _gelu_erf(x):
    z = x * 0.7071067811865476
    a = jnp.abs(z)
    t = 1.0 / (1.0 + 0.3275911 * a)
    poly = t * (0.254829592 + t * (-0.284496736 + t * (1.421413741
               + t * (-1.453152027 + t * 1.061405429))))
    erf_a = 1.0 - poly * jnp.exp(-a * a)
    erf_z = jnp.where(z >= 0.0, erf_a, -erf_a)
    return 0.5 * x * (1.0 + erf_z)


def _ln_f32(v, g, b, eps):
    mu = jnp.mean(v, axis=-1, keepdims=True)
    var = jnp.mean(jnp.square(v - mu), axis=-1, keepdims=True)
    return (v - mu) * jax.lax.rsqrt(var + eps) * g + b


def _nbytes(shape, dtype):
    return math.prod(shape) * jnp.dtype(dtype).itemsize


def _vmem_limit(est_bytes):
    """Explicit scoped-VMEM limit: 2x estimated residency, clamped to [16, 64] MiB
    (64 MiB = v7x physical per-TC VMEM; default scoped limits are 16/32 MiB)."""
    return int(min(max(2 * est_bytes, 16 * 1024 * 1024), 64 * 1024 * 1024))


# ----------------------------------------------------------------------------
# Row-tiled LayerNorm kernel (audio_ln, query-token embeddings LN)
# ----------------------------------------------------------------------------

def _layernorm_kernel(x_ref, g_ref, b_ref, o_ref, *, eps):
    x = x_ref[...].astype(jnp.float32)
    o_ref[...] = _ln_f32(x, g_ref[...], b_ref[...], eps).astype(o_ref.dtype)


def layernorm(x, gamma, beta, *, eps, out_dtype=None):
    """LayerNorm over last dim; x:(M,D), gamma/beta:(1,D). Row-tiled over M."""
    M, D = x.shape
    out_dtype = x.dtype if out_dtype is None else out_dtype
    tm = M if M <= 512 else 512
    est = 2 * 2 * _nbytes((tm, D), jnp.float32) + 2 * _nbytes((1, D), jnp.float32)
    return pl.pallas_call(
        functools.partial(_layernorm_kernel, eps=eps),
        out_shape=jax.ShapeDtypeStruct((M, D), out_dtype),
        grid=(pl.cdiv(M, tm),),
        in_specs=[
            pl.BlockSpec((tm, D), lambda i: (i, 0)),
            pl.BlockSpec((1, D), lambda i: (0, 0), pipeline_mode=pl.Buffered(1)),
            pl.BlockSpec((1, D), lambda i: (0, 0), pipeline_mode=pl.Buffered(1)),
        ],
        out_specs=pl.BlockSpec((tm, D), lambda i: (i, 0)),
        compiler_params=pltpu.CompilerParams(
            dimension_semantics=("parallel",),
            vmem_limit_bytes=_vmem_limit(est)),
    )(x, gamma, beta)


# ----------------------------------------------------------------------------
# Fused Q-Former kernel: ALL layers in one pallas_call, grid = (B, n_layers)
# ----------------------------------------------------------------------------

_LAYER_PARAM_ORDER = (
    "sa_wqkv", "sa_bqkv", "sa_wo", "sa_bo", "ln1_g", "ln1_b",
    "ca_wq", "ca_bq", "ca_wkv", "ca_bkv", "ca_wo", "ca_bo", "ln2_g", "ln2_b",
    "ffn_w1", "ffn_b1", "ffn_w2", "ffn_b2", "ln3_g", "ln3_b",
)


def _qformer_kernel(
        x_ref, enc_ref,
        sa_wqkv_ref, sa_bqkv_ref, sa_wo_ref, sa_bo_ref, ln1_g_ref, ln1_b_ref,
        ca_wq_ref, ca_bq_ref, ca_wkv_ref, ca_bkv_ref, ca_wo_ref, ca_bo_ref,
        ln2_g_ref, ln2_b_ref,
        ffn_w1_ref, ffn_b1_ref, ffn_w2_ref, ffn_b2_ref, ln3_g_ref, ln3_b_ref,
        o_ref, x_carry, *, n_heads, eps):
    S, D = x_ref.shape[1], x_ref.shape[2]
    dh = D // n_heads
    scale = 1.0 / math.sqrt(dh)
    l = pl.program_id(1)

    # Layer 0: load the (LayerNorm'ed) query-token hidden state into the carry.
    @pl.when(l == 0)
    def _():
        x_carry[...] = x_ref[0].astype(jnp.float32)

    x = x_carry[...]                     # (S, D)  f32 running hidden state
    enc = enc_ref[0]                     # (Se, D) bf16 normalized audio features

    def mha(q_lin, kv_lin, kv_off, wo, bo):
        """Multi-head attention; head-merge done with ONE Wo matmul.

        q_lin:  (S, D)   f32, heads packed along lanes.
        kv_lin: (Skv, *) f32, K at columns [kv_off, kv_off+D), V at [kv_off+D, kv_off+2D).
        Returns (S, D) f32 = concat_h(softmax(q_h k_h^T * scale) v_h) @ Wo + bo.
        """
        ctx_parts = []
        for h in range(n_heads):
            q_h = q_lin[:, h * dh:(h + 1) * dh].astype(jnp.bfloat16)
            k_h = kv_lin[:, kv_off + h * dh: kv_off + (h + 1) * dh].astype(jnp.bfloat16)
            v_h = kv_lin[:, kv_off + D + h * dh: kv_off + D + (h + 1) * dh].astype(jnp.bfloat16)
            s = jax.lax.dot_general(q_h, k_h, (((1,), (1,)), ((), ())),
                                    preferred_element_type=jnp.float32) * scale
            s = s - jnp.max(s, axis=-1, keepdims=True)
            p = jnp.exp(s)
            p = p * pl.reciprocal(jnp.sum(p, axis=-1, keepdims=True), approx=True)
            ctx_parts.append(jnp.dot(p.astype(jnp.bfloat16), v_h,
                                     preferred_element_type=jnp.float32))
        ctx = jnp.concatenate(ctx_parts, axis=-1).astype(jnp.bfloat16)   # (S, D)
        return jnp.dot(ctx, wo, preferred_element_type=jnp.float32) + bo

    # --- self attention (fused QKV matmul) ---
    qkv = jnp.dot(x.astype(jnp.bfloat16), sa_wqkv_ref[0],
                  preferred_element_type=jnp.float32) + sa_bqkv_ref[0]   # (S, 3D)
    attn = mha(qkv[:, :D], qkv, D, sa_wo_ref[0], sa_bo_ref[0])
    x1 = _ln_f32(attn + x, ln1_g_ref[0], ln1_b_ref[0], eps)

    # --- cross attention: queries attend to audio features (fused KV matmul) ---
    qc = jnp.dot(x1.astype(jnp.bfloat16), ca_wq_ref[0],
                 preferred_element_type=jnp.float32) + ca_bq_ref[0]      # (S, D)
    kvc = jnp.dot(enc, ca_wkv_ref[0],
                  preferred_element_type=jnp.float32) + ca_bkv_ref[0]    # (Se, 2D)
    attn_c = mha(qc, kvc, 0, ca_wo_ref[0], ca_bo_ref[0])
    x2 = _ln_f32(attn_c + x1, ln2_g_ref[0], ln2_b_ref[0], eps)

    # --- query-branch feed forward with fused GELU ---
    h1 = jnp.dot(x2.astype(jnp.bfloat16), ffn_w1_ref[0],
                 preferred_element_type=jnp.float32) + ffn_b1_ref[0]     # (S, I)
    h1 = _gelu_erf(h1)
    h2 = jnp.dot(h1.astype(jnp.bfloat16), ffn_w2_ref[0],
                 preferred_element_type=jnp.float32) + ffn_b2_ref[0]     # (S, D)
    x3 = _ln_f32(h2 + x2, ln3_g_ref[0], ln3_b_ref[0], eps)

    x_carry[...] = x3
    # Output block index is constant along the layer axis, so only the final
    # layer's value is written back to HBM.
    o_ref[0] = x3.astype(o_ref.dtype)


def qformer(x, enc, lp, *, n_heads):
    """All Q-Former layers in one call. x:(B,S,D) f32 queries, enc:(B,Se,D) bf16."""
    B, S, D = x.shape
    Se = enc.shape[1]
    weights = [lp[name] for name in _LAYER_PARAM_ORDER]       # each (L, r, c)
    L = weights[0].shape[0]
    # Stacked per-layer weight blocks: index changes with the layer axis, so the
    # default double buffer prefetches layer l+1 weights behind layer l compute.
    w_specs = [pl.BlockSpec((1,) + w.shape[1:], lambda b, l: (l, 0, 0))
               for w in weights]
    est = (2 * sum(_nbytes(w.shape[1:], w.dtype) for w in weights)
           + 2 * 2 * _nbytes((1, S, D), x.dtype)      # x in + out (double-buffered)
           + 2 * _nbytes((1, Se, D), enc.dtype)       # enc
           + _nbytes((S, D), jnp.float32))            # carry scratch
    # NOTE: weights are re-streamed once per batch-grid element; fine for the small
    # query-token batch this module sees (32 query rows per clip).
    return pl.pallas_call(
        functools.partial(_qformer_kernel, n_heads=n_heads, eps=LN_EPS_BERT),
        out_shape=jax.ShapeDtypeStruct((B, S, D), x.dtype),
        grid=(B, L),
        in_specs=[pl.BlockSpec((1, S, D), lambda b, l: (b, 0, 0)),
                  pl.BlockSpec((1, Se, D), lambda b, l: (b, 0, 0))] + w_specs,
        out_specs=pl.BlockSpec((1, S, D), lambda b, l: (b, 0, 0)),
        scratch_shapes=[pltpu.VMEM((S, D), jnp.float32)],
        compiler_params=pltpu.CompilerParams(
            dimension_semantics=("parallel", "arbitrary"),
            vmem_limit_bytes=_vmem_limit(est)),
    )(x, enc, *weights)


# ----------------------------------------------------------------------------
# audio_proj: Linear -> GELU (stage 1) then N-tiled Linear (stage 2, parallel)
# ----------------------------------------------------------------------------

def _mlp_hidden_kernel(x_ref, w1_ref, b1_ref, h_ref):
    h = jnp.dot(x_ref[...].astype(jnp.bfloat16), w1_ref[...],
                preferred_element_type=jnp.float32) + b1_ref[...]
    h_ref[...] = _gelu_erf(h).astype(h_ref.dtype)


def _mlp_out_kernel(h_ref, w2_ref, b2_ref, o_ref):
    o_ref[...] = (jnp.dot(h_ref[...], w2_ref[...],
                          preferred_element_type=jnp.float32)
                  + b2_ref[...]).astype(o_ref.dtype)


def mlp_proj(x, w1, b1, w2, b2):
    """y = gelu(x @ w1 + b1) @ w2 + b2 ; x:(M,D) f32, w1:(D,Dm) bf16, w2:(Dm,N) bf16."""
    M, D = x.shape
    Dm = w1.shape[1]
    N = w2.shape[1]

    # Stage 1: h = gelu(x @ w1 + b1), emitted in bf16, tiled along Dm.
    tn1 = Dm if Dm <= 1024 else 1024
    est1 = (_nbytes((M, D), x.dtype) + 2 * _nbytes((D, tn1), w1.dtype)
            + 2 * _nbytes((1, tn1), jnp.float32) + 2 * _nbytes((M, tn1), jnp.bfloat16))
    h = pl.pallas_call(
        _mlp_hidden_kernel,
        out_shape=jax.ShapeDtypeStruct((M, Dm), jnp.bfloat16),
        grid=(pl.cdiv(Dm, tn1),),
        in_specs=[
            pl.BlockSpec((M, D), lambda j: (0, 0), pipeline_mode=pl.Buffered(1)),
            pl.BlockSpec((D, tn1), lambda j: (0, j)),
            pl.BlockSpec((1, tn1), lambda j: (0, j)),
        ],
        out_specs=pl.BlockSpec((M, tn1), lambda j: (0, j)),
        compiler_params=pltpu.CompilerParams(
            dimension_semantics=("parallel",),
            vmem_limit_bytes=_vmem_limit(est1)),
    )(x, w1, b1)

    # Stage 2: out = h @ w2 + b2 with the large w2 streamed along N.  No cross-step
    # scratch dependency, so the N axis is "parallel" (dual-TC on v7x).
    tn2 = N if N <= 1024 else 1024
    est2 = (_nbytes((M, Dm), jnp.bfloat16) + 2 * _nbytes((Dm, tn2), w2.dtype)
            + 2 * _nbytes((1, tn2), jnp.float32) + 2 * _nbytes((M, tn2), jnp.float32))
    out = pl.pallas_call(
        _mlp_out_kernel,
        out_shape=jax.ShapeDtypeStruct((M, N), jnp.float32),
        grid=(pl.cdiv(N, tn2),),
        in_specs=[
            pl.BlockSpec((M, Dm), lambda j: (0, 0), pipeline_mode=pl.Buffered(1)),
            pl.BlockSpec((Dm, tn2), lambda j: (0, j)),
            pl.BlockSpec((1, tn2), lambda j: (0, j)),
        ],
        out_specs=pl.BlockSpec((M, tn2), lambda j: (0, j)),
        compiler_params=pltpu.CompilerParams(
            dimension_semantics=("parallel",),
            vmem_limit_bytes=_vmem_limit(est2)),
    )(h, w2, b2)
    return out


# ----------------------------------------------------------------------------
# Parameter construction (fused QKV / KV, bf16 matmul weights, layer-stacked)
# ----------------------------------------------------------------------------

def init_params(key, *, hidden, n_query, n_heads, intermediate, d_model, n_layers):
    std = 0.02  # BertConfig.initializer_range
    keys = iter(jax.random.split(key, 3 + n_layers * 10))

    def w(shape, dtype=jnp.bfloat16):
        return (std * jax.random.normal(next(keys), shape, jnp.float32)).astype(dtype)

    def zeros(shape):
        return jnp.zeros(shape, jnp.float32)

    def ones(shape):
        return jnp.ones(shape, jnp.float32)

    params = {
        "audio_ln_g": ones((1, hidden)), "audio_ln_b": zeros((1, hidden)),
        "query_tokens": w((1, n_query, hidden), jnp.float32),
        "emb_ln_g": ones((1, hidden)), "emb_ln_b": zeros((1, hidden)),
        "proj_w1": w((hidden, d_model)), "proj_b1": zeros((1, d_model)),
        "proj_w2": w((d_model, d_model)), "proj_b2": zeros((1, d_model)),
    }

    per_layer = []
    for _ in range(n_layers):
        wq, wk, wv = w((hidden, hidden)), w((hidden, hidden)), w((hidden, hidden))
        ca_wk, ca_wv = w((hidden, hidden)), w((hidden, hidden))
        per_layer.append({
            # self attention (fused QKV)
            "sa_wqkv": jnp.concatenate([wq, wk, wv], axis=1),
            "sa_bqkv": zeros((1, 3 * hidden)),
            "sa_wo": w((hidden, hidden)), "sa_bo": zeros((1, hidden)),
            "ln1_g": ones((1, hidden)), "ln1_b": zeros((1, hidden)),
            # cross attention (encoder_width == hidden), fused KV
            "ca_wq": w((hidden, hidden)), "ca_bq": zeros((1, hidden)),
            "ca_wkv": jnp.concatenate([ca_wk, ca_wv], axis=1),
            "ca_bkv": zeros((1, 2 * hidden)),
            "ca_wo": w((hidden, hidden)), "ca_bo": zeros((1, hidden)),
            "ln2_g": ones((1, hidden)), "ln2_b": zeros((1, hidden)),
            # query-branch feed forward
            "ffn_w1": w((hidden, intermediate)), "ffn_b1": zeros((1, intermediate)),
            "ffn_w2": w((intermediate, hidden)), "ffn_b2": zeros((1, hidden)),
            "ln3_g": ones((1, hidden)), "ln3_b": zeros((1, hidden)),
        })
    # Stack each per-layer param along a leading layer axis so the whole encoder
    # runs in a single pallas_call with layer-indexed weight blocks.
    params["layers"] = {
        name: jnp.stack([lp[name] for lp in per_layer], axis=0)
        for name in _LAYER_PARAM_ORDER
    }
    return params


# ----------------------------------------------------------------------------
# Model forward
# ----------------------------------------------------------------------------

def _forward_3d(audio_feature, params, *, n_query, n_heads, d_model):
    B, N, D = audio_feature.shape

    # audio LayerNorm (eps=1e-5); emit bf16 since enc is only consumed by the
    # bf16 cross-attn KV matmul -> halves enc HBM / per-layer VMEM traffic.
    enc = layernorm(audio_feature.reshape(B * N, D),
                    params["audio_ln_g"], params["audio_ln_b"],
                    eps=LN_EPS_AUDIO, out_dtype=jnp.bfloat16).reshape(B, N, D)

    # query tokens -> BertEmbeddings LayerNorm (eps=1e-12, dropout=identity).
    # Input-independent: computed once on (n_query, D), then broadcast to batch.
    q0 = layernorm(params["query_tokens"].reshape(n_query, D),
                   params["emb_ln_g"], params["emb_ln_b"], eps=LN_EPS_BERT)
    x = jnp.broadcast_to(q0[None], (B, n_query, D))

    # Q-Former encoder (all layers fused in one pallas_call)
    x = qformer(x, enc, params["layers"], n_heads=n_heads)

    # audio_proj: Linear -> GELU -> Linear
    out = mlp_proj(x.reshape(B * n_query, D),
                   params["proj_w1"], params["proj_b1"],
                   params["proj_w2"], params["proj_b2"])
    return out.reshape(B, n_query, d_model)


def al_projector_forward(audio_feature, params, *, n_query, n_heads, d_model):
    if audio_feature.ndim == 4:
        b, t, n, d = audio_feature.shape
        out = _forward_3d(audio_feature.reshape(b * t, n, d), params,
                          n_query=n_query, n_heads=n_heads, d_model=d_model)
        return out.reshape(b, t * n_query, d_model)
    elif audio_feature.ndim == 3:
        return _forward_3d(audio_feature, params,
                           n_query=n_query, n_heads=n_heads, d_model=d_model)
    else:
        raise ValueError("audio_feature must be (b,n,d) or (b,t,n,d)")


# ----------------------------------------------------------------------------
# Main
# ----------------------------------------------------------------------------

if __name__ == "__main__":
    # Small, module-consistent config (scaled-down bert-base / d_model):
    HIDDEN = 128        # hidden_size (768 in the real module)
    N_QUERY = 8         # num_query_token (32 in the real module)
    N_HEADS = 4         # num_attention_heads (12 in the real module)
    INTERMEDIATE = 256  # intermediate_size (3072 in the real module)
    D_MODEL = 128       # d_model (3584 in the real module)
    N_LAYERS = 2        # num_hidden_layers
    B, N = 2, 16        # batch, audio tokens

    key = jax.random.PRNGKey(0)
    k_param, k_input = jax.random.split(key)

    params = init_params(k_param, hidden=HIDDEN, n_query=N_QUERY,
                         n_heads=N_HEADS, intermediate=INTERMEDIATE,
                         d_model=D_MODEL, n_layers=N_LAYERS)

    audio_feature = jax.random.normal(k_input, (B, N, HIDDEN), jnp.float32)

    fwd = jax.jit(functools.partial(al_projector_forward,
                                    n_query=N_QUERY, n_heads=N_HEADS,
                                    d_model=D_MODEL))
    out = fwd(audio_feature, params)
    out = jax.block_until_ready(out)

    assert out.shape == (B, N_QUERY, D_MODEL), out.shape
    assert out.dtype == jnp.float32
    assert bool(jnp.all(jnp.isfinite(out)))
    print("KERNEL_OK")
</pallas_src>

<mosaic_0001>
module attributes {stable_mosaic.version = 11 : i64} {
  func.func @_layernorm_kernel(%arg0: i32, %arg1: memref<32x128xf32, #tpu.memory_space<vmem>>, %arg2: memref<1x128xf32, #tpu.memory_space<vmem>>, %arg3: memref<1x128xf32, #tpu.memory_space<vmem>>, %arg4: memref<32x128xbf16, #tpu.memory_space<vmem>>) attributes {dimension_semantics = [#tpu.dimension_semantics<parallel>], iteration_bounds = array<i64: 1>, scalar_prefetch = 0 : i64, scratch_operands = 0 : i64, tpu.core_type = #tpu.core_type<tc>, window_params = [{transform_indices = @transform_0, window_bounds = array<i64: 32, 128>}, {pipeline_mode = #tpu.pipeline_mode<synchronous>, transform_indices = @transform_1, window_bounds = array<i64: 1, 128>}, {pipeline_mode = #tpu.pipeline_mode<synchronous>, transform_indices = @transform_2, window_bounds = array<i64: 1, 128>}, {transform_indices = @transform_3, window_bounds = array<i64: 32, 128>}]} {
    %c0 = arith.constant 0 : index
    %c0_0 = arith.constant 0 : index
    %0 = vector.load %arg1[%c0, %c0_0] : memref<32x128xf32, #tpu.memory_space<vmem>>, vector<32x128xf32>
    %c0_1 = arith.constant 0 : index
    %c0_2 = arith.constant 0 : index
    %1 = vector.load %arg2[%c0_1, %c0_2] : memref<1x128xf32, #tpu.memory_space<vmem>>, vector<1x128xf32>
    %c0_3 = arith.constant 0 : index
    %c0_4 = arith.constant 0 : index
    %2 = vector.load %arg3[%c0_3, %c0_4] : memref<1x128xf32, #tpu.memory_space<vmem>>, vector<1x128xf32>
    %cst = arith.constant dense<0.000000e+00> : vector<32xf32>
    %3 = vector.multi_reduction <add>, %0, %cst [1] : vector<32x128xf32> to vector<32xf32>
    %4 = vector.shape_cast %3 : vector<32xf32> to vector<32x1xf32>
    %cst_5 = arith.constant 1.280000e+02 : f32
    %5 = vector.broadcast %cst_5 : f32 to vector<32x1xf32>
    %6 = arith.divf %4, %5 : vector<32x1xf32>
    %7 = vector.broadcast %6 : vector<32x1xf32> to vector<32x128xf32>
    %8 = arith.subf %0, %7 : vector<32x128xf32>
    %9 = arith.mulf %8, %8 : vector<32x128xf32>
    %cst_6 = arith.constant dense<0.000000e+00> : vector<32xf32>
    %10 = vector.multi_reduction <add>, %9, %cst_6 [1] : vector<32x128xf32> to vector<32xf32>
    %11 = vector.shape_cast %10 : vector<32xf32> to vector<32x1xf32>
    %cst_7 = arith.constant 1.280000e+02 : f32
    %12 = vector.broadcast %cst_7 : f32 to vector<32x1xf32>
    %13 = arith.divf %11, %12 : vector<32x1xf32>
    %14 = vector.broadcast %6 : vector<32x1xf32> to vector<32x128xf32>
    %15 = arith.subf %0, %14 : vector<32x128xf32>
    %cst_8 = arith.constant 9.99999974E-6 : f32
    %16 = vector.broadcast %cst_8 : f32 to vector<32x1xf32>
    %17 = arith.addf %13, %16 : vector<32x1xf32>
    %18 = math.rsqrt %17 : vector<32x1xf32>
    %19 = vector.broadcast %18 : vector<32x1xf32> to vector<32x128xf32>
    %20 = arith.mulf %15, %19 : vector<32x128xf32>
    %21 = vector.broadcast %1 : vector<1x128xf32> to vector<32x128xf32>
    %22 = arith.mulf %20, %21 : vector<32x128xf32>
    %23 = vector.broadcast %2 : vector<1x128xf32> to vector<32x128xf32>
    %24 = arith.addf %22, %23 : vector<32x128xf32>
    %25 = arith.truncf %24 : vector<32x128xf32> to vector<32x128xbf16>
    %c0_9 = arith.constant 0 : index
    %c0_10 = arith.constant 0 : index
    %26 = vector.load %arg4[%c0_9, %c0_10] : memref<32x128xbf16, #tpu.memory_space<vmem>>, vector<32x128xbf16>
    tpu.vector_store %arg4[%c0_9, %c0_10], %25 {strides = array<i32>} : memref<32x128xbf16, #tpu.memory_space<vmem>>, vector<32x128xbf16>,
    return
  }
  func.func @transform_0(%arg0: i32) -> (i32, i32) {
    %c0_i32 = arith.constant 0 : i32
    %c0_i32_0 = arith.constant 0 : i32
    return %arg0, %c0_i32 : i32, i32
  }
  func.func @transform_1(%arg0: i32) -> (i32, i32) {
    %c0_i32 = arith.constant 0 : i32
    %c0_i32_0 = arith.constant 0 : i32
    %c0_i32_1 = arith.constant 0 : i32
    return %c0_i32, %c0_i32_0 : i32, i32
  }
  func.func @transform_2(%arg0: i32) -> (i32, i32) {
    %c0_i32 = arith.constant 0 : i32
    %c0_i32_0 = arith.constant 0 : i32
    %c0_i32_1 = arith.constant 0 : i32
    return %c0_i32, %c0_i32_0 : i32, i32
  }
  func.func @transform_3(%arg0: i32) -> (i32, i32) {
    %c0_i32 = arith.constant 0 : i32
    %c0_i32_0 = arith.constant 0 : i32
    return %arg0, %c0_i32 : i32, i32
  }
}

module attributes {stable_mosaic.version = 11 : i64} {
  func.func @_layernorm_kernel(%arg0: i32, %arg1: memref<8x128xf32, #tpu.memory_space<vmem>>, %arg2: memref<1x128xf32, #tpu.memory_space<vmem>>, %arg3: memref<1x128xf32, #tpu.memory_space<vmem>>, %arg4: memref<8x128xf32, #tpu.memory_space<vmem>>) attributes {dimension_semantics = [#tpu.dimension_semantics<parallel>], iteration_bounds = array<i64: 1>, scalar_prefetch = 0 : i64, scratch_operands = 0 : i64, tpu.core_type = #tpu.core_type<tc>, window_params = [{transform_indices = @transform_0, window_bounds = array<i64: 8, 128>}, {pipeline_mode = #tpu.pipeline_mode<synchronous>, transform_indices = @transform_1, window_bounds = array<i64: 1, 128>}, {pipeline_mode = #tpu.pipeline_mode<synchronous>, transform_indices = @transform_2, window_bounds = array<i64: 1, 128>}, {transform_indices = @transform_3, window_bounds = array<i64: 8, 128>}]} {
    %c0 = arith.constant 0 : index
    %c0_0 = arith.constant 0 : index
    %0 = vector.load %arg1[%c0, %c0_0] : memref<8x128xf32, #tpu.memory_space<vmem>>, vector<8x128xf32>
    %c0_1 = arith.constant 0 : index
    %c0_2 = arith.constant 0 : index
    %1 = vector.load %arg2[%c0_1, %c0_2] : memref<1x128xf32, #tpu.memory_space<vmem>>, vector<1x128xf32>
    %c0_3 = arith.constant 0 : index
    %c0_4 = arith.constant 0 : index
    %2 = vector.load %arg3[%c0_3, %c0_4] : memref<1x128xf32, #tpu.memory_space<vmem>>, vector<1x128xf32>
    %cst = arith.constant dense<0.000000e+00> : vector<8xf32>
    %3 = vector.multi_reduction <add>, %0, %cst [1] : vector<8x128xf32> to vector<8xf32>
    %4 = vector.shape_cast %3 : vector<8xf32> to vector<8x1xf32>
    %cst_5 = arith.constant 1.280000e+02 : f32
    %5 = vector.broadcast %cst_5 : f32 to vector<8x1xf32>
    %6 = arith.divf %4, %5 : vector<8x1xf32>
    %7 = vector.broadcast %6 : vector<8x1xf32> to vector<8x128xf32>
    %8 = arith.subf %0, %7 : vector<8x128xf32>
    %9 = arith.mulf %8, %8 : vector<8x128xf32>
    %cst_6 = arith.constant dense<0.000000e+00> : vector<8xf32>
    %10 = vector.multi_reduction <add>, %9, %cst_6 [1] : vector<8x128xf32> to vector<8xf32>
    %11 = vector.shape_cast %10 : vector<8xf32> to vector<8x1xf32>
    %cst_7 = arith.constant 1.280000e+02 : f32
    %12 = vector.broadcast %cst_7 : f32 to vector<8x1xf32>
    %13 = arith.divf %11, %12 : vector<8x1xf32>
    %14 = vector.broadcast %6 : vector<8x1xf32> to vector<8x128xf32>
    %15 = arith.subf %0, %14 : vector<8x128xf32>
    %cst_8 = arith.constant 9.99999996E-13 : f32
    %16 = vector.broadcast %cst_8 : f32 to vector<8x1xf32>
    %17 = arith.addf %13, %16 : vector<8x1xf32>
    %18 = math.rsqrt %17 : vector<8x1xf32>
    %19 = vector.broadcast %18 : vector<8x1xf32> to vector<8x128xf32>
    %20 = arith.mulf %15, %19 : vector<8x128xf32>
    %21 = vector.broadcast %1 : vector<1x128xf32> to vector<8x128xf32>
    %22 = arith.mulf %20, %21 : vector<8x128xf32>
    %23 = vector.broadcast %2 : vector<1x128xf32> to vector<8x128xf32>
    %24 = arith.addf %22, %23 : vector<8x128xf32>
    %c0_9 = arith.constant 0 : index
    %c0_10 = arith.constant 0 : index
    %25 = vector.load %arg4[%c0_9, %c0_10] : memref<8x128xf32, #tpu.memory_space<vmem>>, vector<8x128xf32>
    tpu.vector_store %arg4[%c0_9, %c0_10], %24 {strides = array<i32>} : memref<8x128xf32, #tpu.memory_space<vmem>>, vector<8x128xf32>,
    return
  }
  func.func @transform_0(%arg0: i32) -> (i32, i32) {
    %c0_i32 = arith.constant 0 : i32
    %c0_i32_0 = arith.constant 0 : i32
    return %arg0, %c0_i32 : i32, i32
  }
  func.func @transform_1(%arg0: i32) -> (i32, i32) {
    %c0_i32 = arith.constant 0 : i32
    %c0_i32_0 = arith.constant 0 : i32
    %c0_i32_1 = arith.constant 0 : i32
    return %c0_i32, %c0_i32_0 : i32, i32
  }
  func.func @transform_2(%arg0: i32) -> (i32, i32) {
    %c0_i32 = arith.constant 0 : i32
    %c0_i32_0 = arith.constant 0 : i32
    %c0_i32_1 = arith.constant 0 : i32
    return %c0_i32, %c0_i32_0 : i32, i32
  }
  func.func @transform_3(%arg0: i32) -> (i32, i32) {
    %c0_i32 = arith.constant 0 : i32
    %c0_i32_0 = arith.constant 0 : i32
    return %arg0, %c0_i32 : i32, i32
  }
}

module attributes {stable_mosaic.version = 11 : i64} {
  func.func @_qformer_kernel(%arg0: i32, %arg1: i32, %arg2: memref<1x8x128xf32, #tpu.memory_space<vmem>>, %arg3: memref<1x16x128xbf16, #tpu.memory_space<vmem>>, %arg4: memref<1x128x384xbf16, #tpu.memory_space<vmem>>, %arg5: memref<1x1x384xf32, #tpu.memory_space<vmem>>, %arg6: memref<1x128x128xbf16, #tpu.memory_space<vmem>>, %arg7: memref<1x1x128xf32, #tpu.memory_space<vmem>>, %arg8: memref<1x1x128xf32, #tpu.memory_space<vmem>>, %arg9: memref<1x1x128xf32, #tpu.memory_space<vmem>>, %arg10: memref<1x128x128xbf16, #tpu.memory_space<vmem>>, %arg11: memref<1x1x128xf32, #tpu.memory_space<vmem>>, %arg12: memref<1x128x256xbf16, #tpu.memory_space<vmem>>, %arg13: memref<1x1x256xf32, #tpu.memory_space<vmem>>, %arg14: memref<1x128x128xbf16, #tpu.memory_space<vmem>>, %arg15: memref<1x1x128xf32, #tpu.memory_space<vmem>>, %arg16: memref<1x1x128xf32, #tpu.memory_space<vmem>>, %arg17: memref<1x1x128xf32, #tpu.memory_space<vmem>>, %arg18: memref<1x128x256xbf16, #tpu.memory_space<vmem>>, %arg19: memref<1x1x256xf32, #tpu.memory_space<vmem>>, %arg20: memref<1x256x128xbf16, #tpu.memory_space<vmem>>, %arg21: memref<1x1x128xf32, #tpu.memory_space<vmem>>, %arg22: memref<1x1x128xf32, #tpu.memory_space<vmem>>, %arg23: memref<1x1x128xf32, #tpu.memory_space<vmem>>, %arg24: memref<1x8x128xf32, #tpu.memory_space<vmem>>, %arg25: memref<8x128xf32, #tpu.memory_space<vmem>>) attributes {dimension_semantics = [#tpu.dimension_semantics<parallel>, #tpu.dimension_semantics<arbitrary>], iteration_bounds = array<i64: 2, 2>, scalar_prefetch = 0 : i64, scratch_operands = 1 : i64, tpu.core_type = #tpu.core_type<tc>, window_params = [{transform_indices = @transform_0, window_bounds = array<i64: 1, 8, 128>}, {transform_indices = @transform_1, window_bounds = array<i64: 1, 16, 128>}, {transform_indices = @transform_2, window_bounds = array<i64: 1, 128, 384>}, {transform_indices = @transform_3, window_bounds = array<i64: 1, 1, 384>}, {transform_indices = @transform_4, window_bounds = array<i64: 1, 128, 128>}, {transform_indices = @transform_5, window_bounds = array<i64: 1, 1, 128>}, {transform_indices = @transform_6, window_bounds = array<i64: 1, 1, 128>}, {transform_indices = @transform_7, window_bounds = array<i64: 1, 1, 128>}, {transform_indices = @transform_8, window_bounds = array<i64: 1, 128, 128>}, {transform_indices = @transform_9, window_bounds = array<i64: 1, 1, 128>}, {transform_indices = @transform_10, window_bounds = array<i64: 1, 128, 256>}, {transform_indices = @transform_11, window_bounds = array<i64: 1, 1, 256>}, {transform_indices = @transform_12, window_bounds = array<i64: 1, 128, 128>}, {transform_indices = @transform_13, window_bounds = array<i64: 1, 1, 128>}, {transform_indices = @transform_14, window_bounds = array<i64: 1, 1, 128>}, {transform_indices = @transform_15, window_bounds = array<i64: 1, 1, 128>}, {transform_indices = @transform_16, window_bounds = array<i64: 1, 128, 256>}, {transform_indices = @transform_17, window_bounds = array<i64: 1, 1, 256>}, {transform_indices = @transform_18, window_bounds = array<i64: 1, 256, 128>}, {transform_indices = @transform_19, window_bounds = array<i64: 1, 1, 128>}, {transform_indices = @transform_20, window_bounds = array<i64: 1, 1, 128>}, {transform_indices = @transform_21, window_bounds = array<i64: 1, 1, 128>}, {transform_indices = @transform_22, window_bounds = array<i64: 1, 8, 128>}]} {
    %c0_i32 = arith.constant 0 : i32
    %0 = arith.cmpi eq, %arg1, %c0_i32 : i32
    %1 = arith.extui %0 : i1 to i32
    %c0_i32_0 = arith.constant 0 : i32
    %2 = arith.cmpi ne, %1, %c0_i32_0 : i32
    scf.if %2 {
      %c0_146 = arith.constant 0 : index
      %c0_147 = arith.constant 0 : index
      %c0_148 = arith.constant 0 : index
      %357 = vector.load %arg2[%c0_146, %c0_147, %c0_148] : memref<1x8x128xf32, #tpu.memory_space<vmem>>, vector<1x8x128xf32>
      %358 = vector.shape_cast %357 : vector<1x8x128xf32> to vector<8x128xf32>
      %c0_149 = arith.constant 0 : index
      %c0_150 = arith.constant 0 : index
      %359 = vector.load %arg25[%c0_149, %c0_150] : memref<8x128xf32, #tpu.memory_space<vmem>>, vector<8x128xf32>
      tpu.vector_store %arg25[%c0_149, %c0_150], %358 {strides = array<i32>} : memref<8x128xf32, #tpu.memory_space<vmem>>, vector<8x128xf32>,
    } else {
    }
    %c0 = arith.constant 0 : index
    %c0_1 = arith.constant 0 : index
    %3 = vector.load %arg25[%c0, %c0_1] : memref<8x128xf32, #tpu.memory_space<vmem>>, vector<8x128xf32>
    %c0_2 = arith.constant 0 : index
    %c0_3 = arith.constant 0 : index
    %c0_4 = arith.constant 0 : index
    %4 = vector.load %arg3[%c0_2, %c0_3, %c0_4] : memref<1x16x128xbf16, #tpu.memory_space<vmem>>, vector<1x16x128xbf16>
    %5 = vector.shape_cast %4 : vector<1x16x128xbf16> to vector<16x128xbf16>
    %6 = arith.truncf %3 : vector<8x128xf32> to vector<8x128xbf16>
    %c0_5 = arith.constant 0 : index
    %c0_6 = arith.constant 0 : index
    %c0_7 = arith.constant 0 : index
    %7 = vector.load %arg4[%c0_5, %c0_6, %c0_7] : memref<1x128x384xbf16, #tpu.memory_space<vmem>>, vector<1x128x384xbf16>
    %8 = vector.shape_cast %7 : vector<1x128x384xbf16> to vector<128x384xbf16>
    %cst = arith.constant dense<0.000000e+00> : vector<8x384xf32>
    %9 = tpu.matmul %6, %8, %cst {dimension_numbers = #tpu.dot_dimension_numbers<[1], [0], [0], [1], [0, 0, 1, 1], [], []>} : vector<8x128xbf16>, vector<128x384xbf16>, vector<8x384xf32> -> vector<8x384xf32>
    %c0_8 = arith.constant 0 : index
    %c0_9 = arith.constant 0 : index
    %c0_10 = arith.constant 0 : index
    %10 = vector.load %arg5[%c0_8, %c0_9, %c0_10] : memref<1x1x384xf32, #tpu.memory_space<vmem>>, vector<1x1x384xf32>
    %11 = vector.shape_cast %10 : vector<1x1x384xf32> to vector<1x384xf32>
    %12 = vector.broadcast %11 : vector<1x384xf32> to vector<8x384xf32>
    %13 = arith.addf %9, %12 : vector<8x384xf32>
    %14 = vector.extract_strided_slice %13 {offsets = [0, 0], sizes = [8, 128], strides = [1, 1]} : vector<8x384xf32> to vector<8x128xf32>
    %c0_11 = arith.constant 0 : index
    %c0_12 = arith.constant 0 : index
    %c0_13 = arith.constant 0 : index
    %15 = vector.load %arg6[%c0_11, %c0_12, %c0_13] : memref<1x128x128xbf16, #tpu.memory_space<vmem>>, vector<1x128x128xbf16>
    %16 = vector.shape_cast %15 : vector<1x128x128xbf16> to vector<128x128xbf16>
    %c0_14 = arith.constant 0 : index
    %c0_15 = arith.constant 0 : index
    %c0_16 = arith.constant 0 : index
    %17 = vector.load %arg7[%c0_14, %c0_15, %c0_16] : memref<1x1x128xf32, #tpu.memory_space<vmem>>, vector<1x1x128xf32>
    %18 = vector.shape_cast %17 : vector<1x1x128xf32> to vector<1x128xf32>
    %19 = vector.extract_strided_slice %14 {offsets = [0, 0], sizes = [8, 32], strides = [1, 1]} : vector<8x128xf32> to vector<8x32xf32>
    %20 = arith.truncf %19 : vector<8x32xf32> to vector<8x32xbf16>
    %21 = vector.extract_strided_slice %13 {offsets = [0, 128], sizes = [8, 32], strides = [1, 1]} : vector<8x384xf32> to vector<8x32xf32>
    %22 = arith.truncf %21 : vector<8x32xf32> to vector<8x32xbf16>
    %23 = vector.extract_strided_slice %13 {offsets = [0, 256], sizes = [8, 32], strides = [1, 1]} : vector<8x384xf32> to vector<8x32xf32>
    %24 = arith.truncf %23 : vector<8x32xf32> to vector<8x32xbf16>
    %cst_17 = arith.constant dense<0.000000e+00> : vector<8x8xf32>
    %25 = tpu.matmul %20, %22, %cst_17 {dimension_numbers = #tpu.dot_dimension_numbers<[1], [1], [0], [0], [0, 0, 1, 0], [], []>} : vector<8x32xbf16>, vector<8x32xbf16>, vector<8x8xf32> -> vector<8x8xf32>
    %cst_18 = arith.constant 0.176776692 : f32
    %26 = vector.broadcast %cst_18 : f32 to vector<8x8xf32>
    %27 = arith.mulf %25, %26 : vector<8x8xf32>
    %cst_19 = arith.constant dense<0xFF800000> : vector<8xf32>
    %28 = vector.multi_reduction <maximumf>, %27, %cst_19 [1] : vector<8x8xf32> to vector<8xf32>
    %29 = vector.shape_cast %28 : vector<8xf32> to vector<8x1xf32>
    %30 = vector.broadcast %29 : vector<8x1xf32> to vector<8x8xf32>
    %31 = arith.subf %27, %30 : vector<8x8xf32>
    %32 = math.exp %31 : vector<8x8xf32>
    %cst_20 = arith.constant dense<0.000000e+00> : vector<8xf32>
    %33 = vector.multi_reduction <add>, %32, %cst_20 [1] : vector<8x8xf32> to vector<8xf32>
    %34 = vector.shape_cast %33 : vector<8xf32> to vector<8x1xf32>
    %35 = tpu.reciprocal %34 {approx = true} : vector<8x1xf32> -> vector<8x1xf32>
    %36 = vector.broadcast %35 : vector<8x1xf32> to vector<8x8xf32>
    %37 = arith.mulf %32, %36 : vector<8x8xf32>
    %38 = arith.truncf %37 : vector<8x8xf32> to vector<8x8xbf16>
    %cst_21 = arith.constant dense<0.000000e+00> : vector<8x32xf32>
    %39 = tpu.matmul %38, %24, %cst_21 {dimension_numbers = #tpu.dot_dimension_numbers<[1], [0], [0], [1], [0, 0, 1, 1], [], []>} : vector<8x8xbf16>, vector<8x32xbf16>, vector<8x32xf32> -> vector<8x32xf32>
    %40 = vector.extract_strided_slice %14 {offsets = [0, 32], sizes = [8, 32], strides = [1, 1]} : vector<8x128xf32> to vector<8x32xf32>
    %41 = arith.truncf %40 : vector<8x32xf32> to vector<8x32xbf16>
    %42 = vector.extract_strided_slice %13 {offsets = [0, 160], sizes = [8, 32], strides = [1, 1]} : vector<8x384xf32> to vector<8x32xf32>
    %43 = arith.truncf %42 : vector<8x32xf32> to vector<8x32xbf16>
    %44 = vector.extract_strided_slice %13 {offsets = [0, 288], sizes = [8, 32], strides = [1, 1]} : vector<8x384xf32> to vector<8x32xf32>
    %45 = arith.truncf %44 : vector<8x32xf32> to vector<8x32xbf16>
    %cst_22 = arith.constant dense<0.000000e+00> : vector<8x8xf32>
    %46 = tpu.matmul %41, %43, %cst_22 {dimension_numbers = #tpu.dot_dimension_numbers<[1], [1], [0], [0], [0, 0, 1, 0], [], []>} : vector<8x32xbf16>, vector<8x32xbf16>, vector<8x8xf32> -> vector<8x8xf32>
    %cst_23 = arith.constant 0.176776692 : f32
    %47 = vector.broadcast %cst_23 : f32 to vector<8x8xf32>
    %48 = arith.mulf %46, %47 : vector<8x8xf32>
    %cst_24 = arith.constant dense<0xFF800000> : vector<8xf32>
    %49 = vector.multi_reduction <maximumf>, %48, %cst_24 [1] : vector<8x8xf32> to vector<8xf32>
    %50 = vector.shape_cast %49 : vector<8xf32> to vector<8x1xf32>
    %51 = vector.broadcast %50 : vector<8x1xf32> to vector<8x8xf32>
    %52 = arith.subf %48, %51 : vector<8x8xf32>
    %53 = math.exp %52 : vector<8x8xf32>
    %cst_25 = arith.constant dense<0.000000e+00> : vector<8xf32>
    %54 = vector.multi_reduction <add>, %53, %cst_25 [1] : vector<8x8xf32> to vector<8xf32>
    %55 = vector.shape_cast %54 : vector<8xf32> to vector<8x1xf32>
    %56 = tpu.reciprocal %55 {approx = true} : vector<8x1xf32> -> vector<8x1xf32>
    %57 = vector.broadcast %56 : vector<8x1xf32> to vector<8x8xf32>
    %58 = arith.mulf %53, %57 : vector<8x8xf32>
    %59 = arith.truncf %58 : vector<8x8xf32> to vector<8x8xbf16>
    %cst_26 = arith.constant dense<0.000000e+00> : vector<8x32xf32>
    %60 = tpu.matmul %59, %45, %cst_26 {dimension_numbers = #tpu.dot_dimension_numbers<[1], [0], [0], [1], [0, 0, 1, 1], [], []>} : vector<8x8xbf16>, vector<8x32xbf16>, vector<8x32xf32> -> vector<8x32xf32>
    %61 = vector.extract_strided_slice %14 {offsets = [0, 64], sizes = [8, 32], strides = [1, 1]} : vector<8x128xf32> to vector<8x32xf32>
    %62 = arith.truncf %61 : vector<8x32xf32> to vector<8x32xbf16>
    %63 = vector.extract_strided_slice %13 {offsets = [0, 192], sizes = [8, 32], strides = [1, 1]} : vector<8x384xf32> to vector<8x32xf32>
    %64 = arith.truncf %63 : vector<8x32xf32> to vector<8x32xbf16>
    %65 = vector.extract_strided_slice %13 {offsets = [0, 320], sizes = [8, 32], strides = [1, 1]} : vector<8x384xf32> to vector<8x32xf32>
    %66 = arith.truncf %65 : vector<8x32xf32> to vector<8x32xbf16>
    %cst_27 = arith.constant dense<0.000000e+00> : vector<8x8xf32>
    %67 = tpu.matmul %62, %64, %cst_27 {dimension_numbers = #tpu.dot_dimension_numbers<[1], [1], [0], [0], [0, 0, 1, 0], [], []>} : vector<8x32xbf16>, vector<8x32xbf16>, vector<8x8xf32> -> vector<8x8xf32>
    %cst_28 = arith.constant 0.176776692 : f32
    %68 = vector.broadcast %cst_28 : f32 to vector<8x8xf32>
    %69 = arith.mulf %67, %68 : vector<8x8xf32>
    %cst_29 = arith.constant dense<0xFF800000> : vector<8xf32>
    %70 = vector.multi_reduction <maximumf>, %69, %cst_29 [1] : vector<8x8xf32> to vector<8xf32>
    %71 = vector.shape_cast %70 : vector<8xf32> to vector<8x1xf32>
    %72 = vector.broadcast %71 : vector<8x1xf32> to vector<8x8xf32>
    %73 = arith.subf %69, %72 : vector<8x8xf32>
    %74 = math.exp %73 : vector<8x8xf32>
    %cst_30 = arith.constant dense<0.000000e+00> : vector<8xf32>
    %75 = vector.multi_reduction <add>, %74, %cst_30 [1] : vector<8x8xf32> to vector<8xf32>
    %76 = vector.shape_cast %75 : vector<8xf32> to vector<8x1xf32>
    %77 = tpu.reciprocal %76 {approx = true} : vector<8x1xf32> -> vector<8x1xf32>
    %78 = vector.broadcast %77 : vector<8x1xf32> to vector<8x8xf32>
    %79 = arith.mulf %74, %78 : vector<8x8xf32>
    %80 = arith.truncf %79 : vector<8x8xf32> to vector<8x8xbf16>
    %cst_31 = arith.constant dense<0.000000e+00> : vector<8x32xf32>
    %81 = tpu.matmul %80, %66, %cst_31 {dimension_numbers = #tpu.dot_dimension_numbers<[1], [0], [0], [1], [0, 0, 1, 1], [], []>} : vector<8x8xbf16>, vector<8x32xbf16>, vector<8x32xf32> -> vector<8x32xf32>
    %82 = vector.extract_strided_slice %14 {offsets = [0, 96], sizes = [8, 32], strides = [1, 1]} : vector<8x128xf32> to vector<8x32xf32>
    %83 = arith.truncf %82 : vector<8x32xf32> to vector<8x32xbf16>
    %84 = vector.extract_strided_slice %13 {offsets = [0, 224], sizes = [8, 32], strides = [1, 1]} : vector<8x384xf32> to vector<8x32xf32>
    %85 = arith.truncf %84 : vector<8x32xf32> to vector<8x32xbf16>
    %86 = vector.extract_strided_slice %13 {offsets = [0, 352], sizes = [8, 32], strides = [1, 1]} : vector<8x384xf32> to vector<8x32xf32>
    %87 = arith.truncf %86 : vector<8x32xf32> to vector<8x32xbf16>
    %cst_32 = arith.constant dense<0.000000e+00> : vector<8x8xf32>
    %88 = tpu.matmul %83, %85, %cst_32 {dimension_numbers = #tpu.dot_dimension_numbers<[1], [1], [0], [0], [0, 0, 1, 0], [], []>} : vector<8x32xbf16>, vector<8x32xbf16>, vector<8x8xf32> -> vector<8x8xf32>
    %cst_33 = arith.constant 0.176776692 : f32
    %89 = vector.broadcast %cst_33 : f32 to vector<8x8xf32>
    %90 = arith.mulf %88, %89 : vector<8x8xf32>
    %cst_34 = arith.constant dense<0xFF800000> : vector<8xf32>
    %91 = vector.multi_reduction <maximumf>, %90, %cst_34 [1] : vector<8x8xf32> to vector<8xf32>
    %92 = vector.shape_cast %91 : vector<8xf32> to vector<8x1xf32>
    %93 = vector.broadcast %92 : vector<8x1xf32> to vector<8x8xf32>
    %94 = arith.subf %90, %93 : vector<8x8xf32>
    %95 = math.exp %94 : vector<8x8xf32>
    %cst_35 = arith.constant dense<0.000000e+00> : vector<8xf32>
    %96 = vector.multi_reduction <add>, %95, %cst_35 [1] : vector<8x8xf32> to vector<8xf32>
    %97 = vector.shape_cast %96 : vector<8xf32> to vector<8x1xf32>
    %98 = tpu.reciprocal %97 {approx = true} : vector<8x1xf32> -> vector<8x1xf32>
    %99 = vector.broadcast %98 : vector<8x1xf32> to vector<8x8xf32>
    %100 = arith.mulf %95, %99 : vector<8x8xf32>
    %101 = arith.truncf %100 : vector<8x8xf32> to vector<8x8xbf16>
    %cst_36 = arith.constant dense<0.000000e+00> : vector<8x32xf32>
    %102 = tpu.matmul %101, %87, %cst_36 {dimension_numbers = #tpu.dot_dimension_numbers<[1], [0], [0], [1], [0, 0, 1, 1], [], []>} : vector<8x8xbf16>, vector<8x32xbf16>, vector<8x32xf32> -> vector<8x32xf32>
    %103 = tpu.concatenate %39, %60, %81, %102 in 1 : vector<8x32xf32>, vector<8x32xf32>, vector<8x32xf32>, vector<8x32xf32> -> vector<8x128xf32>
    %104 = arith.truncf %103 : vector<8x128xf32> to vector<8x128xbf16>
    %cst_37 = arith.constant dense<0.000000e+00> : vector<8x128xf32>
    %105 = tpu.matmul %104, %16, %cst_37 {dimension_numbers = #tpu.dot_dimension_numbers<[1], [0], [0], [1], [0, 0, 1, 1], [], []>} : vector<8x128xbf16>, vector<128x128xbf16>, vector<8x128xf32> -> vector<8x128xf32>
    %106 = vector.broadcast %18 : vector<1x128xf32> to vector<8x128xf32>
    %107 = arith.addf %105, %106 : vector<8x128xf32>
    %108 = arith.addf %107, %3 : vector<8x128xf32>
    %c0_38 = arith.constant 0 : index
    %c0_39 = arith.constant 0 : index
    %c0_40 = arith.constant 0 : index
    %109 = vector.load %arg8[%c0_38, %c0_39, %c0_40] : memref<1x1x128xf32, #tpu.memory_space<vmem>>, vector<1x1x128xf32>
    %110 = vector.shape_cast %109 : vector<1x1x128xf32> to vector<1x128xf32>
    %c0_41 = arith.constant 0 : index
    %c0_42 = arith.constant 0 : index
    %c0_43 = arith.constant 0 : index
    %111 = vector.load %arg9[%c0_41, %c0_42, %c0_43] : memref<1x1x128xf32, #tpu.memory_space<vmem>>, vector<1x1x128xf32>
    %112 = vector.shape_cast %111 : vector<1x1x128xf32> to vector<1x128xf32>
    %cst_44 = arith.constant dense<0.000000e+00> : vector<8xf32>
    %113 = vector.multi_reduction <add>, %108, %cst_44 [1] : vector<8x128xf32> to vector<8xf32>
    %114 = vector.shape_cast %113 : vector<8xf32> to vector<8x1xf32>
    %cst_45 = arith.constant 1.280000e+02 : f32
    %115 = vector.broadcast %cst_45 : f32 to vector<8x1xf32>
    %116 = arith.divf %114, %115 : vector<8x1xf32>
    %117 = vector.broadcast %116 : vector<8x1xf32> to vector<8x128xf32>
    %118 = arith.subf %108, %117 : vector<8x128xf32>
    %119 = arith.mulf %118, %118 : vector<8x128xf32>
    %cst_46 = arith.constant dense<0.000000e+00> : vector<8xf32>
    %120 = vector.multi_reduction <add>, %119, %cst_46 [1] : vector<8x128xf32> to vector<8xf32>
    %121 = vector.shape_cast %120 : vector<8xf32> to vector<8x1xf32>
    %cst_47 = arith.constant 1.280000e+02 : f32
    %122 = vector.broadcast %cst_47 : f32 to vector<8x1xf32>
    %123 = arith.divf %121, %122 : vector<8x1xf32>
    %124 = vector.broadcast %116 : vector<8x1xf32> to vector<8x128xf32>
    %125 = arith.subf %108, %124 : vector<8x128xf32>
    %cst_48 = arith.constant 9.99999996E-13 : f32
    %126 = vector.broadcast %cst_48 : f32 to vector<8x1xf32>
    %127 = arith.addf %123, %126 : vector<8x1xf32>
    %128 = math.rsqrt %127 : vector<8x1xf32>
    %129 = vector.broadcast %128 : vector<8x1xf32> to vector<8x128xf32>
    %130 = arith.mulf %125, %129 : vector<8x128xf32>
    %131 = vector.broadcast %110 : vector<1x128xf32> to vector<8x128xf32>
    %132 = arith.mulf %130, %131 : vector<8x128xf32>
    %133 = vector.broadcast %112 : vector<1x128xf32> to vector<8x128xf32>
    %134 = arith.addf %132, %133 : vector<8x128xf32>
    %135 = arith.truncf %134 : vector<8x128xf32> to vector<8x128xbf16>
    %c0_49 = arith.constant 0 : index
    %c0_50 = arith.constant 0 : index
    %c0_51 = arith.constant 0 : index
    %136 = vector.load %arg10[%c0_49, %c0_50, %c0_51] : memref<1x128x128xbf16, #tpu.memory_space<vmem>>, vector<1x128x128xbf16>
    %137 = vector.shape_cast %136 : vector<1x128x128xbf16> to vector<128x128xbf16>
    %cst_52 = arith.constant dense<0.000000e+00> : vector<8x128xf32>
    %138 = tpu.matmul %135, %137, %cst_52 {dimension_numbers = #tpu.dot_dimension_numbers<[1], [0], [0], [1], [0, 0, 1, 1], [], []>} : vector<8x128xbf16>, vector<128x128xbf16>, vector<8x128xf32> -> vector<8x128xf32>
    %c0_53 = arith.constant 0 : index
    %c0_54 = arith.constant 0 : index
    %c0_55 = arith.constant 0 : index
    %139 = vector.load %arg11[%c0_53, %c0_54, %c0_55] : memref<1x1x128xf32, #tpu.memory_space<vmem>>, vector<1x1x128xf32>
    %140 = vector.shape_cast %139 : vector<1x1x128xf32> to vector<1x128xf32>
    %141 = vector.broadcast %140 : vector<1x128xf32> to vector<8x128xf32>
    %142 = arith.addf %138, %141 : vector<8x128xf32>
    %c0_56 = arith.constant 0 : index
    %c0_57 = arith.constant 0 : index
    %c0_58 = arith.constant 0 : index
    %143 = vector.load %arg12[%c0_56, %c0_57, %c0_58] : memref<1x128x256xbf16, #tpu.memory_space<vmem>>, vector<1x128x256xbf16>
    %144 = vector.shape_cast %143 : vector<1x128x256xbf16> to vector<128x256xbf16>
    %cst_59 = arith.constant dense<0.000000e+00> : vector<16x256xf32>
    %145 = tpu.matmul %5, %144, %cst_59 {dimension_numbers = #tpu.dot_dimension_numbers<[1], [0], [0], [1], [0, 0, 1, 1], [], []>} : vector<16x128xbf16>, vector<128x256xbf16>, vector<16x256xf32> -> vector<16x256xf32>
    %c0_60 = arith.constant 0 : index
    %c0_61 = arith.constant 0 : index
    %c0_62 = arith.constant 0 : index
    %146 = vector.load %arg13[%c0_60, %c0_61, %c0_62] : memref<1x1x256xf32, #tpu.memory_space<vmem>>, vector<1x1x256xf32>
    %147 = vector.shape_cast %146 : vector<1x1x256xf32> to vector<1x256xf32>
    %148 = vector.broadcast %147 : vector<1x256xf32> to vector<16x256xf32>
    %149 = arith.addf %145, %148 : vector<16x256xf32>
    %c0_63 = arith.constant 0 : index
    %c0_64 = arith.constant 0 : index
    %c0_65 = arith.constant 0 : index
    %150 = vector.load %arg14[%c0_63, %c0_64, %c0_65] : memref<1x128x128xbf16, #tpu.memory_space<vmem>>, vector<1x128x128xbf16>
    %151 = vector.shape_cast %150 : vector<1x128x128xbf16> to vector<128x128xbf16>
    %c0_66 = arith.constant 0 : index
    %c0_67 = arith.constant 0 : index
    %c0_68 = arith.constant 0 : index
    %152 = vector.load %arg15[%c0_66, %c0_67, %c0_68] : memref<1x1x128xf32, #tpu.memory_space<vmem>>, vector<1x1x128xf32>
    %153 = vector.shape_cast %152 : vector<1x1x128xf32> to vector<1x128xf32>
    %154 = vector.extract_strided_slice %142 {offsets = [0, 0], sizes = [8, 32], strides = [1, 1]} : vector<8x128xf32> to vector<8x32xf32>
    %155 = arith.truncf %154 : vector<8x32xf32> to vector<8x32xbf16>
    %156 = vector.extract_strided_slice %149 {offsets = [0, 0], sizes = [16, 32], strides = [1, 1]} : vector<16x256xf32> to vector<16x32xf32>
    %157 = arith.truncf %156 : vector<16x32xf32> to vector<16x32xbf16>
    %158 = vector.extract_strided_slice %149 {offsets = [0, 128], sizes = [16, 32], strides = [1, 1]} : vector<16x256xf32> to vector<16x32xf32>
    %159 = arith.truncf %158 : vector<16x32xf32> to vector<16x32xbf16>
    %cst_69 = arith.constant dense<0.000000e+00> : vector<8x16xf32>
    %160 = tpu.matmul %155, %157, %cst_69 {dimension_numbers = #tpu.dot_dimension_numbers<[1], [1], [0], [0], [0, 0, 1, 0], [], []>} : vector<8x32xbf16>, vector<16x32xbf16>, vector<8x16xf32> -> vector<8x16xf32>
    %cst_70 = arith.constant 0.176776692 : f32
    %161 = vector.broadcast %cst_70 : f32 to vector<8x16xf32>
    %162 = arith.mulf %160, %161 : vector<8x16xf32>
    %cst_71 = arith.constant dense<0xFF800000> : vector<8xf32>
    %163 = vector.multi_reduction <maximumf>, %162, %cst_71 [1] : vector<8x16xf32> to vector<8xf32>
    %164 = vector.shape_cast %163 : vector<8xf32> to vector<8x1xf32>
    %165 = vector.broadcast %164 : vector<8x1xf32> to vector<8x16xf32>
    %166 = arith.subf %162, %165 : vector<8x16xf32>
    %167 = math.exp %166 : vector<8x16xf32>
    %cst_72 = arith.constant dense<0.000000e+00> : vector<8xf32>
    %168 = vector.multi_reduction <add>, %167, %cst_72 [1] : vector<8x16xf32> to vector<8xf32>
    %169 = vector.shape_cast %168 : vector<8xf32> to vector<8x1xf32>
    %170 = tpu.reciprocal %169 {approx = true} : vector<8x1xf32> -> vector<8x1xf32>
    %171 = vector.broadcast %170 : vector<8x1xf32> to vector<8x16xf32>
    %172 = arith.mulf %167, %171 : vector<8x16xf32>
    %173 = arith.truncf %172 : vector<8x16xf32> to vector<8x16xbf16>
    %cst_73 = arith.constant dense<0.000000e+00> : vector<8x32xf32>
    %174 = tpu.matmul %173, %159, %cst_73 {dimension_numbers = #tpu.dot_dimension_numbers<[1], [0], [0], [1], [0, 0, 1, 1], [], []>} : vector<8x16xbf16>, vector<16x32xbf16>, vector<8x32xf32> -> vector<8x32xf32>
    %175 = vector.extract_strided_slice %142 {offsets = [0, 32], sizes = [8, 32], strides = [1, 1]} : vector<8x128xf32> to vector<8x32xf32>
    %176 = arith.truncf %175 : vector<8x32xf32> to vector<8x32xbf16>
    %177 = vector.extract_strided_slice %149 {offsets = [0, 32], sizes = [16, 32], strides = [1, 1]} : vector<16x256xf32> to vector<16x32xf32>
    %178 = arith.truncf %177 : vector<16x32xf32> to vector<16x32xbf16>
    %179 = vector.extract_strided_slice %149 {offsets = [0, 160], sizes = [16, 32], strides = [1, 1]} : vector<16x256xf32> to vector<16x32xf32>
    %180 = arith.truncf %179 : vector<16x32xf32> to vector<16x32xbf16>
    %cst_74 = arith.constant dense<0.000000e+00> : vector<8x16xf32>
    %181 = tpu.matmul %176, %178, %cst_74 {dimension_numbers = #tpu.dot_dimension_numbers<[1], [1], [0], [0], [0, 0, 1, 0], [], []>} : vector<8x32xbf16>, vector<16x32xbf16>, vector<8x16xf32> -> vector<8x16xf32>
    %cst_75 = arith.constant 0.176776692 : f32
    %182 = vector.broadcast %cst_75 : f32 to vector<8x16xf32>
    %183 = arith.mulf %181, %182 : vector<8x16xf32>
    %cst_76 = arith.constant dense<0xFF800000> : vector<8xf32>
    %184 = vector.multi_reduction <maximumf>, %183, %cst_76 [1] : vector<8x16xf32> to vector<8xf32>
    %185 = vector.shape_cast %184 : vector<8xf32> to vector<8x1xf32>
    %186 = vector.broadcast %185 : vector<8x1xf32> to vector<8x16xf32>
    %187 = arith.subf %183, %186 : vector<8x16xf32>
    %188 = math.exp %187 : vector<8x16xf32>
    %cst_77 = arith.constant dense<0.000000e+00> : vector<8xf32>
    %189 = vector.multi_reduction <add>, %188, %cst_77 [1] : vector<8x16xf32> to vector<8xf32>
    %190 = vector.shape_cast %189 : vector<8xf32> to vector<8x1xf32>
    %191 = tpu.reciprocal %190 {approx = true} : vector<8x1xf32> -> vector<8x1xf32>
    %192 = vector.broadcast %191 : vector<8x1xf32> to vector<8x16xf32>
    %193 = arith.mulf %188, %192 : vector<8x16xf32>
    %194 = arith.truncf %193 : vector<8x16xf32> to vector<8x16xbf16>
    %cst_78 = arith.constant dense<0.000000e+00> : vector<8x32xf32>
    %195 = tpu.matmul %194, %180, %cst_78 {dimension_numbers = #tpu.dot_dimension_numbers<[1], [0], [0], [1], [0, 0, 1, 1], [], []>} : vector<8x16xbf16>, vector<16x32xbf16>, vector<8x32xf32> -> vector<8x32xf32>
    %196 = vector.extract_strided_slice %142 {offsets = [0, 64], sizes = [8, 32], strides = [1, 1]} : vector<8x128xf32> to vector<8x32xf32>
    %197 = arith.truncf %196 : vector<8x32xf32> to vector<8x32xbf16>
    %198 = vector.extract_strided_slice %149 {offsets = [0, 64], sizes = [16, 32], strides = [1, 1]} : vector<16x256xf32> to vector<16x32xf32>
    %199 = arith.truncf %198 : vector<16x32xf32> to vector<16x32xbf16>
    %200 = vector.extract_strided_slice %149 {offsets = [0, 192], sizes = [16, 32], strides = [1, 1]} : vector<16x256xf32> to vector<16x32xf32>
    %201 = arith.truncf %200 : vector<16x32xf32> to vector<16x32xbf16>
    %cst_79 = arith.constant dense<0.000000e+00> : vector<8x16xf32>
    %202 = tpu.matmul %197, %199, %cst_79 {dimension_numbers = #tpu.dot_dimension_numbers<[1], [1], [0], [0], [0, 0, 1, 0], [], []>} : vector<8x32xbf16>, vector<16x32xbf16>, vector<8x16xf32> -> vector<8x16xf32>
    %cst_80 = arith.constant 0.176776692 : f32
    %203 = vector.broadcast %cst_80 : f32 to vector<8x16xf32>
    %204 = arith.mulf %202, %203 : vector<8x16xf32>
    %cst_81 = arith.constant dense<0xFF800000> : vector<8xf32>
    %205 = vector.multi_reduction <maximumf>, %204, %cst_81 [1] : vector<8x16xf32> to vector<8xf32>
    %206 = vector.shape_cast %205 : vector<8xf32> to vector<8x1xf32>
    %207 = vector.broadcast %206 : vector<8x1xf32> to vector<8x16xf32>
    %208 = arith.subf %204, %207 : vector<8x16xf32>
    %209 = math.exp %208 : vector<8x16xf32>
    %cst_82 = arith.constant dense<0.000000e+00> : vector<8xf32>
    %210 = vector.multi_reduction <add>, %209, %cst_82 [1] : vector<8x16xf32> to vector<8xf32>
    %211 = vector.shape_cast %210 : vector<8xf32> to vector<8x1xf32>
    %212 = tpu.reciprocal %211 {approx = true} : vector<8x1xf32> -> vector<8x1xf32>
    %213 = vector.broadcast %212 : vector<8x1xf32> to vector<8x16xf32>
    %214 = arith.mulf %209, %213 : vector<8x16xf32>
    %215 = arith.truncf %214 : vector<8x16xf32> to vector<8x16xbf16>
    %cst_83 = arith.constant dense<0.000000e+00> : vector<8x32xf32>
    %216 = tpu.matmul %215, %201, %cst_83 {dimension_numbers = #tpu.dot_dimension_numbers<[1], [0], [0], [1], [0, 0, 1, 1], [], []>} : vector<8x16xbf16>, vector<16x32xbf16>, vector<8x32xf32> -> vector<8x32xf32>
    %217 = vector.extract_strided_slice %142 {offsets = [0, 96], sizes = [8, 32], strides = [1, 1]} : vector<8x128xf32> to vector<8x32xf32>
    %218 = arith.truncf %217 : vector<8x32xf32> to vector<8x32xbf16>
    %219 = vector.extract_strided_slice %149 {offsets = [0, 96], sizes = [16, 32], strides = [1, 1]} : vector<16x256xf32> to vector<16x32xf32>
    %220 = arith.truncf %219 : vector<16x32xf32> to vector<16x32xbf16>
    %221 = vector.extract_strided_slice %149 {offsets = [0, 224], sizes = [16, 32], strides = [1, 1]} : vector<16x256xf32> to vector<16x32xf32>
    %222 = arith.truncf %221 : vector<16x32xf32> to vector<16x32xbf16>
    %cst_84 = arith.constant dense<0.000000e+00> : vector<8x16xf32>
    %223 = tpu.matmul %218, %220, %cst_84 {dimension_numbers = #tpu.dot_dimension_numbers<[1], [1], [0], [0], [0, 0, 1, 0], [], []>} : vector<8x32xbf16>, vector<16x32xbf16>, vector<8x16xf32> -> vector<8x16xf32>
    %cst_85 = arith.constant 0.176776692 : f32
    %224 = vector.broadcast %cst_85 : f32 to vector<8x16xf32>
    %225 = arith.mulf %223, %224 : vector<8x16xf32>
    %cst_86 = arith.constant dense<0xFF800000> : vector<8xf32>
    %226 = vector.multi_reduction <maximumf>, %225, %cst_86 [1] : vector<8x16xf32> to vector<8xf32>
    %227 = vector.shape_cast %226 : vector<8xf32> to vector<8x1xf32>
    %228 = vector.broadcast %227 : vector<8x1xf32> to vector<8x16xf32>
    %229 = arith.subf %225, %228 : vector<8x16xf32>
    %230 = math.exp %229 : vector<8x16xf32>
    %cst_87 = arith.constant dense<0.000000e+00> : vector<8xf32>
    %231 = vector.multi_reduction <add>, %230, %cst_87 [1] : vector<8x16xf32> to vector<8xf32>
    %232 = vector.shape_cast %231 : vector<8xf32> to vector<8x1xf32>
    %233 = tpu.reciprocal %232 {approx = true} : vector<8x1xf32> -> vector<8x1xf32>
    %234 = vector.broadcast %233 : vector<8x1xf32> to vector<8x16xf32>
    %235 = arith.mulf %230, %234 : vector<8x16xf32>
    %236 = arith.truncf %235 : vector<8x16xf32> to vector<8x16xbf16>
    %cst_88 = arith.constant dense<0.000000e+00> : vector<8x32xf32>
    %237 = tpu.matmul %236, %222, %cst_88 {dimension_numbers = #tpu.dot_dimension_numbers<[1], [0], [0], [1], [0, 0, 1, 1], [], []>} : vector<8x16xbf16>, vector<16x32xbf16>, vector<8x32xf32> -> vector<8x32xf32>
    %238 = tpu.concatenate %174, %195, %216, %237 in 1 : vector<8x32xf32>, vector<8x32xf32>, vector<8x32xf32>, vector<8x32xf32> -> vector<8x128xf32>
    %239 = arith.truncf %238 : vector<8x128xf32> to vector<8x128xbf16>
    %cst_89 = arith.constant dense<0.000000e+00> : vector<8x128xf32>
    %240 = tpu.matmul %239, %151, %cst_89 {dimension_numbers = #tpu.dot_dimension_numbers<[1], [0], [0], [1], [0, 0, 1, 1], [], []>} : vector<8x128xbf16>, vector<128x128xbf16>, vector<8x128xf32> -> vector<8x128xf32>
    %241 = vector.broadcast %153 : vector<1x128xf32> to vector<8x128xf32>
    %242 = arith.addf %240, %241 : vector<8x128xf32>
    %243 = arith.addf %242, %134 : vector<8x128xf32>
    %c0_90 = arith.constant 0 : index
    %c0_91 = arith.constant 0 : index
    %c0_92 = arith.constant 0 : index
    %244 = vector.load %arg16[%c0_90, %c0_91, %c0_92] : memref<1x1x128xf32, #tpu.memory_space<vmem>>, vector<1x1x128xf32>
    %245 = vector.shape_cast %244 : vector<1x1x128xf32> to vector<1x128xf32>
    %c0_93 = arith.constant 0 : index
    %c0_94 = arith.constant 0 : index
    %c0_95 = arith.constant 0 : index
    %246 = vector.load %arg17[%c0_93, %c0_94, %c0_95] : memref<1x1x128xf32, #tpu.memory_space<vmem>>, vector<1x1x128xf32>
    %247 = vector.shape_cast %246 : vector<1x1x128xf32> to vector<1x128xf32>
    %cst_96 = arith.constant dense<0.000000e+00> : vector<8xf32>
    %248 = vector.multi_reduction <add>, %243, %cst_96 [1] : vector<8x128xf32> to vector<8xf32>
    %249 = vector.shape_cast %248 : vector<8xf32> to vector<8x1xf32>
    %cst_97 = arith.constant 1.280000e+02 : f32
    %250 = vector.broadcast %cst_97 : f32 to vector<8x1xf32>
    %251 = arith.divf %249, %250 : vector<8x1xf32>
    %252 = vector.broadcast %251 : vector<8x1xf32> to vector<8x128xf32>
    %253 = arith.subf %243, %252 : vector<8x128xf32>
    %254 = arith.mulf %253, %253 : vector<8x128xf32>
    %cst_98 = arith.constant dense<0.000000e+00> : vector<8xf32>
    %255 = vector.multi_reduction <add>, %254, %cst_98 [1] : vector<8x128xf32> to vector<8xf32>
    %256 = vector.shape_cast %255 : vector<8xf32> to vector<8x1xf32>
    %cst_99 = arith.constant 1.280000e+02 : f32
    %257 = vector.broadcast %cst_99 : f32 to vector<8x1xf32>
    %258 = arith.divf %256, %257 : vector<8x1xf32>
    %259 = vector.broadcast %251 : vector<8x1xf32> to vector<8x128xf32>
    %260 = arith.subf %243, %259 : vector<8x128xf32>
    %cst_100 = arith.constant 9.99999996E-13 : f32
    %261 = vector.broadcast %cst_100 : f32 to vector<8x1xf32>
    %262 = arith.addf %258, %261 : vector<8x1xf32>
    %263 = math.rsqrt %262 : vector<8x1xf32>
    %264 = vector.broadcast %263 : vector<8x1xf32> to vector<8x128xf32>
    %265 = arith.mulf %260, %264 : vector<8x128xf32>
    %266 = vector.broadcast %245 : vector<1x128xf32> to vector<8x128xf32>
    %267 = arith.mulf %265, %266 : vector<8x128xf32>
    %268 = vector.broadcast %247 : vector<1x128xf32> to vector<8x128xf32>
    %269 = arith.addf %267, %268 : vector<8x128xf32>
    %270 = arith.truncf %269 : vector<8x128xf32> to vector<8x128xbf16>
    %c0_101 = arith.constant 0 : index
    %c0_102 = arith.constant 0 : index
    %c0_103 = arith.constant 0 : index
    %271 = vector.load %arg18[%c0_101, %c0_102, %c0_103] : memref<1x128x256xbf16, #tpu.memory_space<vmem>>, vector<1x128x256xbf16>
    %272 = vector.shape_cast %271 : vector<1x128x256xbf16> to vector<128x256xbf16>
    %cst_104 = arith.constant dense<0.000000e+00> : vector<8x256xf32>
    %273 = tpu.matmul %270, %272, %cst_104 {dimension_numbers = #tpu.dot_dimension_numbers<[1], [0], [0], [1], [0, 0, 1, 1], [], []>} : vector<8x128xbf16>, vector<128x256xbf16>, vector<8x256xf32> -> vector<8x256xf32>
    %c0_105 = arith.constant 0 : index
    %c0_106 = arith.constant 0 : index
    %c0_107 = arith.constant 0 : index
    %274 = vector.load %arg19[%c0_105, %c0_106, %c0_107] : memref<1x1x256xf32, #tpu.memory_space<vmem>>, vector<1x1x256xf32>
    %275 = vector.shape_cast %274 : vector<1x1x256xf32> to vector<1x256xf32>
    %276 = vector.broadcast %275 : vector<1x256xf32> to vector<8x256xf32>
    %277 = arith.addf %273, %276 : vector<8x256xf32>
    %cst_108 = arith.constant 0.707106769 : f32
    %278 = vector.broadcast %cst_108 : f32 to vector<8x256xf32>
    %279 = arith.mulf %277, %278 : vector<8x256xf32>
    %280 = math.absf %279 : vector<8x256xf32>
    %cst_109 = arith.constant 0.327591091 : f32
    %281 = vector.broadcast %cst_109 : f32 to vector<8x256xf32>
    %282 = arith.mulf %281, %280 : vector<8x256xf32>
    %cst_110 = arith.constant 1.000000e+00 : f32
    %283 = vector.broadcast %cst_110 : f32 to vector<8x256xf32>
    %284 = arith.addf %283, %282 : vector<8x256xf32>
    %cst_111 = arith.constant 1.000000e+00 : f32
    %285 = vector.broadcast %cst_111 : f32 to vector<8x256xf32>
    %286 = arith.divf %285, %284 : vector<8x256xf32>
    %cst_112 = arith.constant 1.06140542 : f32
    %287 = vector.broadcast %cst_112 : f32 to vector<8x256xf32>
    %288 = arith.mulf %286, %287 : vector<8x256xf32>
    %cst_113 = arith.constant -1.45315206 : f32
    %289 = vector.broadcast %cst_113 : f32 to vector<8x256xf32>
    %290 = arith.addf %289, %288 : vector<8x256xf32>
    %291 = arith.mulf %286, %290 : vector<8x256xf32>
    %cst_114 = arith.constant 1.42141378 : f32
    %292 = vector.broadcast %cst_114 : f32 to vector<8x256xf32>
    %293 = arith.addf %292, %291 : vector<8x256xf32>
    %294 = arith.mulf %286, %293 : vector<8x256xf32>
    %cst_115 = arith.constant -0.284496725 : f32
    %295 = vector.broadcast %cst_115 : f32 to vector<8x256xf32>
    %296 = arith.addf %295, %294 : vector<8x256xf32>
    %297 = arith.mulf %286, %296 : vector<8x256xf32>
    %cst_116 = arith.constant 0.254829586 : f32
    %298 = vector.broadcast %cst_116 : f32 to vector<8x256xf32>
    %299 = arith.addf %298, %297 : vector<8x256xf32>
    %300 = arith.mulf %286, %299 : vector<8x256xf32>
    %cst_117 = arith.constant 0.000000e+00 : f32
    %301 = vector.broadcast %cst_117 : f32 to vector<8x256xf32>
    %302 = arith.subf %301, %280 : vector<8x256xf32>
    %303 = arith.mulf %302, %280 : vector<8x256xf32>
    %304 = math.exp %303 : vector<8x256xf32>
    %305 = arith.mulf %300, %304 : vector<8x256xf32>
    %cst_118 = arith.constant 1.000000e+00 : f32
    %306 = vector.broadcast %cst_118 : f32 to vector<8x256xf32>
    %307 = arith.subf %306, %305 : vector<8x256xf32>
    %cst_119 = arith.constant 0.000000e+00 : f32
    %308 = vector.broadcast %cst_119 : f32 to vector<8x256xf32>
    %309 = arith.cmpf oge, %279, %308 : vector<8x256xf32>
    %cst_120 = arith.constant 0.000000e+00 : f32
    %310 = vector.broadcast %cst_120 : f32 to vector<8x256xf32>
    %311 = arith.subf %310, %307 : vector<8x256xf32>
    %312 = arith.select %309, %307, %311 : vector<8x256xi1>, vector<8x256xf32>
    %cst_121 = arith.constant 5.000000e-01 : f32
    %313 = vector.broadcast %cst_121 : f32 to vector<8x256xf32>
    %314 = arith.mulf %313, %277 : vector<8x256xf32>
    %cst_122 = arith.constant 1.000000e+00 : f32
    %315 = vector.broadcast %cst_122 : f32 to vector<8x256xf32>
    %316 = arith.addf %315, %312 : vector<8x256xf32>
    %317 = arith.mulf %314, %316 : vector<8x256xf32>
    %318 = arith.truncf %317 : vector<8x256xf32> to vector<8x256xbf16>
    %c0_123 = arith.constant 0 : index
    %c0_124 = arith.constant 0 : index
    %c0_125 = arith.constant 0 : index
    %319 = vector.load %arg20[%c0_123, %c0_124, %c0_125] : memref<1x256x128xbf16, #tpu.memory_space<vmem>>, vector<1x256x128xbf16>
    %320 = vector.shape_cast %319 : vector<1x256x128xbf16> to vector<256x128xbf16>
    %cst_126 = arith.constant dense<0.000000e+00> : vector<8x128xf32>
    %321 = tpu.matmul %318, %320, %cst_126 {dimension_numbers = #tpu.dot_dimension_numbers<[1], [0], [0], [1], [0, 0, 1, 1], [], []>} : vector<8x256xbf16>, vector<256x128xbf16>, vector<8x128xf32> -> vector<8x128xf32>
    %c0_127 = arith.constant 0 : index
    %c0_128 = arith.constant 0 : index
    %c0_129 = arith.constant 0 : index
    %322 = vector.load %arg21[%c0_127, %c0_128, %c0_129] : memref<1x1x128xf32, #tpu.memory_space<vmem>>, vector<1x1x128xf32>
    %323 = vector.shape_cast %322 : vector<1x1x128xf32> to vector<1x128xf32>
    %324 = vector.broadcast %323 : vector<1x128xf32> to vector<8x128xf32>
    %325 = arith.addf %321, %324 : vector<8x128xf32>
    %326 = arith.addf %325, %269 : vector<8x128xf32>
    %c0_130 = arith.constant 0 : index
    %c0_131 = arith.constant 0 : index
    %c0_132 = arith.constant 0 : index
    %327 = vector.load %arg22[%c0_130, %c0_131, %c0_132] : memref<1x1x128xf32, #tpu.memory_space<vmem>>, vector<1x1x128xf32>
    %328 = vector.shape_cast %327 : vector<1x1x128xf32> to vector<1x128xf32>
    %c0_133 = arith.constant 0 : index
    %c0_134 = arith.constant 0 : index
    %c0_135 = arith.constant 0 : index
    %329 = vector.load %arg23[%c0_133, %c0_134, %c0_135] : memref<1x1x128xf32, #tpu.memory_space<vmem>>, vector<1x1x128xf32>
    %330 = vector.shape_cast %329 : vector<1x1x128xf32> to vector<1x128xf32>
    %cst_136 = arith.constant dense<0.000000e+00> : vector<8xf32>
    %331 = vector.multi_reduction <add>, %326, %cst_136 [1] : vector<8x128xf32> to vector<8xf32>
    %332 = vector.shape_cast %331 : vector<8xf32> to vector<8x1xf32>
    %cst_137 = arith.constant 1.280000e+02 : f32
    %333 = vector.broadcast %cst_137 : f32 to vector<8x1xf32>
    %334 = arith.divf %332, %333 : vector<8x1xf32>
    %335 = vector.broadcast %334 : vector<8x1xf32> to vector<8x128xf32>
    %336 = arith.subf %326, %335 : vector<8x128xf32>
    %337 = arith.mulf %336, %336 : vector<8x128xf32>
    %cst_138 = arith.constant dense<0.000000e+00> : vector<8xf32>
    %338 = vector.multi_reduction <add>, %337, %cst_138 [1] : vector<8x128xf32> to vector<8xf32>
    %339 = vector.shape_cast %338 : vector<8xf32> to vector<8x1xf32>
    %cst_139 = arith.constant 1.280000e+02 : f32
    %340 = vector.broadcast %cst_139 : f32 to vector<8x1xf32>
    %341 = arith.divf %339, %340 : vector<8x1xf32>
    %342 = vector.broadcast %334 : vector<8x1xf32> to vector<8x128xf32>
    %343 = arith.subf %326, %342 : vector<8x128xf32>
    %cst_140 = arith.constant 9.99999996E-13 : f32
    %344 = vector.broadcast %cst_140 : f32 to vector<8x1xf32>
    %345 = arith.addf %341, %344 : vector<8x1xf32>
    %346 = math.rsqrt %345 : vector<8x1xf32>
    %347 = vector.broadcast %346 : vector<8x1xf32> to vector<8x128xf32>
    %348 = arith.mulf %343, %347 : vector<8x128xf32>
    %349 = vector.broadcast %328 : vector<1x128xf32> to vector<8x128xf32>
    %350 = arith.mulf %348, %349 : vector<8x128xf32>
    %351 = vector.broadcast %330 : vector<1x128xf32> to vector<8x128xf32>
    %352 = arith.addf %350, %351 : vector<8x128xf32>
    %c0_141 = arith.constant 0 : index
    %c0_142 = arith.constant 0 : index
    %353 = vector.load %arg25[%c0_141, %c0_142] : memref<8x128xf32, #tpu.memory_space<vmem>>, vector<8x128xf32>
    tpu.vector_store %arg25[%c0_141, %c0_142], %352 {strides = array<i32>} : memref<8x128xf32, #tpu.memory_space<vmem>>, vector<8x128xf32>,
    %c0_143 = arith.constant 0 : index
    %c0_144 = arith.constant 0 : index
    %c0_145 = arith.constant 0 : index
    %354 = vector.load %arg24[%c0_143, %c0_144, %c0_145] : memref<1x8x128xf32, #tpu.memory_space<vmem>>, vector<1x8x128xf32>
    %355 = vector.shape_cast %354 : vector<1x8x128xf32> to vector<8x128xf32>
    %356 = vector.shape_cast %352 : vector<8x128xf32> to vector<1x8x128xf32>
    tpu.vector_store %arg24[%c0_143, %c0_144, %c0_145], %356 {strides = array<i32>} : memref<1x8x128xf32, #tpu.memory_space<vmem>>, vector<1x8x128xf32>,
    return
  }
  func.func @transform_0(%arg0: i32, %arg1: i32) -> (i32, i32, i32) {
    %c0_i32 = arith.constant 0 : i32
    %c0_i32_0 = arith.constant 0 : i32
    %c0_i32_1 = arith.constant 0 : i32
    return %arg0, %c0_i32, %c0_i32_0 : i32, i32, i32
  }
  func.func @transform_1(%arg0: i32, %arg1: i32) -> (i32, i32, i32) {
    %c0_i32 = arith.constant 0 : i32
    %c0_i32_0 = arith.constant 0 : i32
    %c0_i32_1 = arith.constant 0 : i32
    return %arg0, %c0_i32, %c0_i32_0 : i32, i32, i32
  }
  func.func @transform_2(%arg0: i32, %arg1: i32) -> (i32, i32, i32) {
    %c0_i32 = arith.constant 0 : i32
    %c0_i32_0 = arith.constant 0 : i32
    %c0_i32_1 = arith.constant 0 : i32
    return %arg1, %c0_i32, %c0_i32_0 : i32, i32, i32
  }
  func.func @transform_3(%arg0: i32, %arg1: i32) -> (i32, i32, i32) {
    %c0_i32 = arith.constant 0 : i32
    %c0_i32_0 = arith.constant 0 : i32
    %c0_i32_1 = arith.constant 0 : i32
    return %arg1, %c0_i32, %c0_i32_0 : i32, i32, i32
  }
  func.func @transform_4(%arg0: i32, %arg1: i32) -> (i32, i32, i32) {
    %c0_i32 = arith.constant 0 : i32
    %c0_i32_0 = arith.constant 0 : i32
    %c0_i32_1 = arith.constant 0 : i32
    return %arg1, %c0_i32, %c0_i32_0 : i32, i32, i32
  }
  func.func @transform_5(%arg0: i32, %arg1: i32) -> (i32, i32, i32) {
    %c0_i32 = arith.constant 0 : i32
    %c0_i32_0 = arith.constant 0 : i32
    %c0_i32_1 = arith.constant 0 : i32
    return %arg1, %c0_i32, %c0_i32_0 : i32, i32, i32
  }
  func.func @transform_6(%arg0: i32, %arg1: i32) -> (i32, i32, i32) {
    %c0_i32 = arith.constant 0 : i32
    %c0_i32_0 = arith.constant 0 : i32
    %c0_i32_1 = arith.constant 0 : i32
    return %arg1, %c0_i32, %c0_i32_0 : i32, i32, i32
  }
  func.func @transform_7(%arg0: i32, %arg1: i32) -> (i32, i32, i32) {
    %c0_i32 = arith.constant 0 : i32
    %c0_i32_0 = arith.constant 0 : i32
    %c0_i32_1 = arith.constant 0 : i32
    return %arg1, %c0_i32, %c0_i32_0 : i32, i32, i32
  }
  func.func @transform_8(%arg0: i32, %arg1: i32) -> (i32, i32, i32) {
    %c0_i32 = arith.constant 0 : i32
    %c0_i32_0 = arith.constant 0 : i32
    %c0_i32_1 = arith.constant 0 : i32
    return %arg1, %c0_i32, %c0_i32_0 : i32, i32, i32
  }
  func.func @transform_9(%arg0: i32, %arg1: i32) -> (i32, i32, i32) {
    %c0_i32 = arith.constant 0 : i32
    %c0_i32_0 = arith.constant 0 : i32
    %c0_i32_1 = arith.constant 0 : i32
    return %arg1, %c0_i32, %c0_i32_0 : i32, i32, i32
  }
  func.func @transform_10(%arg0: i32, %arg1: i32) -> (i32, i32, i32) {
    %c0_i32 = arith.constant 0 : i32
    %c0_i32_0 = arith.constant 0 : i32
    %c0_i32_1 = arith.constant 0 : i32
    return %arg1, %c0_i32, %c0_i32_0 : i32, i32, i32
  }
  func.func @transform_11(%arg0: i32, %arg1: i32) -> (i32, i32, i32) {
    %c0_i32 = arith.constant 0 : i32
    %c0_i32_0 = arith.constant 0 : i32
    %c0_i32_1 = arith.constant 0 : i32
    return %arg1, %c0_i32, %c0_i32_0 : i32, i32, i32
  }
  func.func @transform_12(%arg0: i32, %arg1: i32) -> (i32, i32, i32) {
    %c0_i32 = arith.constant 0 : i32
    %c0_i32_0 = arith.constant 0 : i32
    %c0_i32_1 = arith.constant 0 : i32
    return %arg1, %c0_i32, %c0_i32_0 : i32, i32, i32
  }
  func.func @transform_13(%arg0: i32, %arg1: i32) -> (i32, i32, i32) {
    %c0_i32 = arith.constant 0 : i32
    %c0_i32_0 = arith.constant 0 : i32
    %c0_i32_1 = arith.constant 0 : i32
    return %arg1, %c0_i32, %c0_i32_0 : i32, i32, i32
  }
  func.func @transform_14(%arg0: i32, %arg1: i32) -> (i32, i32, i32) {
    %c0_i32 = arith.constant 0 : i32
    %c0_i32_0 = arith.constant 0 : i32
    %c0_i32_1 = arith.constant 0 : i32
    return %arg1, %c0_i32, %c0_i32_0 : i32, i32, i32
  }
  func.func @transform_15(%arg0: i32, %arg1: i32) -> (i32, i32, i32) {
    %c0_i32 = arith.constant 0 : i32
    %c0_i32_0 = arith.constant 0 : i32
    %c0_i32_1 = arith.constant 0 : i32
    return %arg1, %c0_i32, %c0_i32_0 : i32, i32, i32
  }
  func.func @transform_16(%arg0: i32, %arg1: i32) -> (i32, i32, i32) {
    %c0_i32 = arith.constant 0 : i32
    %c0_i32_0 = arith.constant 0 : i32
    %c0_i32_1 = arith.constant 0 : i32
    return %arg1, %c0_i32, %c0_i32_0 : i32, i32, i32
  }
  func.func @transform_17(%arg0: i32, %arg1: i32) -> (i32, i32, i32) {
    %c0_i32 = arith.constant 0 : i32
    %c0_i32_0 = arith.constant 0 : i32
    %c0_i32_1 = arith.constant 0 : i32
    return %arg1, %c0_i32, %c0_i32_0 : i32, i32, i32
  }
  func.func @transform_18(%arg0: i32, %arg1: i32) -> (i32, i32, i32) {
    %c0_i32 = arith.constant 0 : i32
    %c0_i32_0 = arith.constant 0 : i32
    %c0_i32_1 = arith.constant 0 : i32
    return %arg1, %c0_i32, %c0_i32_0 : i32, i32, i32
  }
  func.func @transform_19(%arg0: i32, %arg1: i32) -> (i32, i32, i32) {
    %c0_i32 = arith.constant 0 : i32
    %c0_i32_0 = arith.constant 0 : i32
    %c0_i32_1 = arith.constant 0 : i32
    return %arg1, %c0_i32, %c0_i32_0 : i32, i32, i32
  }
  func.func @transform_20(%arg0: i32, %arg1: i32) -> (i32, i32, i32) {
    %c0_i32 = arith.constant 0 : i32
    %c0_i32_0 = arith.constant 0 : i32
    %c0_i32_1 = arith.constant 0 : i32
    return %arg1, %c0_i32, %c0_i32_0 : i32, i32, i32
  }
  func.func @transform_21(%arg0: i32, %arg1: i32) -> (i32, i32, i32) {
    %c0_i32 = arith.constant 0 : i32
    %c0_i32_0 = arith.constant 0 : i32
    %c0_i32_1 = arith.constant 0 : i32
    return %arg1, %c0_i32, %c0_i32_0 : i32, i32, i32
  }
  func.func @transform_22(%arg0: i32, %arg1: i32) -> (i32, i32, i32) {
    %c0_i32 = arith.constant 0 : i32
    %c0_i32_0 = arith.constant 0 : i32
    %c0_i32_1 = arith.constant 0 : i32
    return %arg0, %c0_i32, %c0_i32_0 : i32, i32, i32
  }
}

module attributes {stable_mosaic.version = 11 : i64} {
  func.func @_mlp_hidden_kernel(%arg0: i32, %arg1: memref<16x128xf32, #tpu.memory_space<vmem>>, %arg2: memref<128x128xbf16, #tpu.memory_space<vmem>>, %arg3: memref<1x128xf32, #tpu.memory_space<vmem>>, %arg4: memref<16x128xbf16, #tpu.memory_space<vmem>>) attributes {dimension_semantics = [#tpu.dimension_semantics<parallel>], iteration_bounds = array<i64: 1>, scalar_prefetch = 0 : i64, scratch_operands = 0 : i64, tpu.core_type = #tpu.core_type<tc>, window_params = [{pipeline_mode = #tpu.pipeline_mode<synchronous>, transform_indices = @transform_0, window_bounds = array<i64: 16, 128>}, {transform_indices = @transform_1, window_bounds = array<i64: 128, 128>}, {transform_indices = @transform_2, window_bounds = array<i64: 1, 128>}, {transform_indices = @transform_3, window_bounds = array<i64: 16, 128>}]} {
    %c0 = arith.constant 0 : index
    %c0_0 = arith.constant 0 : index
    %0 = vector.load %arg1[%c0, %c0_0] : memref<16x128xf32, #tpu.memory_space<vmem>>, vector<16x128xf32>
    %1 = arith.truncf %0 : vector<16x128xf32> to vector<16x128xbf16>
    %c0_1 = arith.constant 0 : index
    %c0_2 = arith.constant 0 : index
    %2 = vector.load %arg2[%c0_1, %c0_2] : memref<128x128xbf16, #tpu.memory_space<vmem>>, vector<128x128xbf16>
    %cst = arith.constant dense<0.000000e+00> : vector<16x128xf32>
    %3 = tpu.matmul %1, %2, %cst {dimension_numbers = #tpu.dot_dimension_numbers<[1], [0], [0], [1], [0, 0, 1, 1], [], []>} : vector<16x128xbf16>, vector<128x128xbf16>, vector<16x128xf32> -> vector<16x128xf32>
    %c0_3 = arith.constant 0 : index
    %c0_4 = arith.constant 0 : index
    %4 = vector.load %arg3[%c0_3, %c0_4] : memref<1x128xf32, #tpu.memory_space<vmem>>, vector<1x128xf32>
    %5 = vector.broadcast %4 : vector<1x128xf32> to vector<16x128xf32>
    %6 = arith.addf %3, %5 : vector<16x128xf32>
    %cst_5 = arith.constant 0.707106769 : f32
    %7 = vector.broadcast %cst_5 : f32 to vector<16x128xf32>
    %8 = arith.mulf %6, %7 : vector<16x128xf32>
    %9 = math.absf %8 : vector<16x128xf32>
    %cst_6 = arith.constant 0.327591091 : f32
    %10 = vector.broadcast %cst_6 : f32 to vector<16x128xf32>
    %11 = arith.mulf %10, %9 : vector<16x128xf32>
    %cst_7 = arith.constant 1.000000e+00 : f32
    %12 = vector.broadcast %cst_7 : f32 to vector<16x128xf32>
    %13 = arith.addf %12, %11 : vector<16x128xf32>
    %cst_8 = arith.constant 1.000000e+00 : f32
    %14 = vector.broadcast %cst_8 : f32 to vector<16x128xf32>
    %15 = arith.divf %14, %13 : vector<16x128xf32>
    %cst_9 = arith.constant 1.06140542 : f32
    %16 = vector.broadcast %cst_9 : f32 to vector<16x128xf32>
    %17 = arith.mulf %15, %16 : vector<16x128xf32>
    %cst_10 = arith.constant -1.45315206 : f32
    %18 = vector.broadcast %cst_10 : f32 to vector<16x128xf32>
    %19 = arith.addf %18, %17 : vector<16x128xf32>
    %20 = arith.mulf %15, %19 : vector<16x128xf32>
    %cst_11 = arith.constant 1.42141378 : f32
    %21 = vector.broadcast %cst_11 : f32 to vector<16x128xf32>
    %22 = arith.addf %21, %20 : vector<16x128xf32>
    %23 = arith.mulf %15, %22 : vector<16x128xf32>
    %cst_12 = arith.constant -0.284496725 : f32
    %24 = vector.broadcast %cst_12 : f32 to vector<16x128xf32>
    %25 = arith.addf %24, %23 : vector<16x128xf32>
    %26 = arith.mulf %15, %25 : vector<16x128xf32>
    %cst_13 = arith.constant 0.254829586 : f32
    %27 = vector.broadcast %cst_13 : f32 to vector<16x128xf32>
    %28 = arith.addf %27, %26 : vector<16x128xf32>
    %29 = arith.mulf %15, %28 : vector<16x128xf32>
    %cst_14 = arith.constant 0.000000e+00 : f32
    %30 = vector.broadcast %cst_14 : f32 to vector<16x128xf32>
    %31 = arith.subf %30, %9 : vector<16x128xf32>
    %32 = arith.mulf %31, %9 : vector<16x128xf32>
    %33 = math.exp %32 : vector<16x128xf32>
    %34 = arith.mulf %29, %33 : vector<16x128xf32>
    %cst_15 = arith.constant 1.000000e+00 : f32
    %35 = vector.broadcast %cst_15 : f32 to vector<16x128xf32>
    %36 = arith.subf %35, %34 : vector<16x128xf32>
    %cst_16 = arith.constant 0.000000e+00 : f32
    %37 = vector.broadcast %cst_16 : f32 to vector<16x128xf32>
    %38 = arith.cmpf oge, %8, %37 : vector<16x128xf32>
    %cst_17 = arith.constant 0.000000e+00 : f32
    %39 = vector.broadcast %cst_17 : f32 to vector<16x128xf32>
    %40 = arith.subf %39, %36 : vector<16x128xf32>
    %41 = arith.select %38, %36, %40 : vector<16x128xi1>, vector<16x128xf32>
    %cst_18 = arith.constant 5.000000e-01 : f32
    %42 = vector.broadcast %cst_18 : f32 to vector<16x128xf32>
    %43 = arith.mulf %42, %6 : vector<16x128xf32>
    %cst_19 = arith.constant 1.000000e+00 : f32
    %44 = vector.broadcast %cst_19 : f32 to vector<16x128xf32>
    %45 = arith.addf %44, %41 : vector<16x128xf32>
    %46 = arith.mulf %43, %45 : vector<16x128xf32>
    %47 = arith.truncf %46 : vector<16x128xf32> to vector<16x128xbf16>
    %c0_20 = arith.constant 0 : index
    %c0_21 = arith.constant 0 : index
    %48 = vector.load %arg4[%c0_20, %c0_21] : memref<16x128xbf16, #tpu.memory_space<vmem>>, vector<16x128xbf16>
    tpu.vector_store %arg4[%c0_20, %c0_21], %47 {strides = array<i32>} : memref<16x128xbf16, #tpu.memory_space<vmem>>, vector<16x128xbf16>,
    return
  }
  func.func @transform_0(%arg0: i32) -> (i32, i32) {
    %c0_i32 = arith.constant 0 : i32
    %c0_i32_0 = arith.constant 0 : i32
    %c0_i32_1 = arith.constant 0 : i32
    return %c0_i32, %c0_i32_0 : i32, i32
  }
  func.func @transform_1(%arg0: i32) -> (i32, i32) {
    %c0_i32 = arith.constant 0 : i32
    %c0_i32_0 = arith.constant 0 : i32
    return %c0_i32, %arg0 : i32, i32
  }
  func.func @transform_2(%arg0: i32) -> (i32, i32) {
    %c0_i32 = arith.constant 0 : i32
    %c0_i32_0 = arith.constant 0 : i32
    return %c0_i32, %arg0 : i32, i32
  }
  func.func @transform_3(%arg0: i32) -> (i32, i32) {
    %c0_i32 = arith.constant 0 : i32
    %c0_i32_0 = arith.constant 0 : i32
    return %c0_i32, %arg0 : i32, i32
  }
}

module attributes {stable_mosaic.version = 11 : i64} {
  func.func @_mlp_out_kernel(%arg0: i32, %arg1: memref<16x128xbf16, #tpu.memory_space<vmem>>, %arg2: memref<128x128xbf16, #tpu.memory_space<vmem>>, %arg3: memref<1x128xf32, #tpu.memory_space<vmem>>, %arg4: memref<16x128xf32, #tpu.memory_space<vmem>>) attributes {dimension_semantics = [#tpu.dimension_semantics<parallel>], iteration_bounds = array<i64: 1>, scalar_prefetch = 0 : i64, scratch_operands = 0 : i64, tpu.core_type = #tpu.core_type<tc>, window_params = [{pipeline_mode = #tpu.pipeline_mode<synchronous>, transform_indices = @transform_0, window_bounds = array<i64: 16, 128>}, {transform_indices = @transform_1, window_bounds = array<i64: 128, 128>}, {transform_indices = @transform_2, window_bounds = array<i64: 1, 128>}, {transform_indices = @transform_3, window_bounds = array<i64: 16, 128>}]} {
    %c0 = arith.constant 0 : index
    %c0_0 = arith.constant 0 : index
    %0 = vector.load %arg1[%c0, %c0_0] : memref<16x128xbf16, #tpu.memory_space<vmem>>, vector<16x128xbf16>
    %c0_1 = arith.constant 0 : index
    %c0_2 = arith.constant 0 : index
    %1 = vector.load %arg2[%c0_1, %c0_2] : memref<128x128xbf16, #tpu.memory_space<vmem>>, vector<128x128xbf16>
    %cst = arith.constant dense<0.000000e+00> : vector<16x128xf32>
    %2 = tpu.matmul %0, %1, %cst {dimension_numbers = #tpu.dot_dimension_numbers<[1], [0], [0], [1], [0, 0, 1, 1], [], []>} : vector<16x128xbf16>, vector<128x128xbf16>, vector<16x128xf32> -> vector<16x128xf32>
    %c0_3 = arith.constant 0 : index
    %c0_4 = arith.constant 0 : index
    %3 = vector.load %arg3[%c0_3, %c0_4] : memref<1x128xf32, #tpu.memory_space<vmem>>, vector<1x128xf32>
    %4 = vector.broadcast %3 : vector<1x128xf32> to vector<16x128xf32>
    %5 = arith.addf %2, %4 : vector<16x128xf32>
    %c0_5 = arith.constant 0 : index
    %c0_6 = arith.constant 0 : index
    %6 = vector.load %arg4[%c0_5, %c0_6] : memref<16x128xf32, #tpu.memory_space<vmem>>, vector<16x128xf32>
    tpu.vector_store %arg4[%c0_5, %c0_6], %5 {strides = array<i32>} : memref<16x128xf32, #tpu.memory_space<vmem>>, vector<16x128xf32>,
    return
  }
  func.func @transform_0(%arg0: i32) -> (i32, i32) {
    %c0_i32 = arith.constant 0 : i32
    %c0_i32_0 = arith.constant 0 : i32
    %c0_i32_1 = arith.constant 0 : i32
    return %c0_i32, %c0_i32_0 : i32, i32
  }
  func.func @transform_1(%arg0: i32) -> (i32, i32) {
    %c0_i32 = arith.constant 0 : i32
    %c0_i32_0 = arith.constant 0 : i32
    return %c0_i32, %arg0 : i32, i32
  }
  func.func @transform_2(%arg0: i32) -> (i32, i32) {
    %c0_i32 = arith.constant 0 : i32
    %c0_i32_0 = arith.constant 0 : i32
    return %c0_i32, %arg0 : i32, i32
  }
  func.func @transform_3(%arg0: i32) -> (i32, i32) {
    %c0_i32 = arith.constant 0 : i32
    %c0_i32_0 = arith.constant 0 : i32
    return %c0_i32, %arg0 : i32, i32
  }
}

</mosaic_0001>

<llo_original>
// kernel: al_projector_forward.5
$region0: #{al_projector_forward.5}
  #allocation0 [shape = 'u32[]', space=smem, size = 0x4, offset = 0x4, fixed_abs, tag = 'smem constant byte address 0x4 - core index']
  #allocation1 [shape = 'u32[72,128]{1,0:T(1,128)}', space=vmem, size = 0x9000, scoped, tag = 'internal scratch']
  %s0 = inlined_call_operand.hbm [shape: f32[32,128], index: 0, kind: input, shape index: {}]
  %s1 = inlined_call_operand.hbm [shape: f32[1,128], index: 1, kind: input, shape index: {}]
  %s2 = inlined_call_operand.hbm [shape: f32[1,128], index: 2, kind: input, shape index: {}]
  %s3 = inlined_call_operand.vmem [shape: bf16[32,128], index: 3, kind: output, shape index: {}]
  %s4 = sld [smem:[#allocation0]]
  $region34: #{al_projector_forward.5} parent=0
    _
  %s6 = ssub.s32 1, %s4
  %s7 = scalar_select 0, %s6, %s4
  $region1: #{al_projector_forward.5} parent=0
    #allocation2 [shape = 'u8[16384]{0}', space=vmem, size = 0x4000, scoped, tag = 'input window, operand 0, single buffered']
    #allocation3 [shape = 's32[1]{0}', space=sflag, size = 0x4, scoped, tag = 'scoped memory for al_projector_forward.5']
    #allocation4 [shape = 'u8[512]{0}', space=vmem, size = 0x400, scoped, tag = 'input window, operand 1, single buffered']
    #allocation5 [shape = 's32[1]{0}', space=sflag, size = 0x4, scoped, tag = 'scoped memory for al_projector_forward.5']
    #allocation6 [shape = 'u8[512]{0}', space=vmem, size = 0x400, scoped, tag = 'input window, operand 2, single buffered']
    %8 = vsyncpa [#allocation3], 0
    %9 = vsyncpa [#allocation5], 0
    // Predicated region
    $region2: #{al_projector_forward.5} parent=1 // pred_check
      _
    $region3: #{al_projector_forward.5} parent=1 // pred_check_branch
      %11 = sbr.rel (0) target = $region5
    $region4: #{al_projector_forward.5} parent=1 // pred_region
      %13 = vsyncadd [#allocation3], 0
      %s14 = sshll.u32 %s0, 4
      %s15 = int_to_ptr.hbm [resolvable:$true] %s14
      %s16 = sshll.u32 [#allocation2], 4
      %s17 = int_to_ptr.vmem [resolvable:$true] %s16
      %22 = dma.hbm_to_vmem [thread:$0]  %s15, 512, %s17, [#allocation3], 128, 128, 8
    $region5: #{al_projector_forward.5} parent=1 // pred_fallthru
      _
    // Predicated region
    $region6: #{al_projector_forward.5} parent=1 // pred_check
      _
    $region7: #{al_projector_forward.5} parent=1 // pred_check_branch
      %24 = sbr.rel (0) target = $region9
    $region8: #{al_projector_forward.5} parent=1 // pred_region
      %26 = vsyncadd [#allocation5], 0
      %s28 = sshll.u32 %s1, 4
      %s29 = int_to_ptr.hbm [resolvable:$true] %s28
      %s30 = sshll.u32 [#allocation4], 4
      %s31 = int_to_ptr.vmem [resolvable:$true] %s30
      %33 = dma.hbm_to_vmem [thread:$0]  %s29, 16, %s31, [#allocation5]
    $region9: #{al_projector_forward.5} parent=1 // pred_fallthru
      _
    // Predicated region
    $region10: #{al_projector_forward.5} parent=1 // pred_check
      _
    $region11: #{al_projector_forward.5} parent=1 // pred_check_branch
      %35 = sbr.rel (0) target = $region13
    $region12: #{al_projector_forward.5} parent=1 // pred_region
      %37 = vsyncadd [#allocation5], 0
      %s39 = sshll.u32 %s2, 4
      %s40 = int_to_ptr.hbm [resolvable:$true] %s39
      %s41 = sshll.u32 [#allocation6], 4
      %s42 = int_to_ptr.vmem [resolvable:$true] %s41
      %44 = dma.hbm_to_vmem [thread:$0]  %s40, 16, %s42, [#allocation5]
    $region13: #{al_projector_forward.5} parent=1 // pred_fallthru
      _
    // Predicated region
    $region14: #{al_projector_forward.5} parent=1 // pred_check
      _
    $region15: #{al_projector_forward.5} parent=1 // pred_check_branch
      %46 = sbr.rel (0) target = $region17
    $region16: #{al_projector_forward.5} parent=1 // pred_region
      %48 = dma.done [#allocation3], 512
    $region17: #{al_projector_forward.5} parent=1 // pred_fallthru
      _
    // Predicated region
    $region18: #{al_projector_forward.5} parent=1 // pred_check
      _
    $region19: #{al_projector_forward.5} parent=1 // pred_check_branch
      %50 = sbr.rel (0) target = $region21
    $region20: #{al_projector_forward.5} parent=1 // pred_region
      %52 = dma.done [#allocation5], 16
    $region21: #{al_projector_forward.5} parent=1 // pred_fallthru
      _
    // Predicated region
    $region22: #{al_projector_forward.5} parent=1 // pred_check
      _
    $region23: #{al_projector_forward.5} parent=1 // pred_check_branch
      %54 = sbr.rel (0) target = $region25
    $region24: #{al_projector_forward.5} parent=1 // pred_region
      %56 = dma.done [#allocation5], 16
    $region25: #{al_projector_forward.5} parent=1 // pred_fallthru
      _
    %v57 = vld [vmem:[#allocation2] sm:$0xff]
    %v58 = vld [vmem:[#allocation2 + $0x8] sm:$0xff]
    %v59 = vld [vmem:[#allocation2 + $0x10] sm:$0xff]
    %v60 = vld [vmem:[#allocation2 + $0x18] sm:$0xff]
    %v61 = vld [vmem:[#allocation4] sm:$0x1]
    %v62 = vld [vmem:[#allocation6] sm:$0x1]
    %63 = vadd.xlane.f32.xlu0 %v57
    %v64 = vpop.xlane.xlu0 %63
    %65 = vadd.xlane.f32.xlu0 %v58
    %v66 = vpop.xlane.xlu0 %65
    %67 = vadd.xlane.f32.xlu0 %v59
    %v68 = vpop.xlane.xlu0 %67
    %69 = vadd.xlane.f32.xlu0 %v60
    %v70 = vpop.xlane.xlu0 %69
    %v71 = vrcp.pop 128.0
    %v72 = vmul.f32 128.0, %v71
    %v73 = vsub.f32 1.0, %v72
    %v74 = vmul.f32 %v71, %v73
    %v75 = vadd.f32 %v71, %v74
    %vm76 = vweird.f32 %v71
    %v77 = vsel %vm76, %v71, %v75
    %v78 = vmul.f32 %v64, %v77
    %v79 = vmul.f32 %v66, %v77
    %v80 = vmul.f32 %v68, %v77
    %v81 = vmul.f32 %v70, %v77
    %v82 = vsub.f32 %v57, %v78
    %v83 = vsub.f32 %v58, %v79
    %v84 = vsub.f32 %v59, %v80
    %v85 = vsub.f32 %v60, %v81
    %v86 = vmul.f32 %v82, %v82
    %v87 = vmul.f32 %v83, %v83
    %v88 = vmul.f32 %v84, %v84
    %v89 = vmul.f32 %v85, %v85
    %90 = vadd.xlane.f32.xlu0 %v86
    %v91 = vpop.xlane.xlu0 %90
    %92 = vadd.xlane.f32.xlu0 %v87
    %v93 = vpop.xlane.xlu0 %92
    %94 = vadd.xlane.f32.xlu0 %v88
    %v95 = vpop.xlane.xlu0 %94
    %96 = vadd.xlane.f32.xlu0 %v89
    %v97 = vpop.xlane.xlu0 %96
    %v98 = vmul.f32 %v91, %v77
    %v99 = vmul.f32 %v93, %v77
    %v100 = vmul.f32 %v95, %v77
    %v101 = vmul.f32 %v97, %v77
    %v102 = vadd.f32 %v98, 1e-05
    %v103 = vadd.f32 %v99, 1e-05
    %v104 = vadd.f32 %v100, 1e-05
    %v105 = vadd.f32 %v101, 1e-05
    %v106 = vrsqrt.pop %v102
    %v107 = vmul.f32 %v106, %v102
    %v108 = vmul.f32 %v107, %v106
    %v109 = vmul.f32 0.5, %v108
    %v110 = vsub.f32 1.5, %v109
    %v111 = vmul.f32 %v106, %v110
    %vm112 = vweird.f32 %v102
    %vm113 = vweird.f32 %v106
    %vm114 = vmor %vm112, %vm113
    %v115 = vsel %vm114, %v106, %v111
    %v116 = vrsqrt.pop %v103
    %v117 = vmul.f32 %v116, %v103
    %v118 = vmul.f32 %v117, %v116
    %v119 = vmul.f32 0.5, %v118
    %v120 = vsub.f32 1.5, %v119
    %v121 = vmul.f32 %v116, %v120
    %vm122 = vweird.f32 %v103
    %vm123 = vweird.f32 %v116
    %vm124 = vmor %vm122, %vm123
    %v125 = vsel %vm124, %v116, %v121
    %v126 = vrsqrt.pop %v104
    %v127 = vmul.f32 %v126, %v104
    %v128 = vmul.f32 %v127, %v126
    %v129 = vmul.f32 0.5, %v128
    %v130 = vsub.f32 1.5, %v129
    %v131 = vmul.f32 %v126, %v130
    %vm132 = vweird.f32 %v104
    %vm133 = vweird.f32 %v126
    %vm134 = vmor %vm132, %vm133
    %v135 = vsel %vm134, %v126, %v131
    %v136 = vrsqrt.pop %v105
    %v137 = vmul.f32 %v136, %v105
    %v138 = vmul.f32 %v137, %v136
    %v139 = vmul.f32 0.5, %v138
    %v140 = vsub.f32 1.5, %v139
    %v141 = vmul.f32 %v136, %v140
    %vm142 = vweird.f32 %v105
    %vm143 = vweird.f32 %v136
    %vm144 = vmor %vm142, %vm143
    %v145 = vsel %vm144, %v136, %v141
    %v146 = vmul.f32 %v82, %v115
    %v147 = vmul.f32 %v83, %v125
    %v148 = vmul.f32 %v84, %v135
    %v149 = vmul.f32 %v85, %v145
    %v151 = vperm.slane %v61, 0
    %v153 = vmul.f32 %v146, %v151
    %v154 = vmul.f32 %v147, %v151
    %v155 = vmul.f32 %v148, %v151
    %v156 = vmul.f32 %v149, %v151
    %v158 = vperm.slane %v62, 0
    %v160 = vadd.f32 %v153, %v158
    %v161 = vadd.f32 %v154, %v158
    %v162 = vadd.f32 %v155, %v158
    %v163 = vadd.f32 %v156, %v158
    %v164 = vpack.c.bf16 %v160, %v160
    %v165 = vpack.c.bf16 %v161, %v161
    %v166 = vpack.c.bf16 %v162, %v162
    %v167 = vpack.c.bf16 %v163, %v163
    %168 = vst [vmem:[%s3] sm:$0xf] %v164
    %169 = vst [vmem:[%s3 + $0x4] sm:$0xf] %v165
    %170 = vst [vmem:[%s3 + $0x8] sm:$0xf] %v166
    %171 = vst [vmem:[%s3 + $0xc] sm:$0xf] %v167
    // Predicated region
    $region26: #{al_projector_forward.5} parent=1 // pred_check
      _
    $region27: #{al_projector_forward.5} parent=1 // pred_check_branch
      %173 = sbr.rel (0) target = $region29
    $region28: #{al_projector_forward.5} parent=1 // pred_region
      _
    $region29: #{al_projector_forward.5} parent=1 // pred_fallthru
      _
    // Predicated region
    $region30: #{al_projector_forward.5} parent=1 // pred_check
      _
    $region31: #{al_projector_forward.5} parent=1 // pred_check_branch
      %175 = sbr.rel (0) target = $region33
    $region32: #{al_projector_forward.5} parent=1 // pred_region
      _
    $region33: #{al_projector_forward.5} parent=1 // pred_fallthru
      _
    %176 = vsyncpa [#allocation3], 1
    %177 = vsyncpa [#allocation5], 1

// kernel: al_projector_forward.6
$region0: #{al_projector_forward.6}
  #allocation0 [shape = 'u32[]', space=smem, size = 0x4, offset = 0x4, fixed_abs, tag = 'smem constant byte address 0x4 - core index']
  #allocation1 [shape = 'u32[72,128]{1,0:T(1,128)}', space=vmem, size = 0x9000, scoped, tag = 'internal scratch']
  %s0 = inlined_call_operand.vmem [shape: f32[8,128], index: 0, kind: input, shape index: {}]
  %s1 = inlined_call_operand.hbm [shape: f32[1,128], index: 1, kind: input, shape index: {}]
  %s2 = inlined_call_operand.hbm [shape: f32[1,128], index: 2, kind: input, shape index: {}]
  %s3 = inlined_call_operand.vmem [shape: f32[8,128], index: 3, kind: output, shape index: {}]
  %s4 = sld [smem:[#allocation0]]
  $region30: #{al_projector_forward.6} parent=0
    _
  %s6 = ssub.s32 1, %s4
  %s7 = scalar_select 0, %s6, %s4
  $region1: #{al_projector_forward.6} parent=0
    #allocation2 [shape = 'u8[512]{0}', space=vmem, size = 0x400, scoped, tag = 'input window, operand 1, single buffered']
    #allocation3 [shape = 's32[1]{0}', space=sflag, size = 0x4, scoped, tag = 'scoped memory for al_projector_forward.6']
    #allocation4 [shape = 'u8[512]{0}', space=vmem, size = 0x400, scoped, tag = 'input window, operand 2, single buffered']
    #allocation5 [shape = 's32[1]{0}', space=sflag, size = 0x4, scoped, tag = 'scoped memory for al_projector_forward.6']
    %8 = vsyncpa [#allocation3], 0
    %9 = vsyncpa [#allocation5], 0
    // Predicated region
    $region2: #{al_projector_forward.6} parent=1 // pred_check
      _
    $region3: #{al_projector_forward.6} parent=1 // pred_check_branch
      %11 = sbr.rel (0) target = $region5
    $region4: #{al_projector_forward.6} parent=1 // pred_region
      _
    $region5: #{al_projector_forward.6} parent=1 // pred_fallthru
      _
    // Predicated region
    $region6: #{al_projector_forward.6} parent=1 // pred_check
      _
    $region7: #{al_projector_forward.6} parent=1 // pred_check_branch
      %13 = sbr.rel (0) target = $region9
    $region8: #{al_projector_forward.6} parent=1 // pred_region
      %15 = vsyncadd [#allocation3], 0
      %s17 = sshll.u32 %s1, 4
      %s18 = int_to_ptr.hbm [resolvable:$true] %s17
      %s19 = sshll.u32 [#allocation2], 4
      %s20 = int_to_ptr.vmem [resolvable:$true] %s19
      %22 = dma.hbm_to_vmem [thread:$0]  %s18, 16, %s20, [#allocation3]
    $region9: #{al_projector_forward.6} parent=1 // pred_fallthru
      _
    // Predicated region
    $region10: #{al_projector_forward.6} parent=1 // pred_check
      _
    $region11: #{al_projector_forward.6} parent=1 // pred_check_branch
      %24 = sbr.rel (0) target = $region13
    $region12: #{al_projector_forward.6} parent=1 // pred_region
      %26 = vsyncadd [#allocation5], 0
      %s28 = sshll.u32 %s2, 4
      %s29 = int_to_ptr.hbm [resolvable:$true] %s28
      %s30 = sshll.u32 [#allocation4], 4
      %s31 = int_to_ptr.vmem [resolvable:$true] %s30
      %33 = dma.hbm_to_vmem [thread:$0]  %s29, 16, %s31, [#allocation5]
    $region13: #{al_projector_forward.6} parent=1 // pred_fallthru
      _
    // Predicated region
    $region14: #{al_projector_forward.6} parent=1 // pred_check
      _
    $region15: #{al_projector_forward.6} parent=1 // pred_check_branch
      %35 = sbr.rel (0) target = $region17
    $region16: #{al_projector_forward.6} parent=1 // pred_region
      %37 = dma.done [#allocation3], 16
    $region17: #{al_projector_forward.6} parent=1 // pred_fallthru
      _
    // Predicated region
    $region18: #{al_projector_forward.6} parent=1 // pred_check
      _
    $region19: #{al_projector_forward.6} parent=1 // pred_check_branch
      %39 = sbr.rel (0) target = $region21
    $region20: #{al_projector_forward.6} parent=1 // pred_region
      %41 = dma.done [#allocation5], 16
    $region21: #{al_projector_forward.6} parent=1 // pred_fallthru
      _
    %v42 = vld [vmem:[%s0] sm:$0xff]
    %v43 = vld [vmem:[#allocation2] sm:$0x1]
    %v44 = vld [vmem:[#allocation4] sm:$0x1]
    %45 = vadd.xlane.f32.xlu0 %v42
    %v46 = vpop.xlane.xlu0 %45
    %v47 = vrcp.pop 128.0
    %v48 = vmul.f32 128.0, %v47
    %v49 = vsub.f32 1.0, %v48
    %v50 = vmul.f32 %v47, %v49
    %v51 = vadd.f32 %v47, %v50
    %vm52 = vweird.f32 %v47
    %v53 = vsel %vm52, %v47, %v51
    %v54 = vmul.f32 %v46, %v53
    %v55 = vsub.f32 %v42, %v54
    %v56 = vmul.f32 %v55, %v55
    %57 = vadd.xlane.f32.xlu0 %v56
    %v58 = vpop.xlane.xlu0 %57
    %v59 = vmul.f32 %v58, %v53
    %v60 = vadd.f32 %v59, 1e-12
    %v61 = vrsqrt.pop %v60
    %v62 = vmul.f32 %v61, %v60
    %v63 = vmul.f32 %v62, %v61
    %v64 = vmul.f32 0.5, %v63
    %v65 = vsub.f32 1.5, %v64
    %v66 = vmul.f32 %v61, %v65
    %vm67 = vweird.f32 %v60
    %vm68 = vweird.f32 %v61
    %vm69 = vmor %vm67, %vm68
    %v70 = vsel %vm69, %v61, %v66
    %v71 = vmul.f32 %v55, %v70
    %v73 = vperm.slane %v43, 0
    %v75 = vmul.f32 %v71, %v73
    %v77 = vperm.slane %v44, 0
    %v79 = vadd.f32 %v75, %v77
    %80 = vst [vmem:[%s3] sm:$0xff] %v79
    // Predicated region
    $region22: #{al_projector_forward.6} parent=1 // pred_check
      _
    $region23: #{al_projector_forward.6} parent=1 // pred_check_branch
      %82 = sbr.rel (0) target = $region25
    $region24: #{al_projector_forward.6} parent=1 // pred_region
      _
    $region25: #{al_projector_forward.6} parent=1 // pred_fallthru
      _
    // Predicated region
    $region26: #{al_projector_forward.6} parent=1 // pred_check
      _
    $region27: #{al_projector_forward.6} parent=1 // pred_check_branch
      %84 = sbr.rel (0) target = $region29
    $region28: #{al_projector_forward.6} parent=1 // pred_region
      _
    $region29: #{al_projector_forward.6} parent=1 // pred_fallthru
      _
    %85 = vsyncpa [#allocation3], 1
    %86 = vsyncpa [#allocation5], 1

// kernel: al_projector_forward.8
$region0: #{al_projector_forward.8}
  #allocation0 [shape = 'u32[]', space=smem, size = 0x4, offset = 0x4, fixed_abs, tag = 'smem constant byte address 0x4 - core index']
  #allocation1 [shape = 'u32[72,128]{1,0:T(1,128)}', space=vmem, size = 0x9000, scoped, tag = 'internal scratch']
  %s0 = inlined_call_operand.vmem [shape: f32[16,128], index: 0, kind: input, shape index: {}]
  %s1 = inlined_call_operand.hbm [shape: bf16[128,128], index: 1, kind: input, shape index: {}]
  %s2 = inlined_call_operand.vmem [shape: f32[1,128], index: 2, kind: input, shape index: {}]
  %s3 = inlined_call_operand.vmem [shape: bf16[16,128], index: 3, kind: output, shape index: {}]
  %s4 = sld [smem:[#allocation0]]
  $region26: #{al_projector_forward.8} parent=0
    _
  %s6 = ssub.s32 1, %s4
  %s7 = scalar_select 0, %s6, %s4
  $region1: #{al_projector_forward.8} parent=0
    #allocation2 [shape = 'u8[32768]{0}', space=vmem, size = 0x8000, scoped, tag = 'input window, operand 1, single buffered']
    #allocation3 [shape = 's32[1]{0}', space=sflag, size = 0x4, scoped, tag = 'scoped memory for al_projector_forward.8']
    %8 = vsyncpa [#allocation3], 0
    // Predicated region
    $region2: #{al_projector_forward.8} parent=1 // pred_check
      _
    $region3: #{al_projector_forward.8} parent=1 // pred_check_branch
      %10 = sbr.rel (0) target = $region5
    $region4: #{al_projector_forward.8} parent=1 // pred_region
      _
    $region5: #{al_projector_forward.8} parent=1 // pred_fallthru
      _
    // Predicated region
    $region6: #{al_projector_forward.8} parent=1 // pred_check
      _
    $region7: #{al_projector_forward.8} parent=1 // pred_check_branch
      %12 = sbr.rel (0) target = $region9
    $region8: #{al_projector_forward.8} parent=1 // pred_region
      %14 = vsyncadd [#allocation3], 0
      %s15 = sshll.u32 %s1, 4
      %s16 = int_to_ptr.hbm [resolvable:$true] %s15
      %s17 = sshll.u32 [#allocation2], 4
      %s18 = int_to_ptr.vmem [resolvable:$true] %s17
      %23 = dma.hbm_to_vmem [thread:$0]  %s16, 1024, %s18, [#allocation3], 64, 64, 4
    $region9: #{al_projector_forward.8} parent=1 // pred_fallthru
      _
    // Predicated region
    $region10: #{al_projector_forward.8} parent=1 // pred_check
      _
    $region11: #{al_projector_forward.8} parent=1 // pred_check_branch
      %25 = sbr.rel (0) target = $region13
    $region12: #{al_projector_forward.8} parent=1 // pred_region
      _
    $region13: #{al_projector_forward.8} parent=1 // pred_fallthru
      _
    // Predicated region
    $region14: #{al_projector_forward.8} parent=1 // pred_check
      _
    $region15: #{al_projector_forward.8} parent=1 // pred_check_branch
      %27 = sbr.rel (0) target = $region17
    $region16: #{al_projector_forward.8} parent=1 // pred_region
      %29 = dma.done [#allocation3], 1024
    $region17: #{al_projector_forward.8} parent=1 // pred_fallthru
      _
    %v30 = vld [vmem:[%s0] sm:$0xff]
    %v31 = vld [vmem:[%s0 + $0x8] sm:$0xff]
    %v32 = vpack.c.bf16 %v31, %v30
    %v33 = vld [vmem:[#allocation2] sm:$0xf]
    %v34 = vld [vmem:[#allocation2 + $0x4] sm:$0xf]
    %v35 = vld [vmem:[#allocation2 + $0x8] sm:$0xf]
    %v36 = vld [vmem:[#allocation2 + $0xc] sm:$0xf]
    %v37 = vld [vmem:[#allocation2 + $0x10] sm:$0xf]
    %v38 = vld [vmem:[#allocation2 + $0x14] sm:$0xf]
    %v39 = vld [vmem:[#allocation2 + $0x18] sm:$0xf]
    %v40 = vld [vmem:[#allocation2 + $0x1c] sm:$0xf]
    %v41 = vld [vmem:[#allocation2 + $0x20] sm:$0xf]
    %v42 = vld [vmem:[#allocation2 + $0x24] sm:$0xf]
    %v43 = vld [vmem:[#allocation2 + $0x28] sm:$0xf]
    %v44 = vld [vmem:[#allocation2 + $0x2c] sm:$0xf]
    %v45 = vld [vmem:[#allocation2 + $0x30] sm:$0xf]
    %v46 = vld [vmem:[#allocation2 + $0x34] sm:$0xf]
    %v47 = vld [vmem:[#allocation2 + $0x38] sm:$0xf]
    %v48 = vld [vmem:[#allocation2 + $0x3c] sm:$0xf]
    %v49 = vld [vmem:[%s2] sm:$0x1]
    %v51 = vperm.slane %v49, 0
    %v69 = vunpack.c.l.b16 %v33
    %v70 = vunpack.c.l.b16 %v34
    %v71 = vunpack.c.l.b16 %v35
    %v72 = vunpack.c.l.b16 %v36
    %v73 = vunpack.c.l.b16 %v37
    %v74 = vunpack.c.l.b16 %v38
    %v75 = vunpack.c.l.b16 %v39
    %v76 = vunpack.c.l.b16 %v40
    %v77 = vunpack.c.l.b16 %v41
    %v78 = vunpack.c.l.b16 %v42
    %v79 = vunpack.c.l.b16 %v43
    %v80 = vunpack.c.l.b16 %v44
    %v81 = vunpack.c.l.b16 %v45
    %v82 = vunpack.c.l.b16 %v46
    %v83 = vunpack.c.l.b16 %v47
    %v84 = vunpack.c.l.b16 %v48
    %v85 = vpack.c.b16 %v70, %v69
    %v86 = vpack.c.b16 %v72, %v71
    %v87 = vpack.c.b16 %v74, %v73
    %v88 = vpack.c.b16 %v76, %v75
    %v89 = vpack.c.b16 %v78, %v77
    %v90 = vpack.c.b16 %v80, %v79
    %v91 = vpack.c.b16 %v82, %v81
    %v92 = vpack.c.b16 %v84, %v83
    %101 = vmatpush.bf16.msra.mxu0 %v92
    %102 = vmatpush.bf16.msra.mxu0 %v91
    %103 = vmatpush.bf16.msra.mxu0 %v90
    %104 = vmatpush.bf16.msra.mxu0 %v89
    %105 = vmatpush.bf16.msra.mxu0 %v88
    %106 = vmatpush.bf16.msra.mxu0 %v87
    %107 = vmatpush.bf16.msra.mxu0 %v86
    %108 = vmatpush.bf16.msra.mxu0 %v85
    %109 = vmatmul.bf16.gmra.mxu0 %v32
    %v110 = vpop.f32.mrf.mxu0
    %v111 = vadd.f32 %v51, %v110
    %v112 = vpop.f32.mrf.mxu0
    %v113 = vadd.f32 %v51, %v112
    %114 = vdwg.mxu0
    %v115 = vmul.f32 %v111, 0.70710677
    %v116 = vmul.f32 %v113, 0.70710677
    %v117 = vand.u32 2147483647, %v115
    %v118 = vand.u32 2147483647, %v116
    %v119 = vmul.f32 %v117, 0.3275911
    %v120 = vmul.f32 %v118, 0.3275911
    %v121 = vadd.f32 %v119, 1.0
    %v122 = vadd.f32 %v120, 1.0
    %v123 = vrcp.pop %v121
    %v124 = vmul.f32 %v121, %v123
    %v125 = vsub.f32 1.0, %v124
    %v126 = vmul.f32 %v123, %v125
    %v127 = vadd.f32 %v123, %v126
    %vm128 = vweird.f32 %v121
    %vm129 = vweird.f32 %v123
    %vm130 = vmor %vm128, %vm129
    %v131 = vsel %vm130, %v123, %v127
    %v132 = vand.u32 2147483647, %v121
    %vm133 = vcmp.eq.f32.partialorder %v132, 8.507059e+37
    %v134 = vand.u32 %v121, 2147483648
    %v135 = vor.u32 1.1754944e-38, %v134
    %v136 = vsel %vm133, %v135, %v131
    %v137 = vmul.f32 1.0, %v136
    %v138 = vrcp.pop %v122
    %v139 = vmul.f32 %v122, %v138
    %v140 = vsub.f32 1.0, %v139
    %v141 = vmul.f32 %v138, %v140
    %v142 = vadd.f32 %v138, %v141
    %vm143 = vweird.f32 %v122
    %vm144 = vweird.f32 %v138
    %vm145 = vmor %vm143, %vm144
    %v146 = vsel %vm145, %v138, %v142
    %v147 = vand.u32 2147483647, %v122
    %vm148 = vcmp.eq.f32.partialorder %v147, 8.507059e+37
    %v149 = vand.u32 %v122, 2147483648
    %v150 = vor.u32 1.1754944e-38, %v149
    %v151 = vsel %vm148, %v150, %v146
    %v152 = vmul.f32 1.0, %v151
    %v153 = vmul.f32 %v137, 1.0614054
    %v154 = vmul.f32 %v152, 1.0614054
    %v155 = vadd.f32 %v153, -1.4531521
    %v156 = vadd.f32 %v154, -1.4531521
    %v157 = vmul.f32 %v137, %v155
    %v158 = vmul.f32 %v152, %v156
    %v159 = vadd.f32 %v157, 1.4214138
    %v160 = vadd.f32 %v158, 1.4214138
    %v161 = vmul.f32 %v137, %v159
    %v162 = vmul.f32 %v152, %v160
    %v163 = vadd.f32 %v161, -0.28449672
    %v164 = vadd.f32 %v162, -0.28449672
    %v165 = vmul.f32 %v137, %v163
    %v166 = vmul.f32 %v152, %v164
    %v167 = vadd.f32 %v165, 0.2548296
    %v168 = vadd.f32 %v166, 0.2548296
    %v169 = vmul.f32 %v137, %v167
    %v170 = vmul.f32 %v152, %v168
    %v171 = vsub.f32 0.0, %v117
    %v172 = vsub.f32 0.0, %v118
    %v173 = vmul.f32 %v171, %v117
    %v174 = vmul.f32 %v172, %v118
    %v175 = vmul.f32 %v173, 1.442695
    %v176 = vpow.pop %v175
    %v177 = vmul.f32 %v174, 1.442695
    %v178 = vpow.pop %v177
    %v179 = vmul.f32 %v169, %v176
    %v180 = vmul.f32 %v170, %v178
    %v181 = vsub.f32 1.0, %v179
    %v182 = vsub.f32 1.0, %v180
    %vm183 = vcmp.ge.f32.partialorder %v115, 0.0
    %vm184 = vcmp.ge.f32.partialorder %v116, 0.0
    %v185 = vsub.f32 0.0, %v181
    %v186 = vsub.f32 0.0, %v182
    %v187 = vsel %vm183, %v181, %v185
    %v188 = vsel %vm184, %v182, %v186
    %v189 = vmul.f32 %v111, 0.5
    %v190 = vmul.f32 %v113, 0.5
    %v191 = vadd.f32 %v187, 1.0
    %v192 = vadd.f32 %v188, 1.0
    %v193 = vmul.f32 %v189, %v191
    %v194 = vmul.f32 %v190, %v192
    %v195 = vpack.c.bf16 %v193, %v193
    %v196 = vpack.c.bf16 %v194, %v194
    %197 = vst [vmem:[%s3] sm:$0xf] %v195
    %198 = vst [vmem:[%s3 + $0x4] sm:$0xf] %v196
    // Predicated region
    $region18: #{al_projector_forward.8} parent=1 // pred_check
      _
    $region19: #{al_projector_forward.8} parent=1 // pred_check_branch
      %200 = sbr.rel (0) target = $region21
    $region20: #{al_projector_forward.8} parent=1 // pred_region
      _
    $region21: #{al_projector_forward.8} parent=1 // pred_fallthru
      _
    // Predicated region
    $region22: #{al_projector_forward.8} parent=1 // pred_check
      _
    $region23: #{al_projector_forward.8} parent=1 // pred_check_branch
      %202 = sbr.rel (0) target = $region25
    $region24: #{al_projector_forward.8} parent=1 // pred_region
      _
    $region25: #{al_projector_forward.8} parent=1 // pred_fallthru
      _
    %203 = vsyncpa [#allocation3], 1

// kernel: al_projector_forward.9
$region0: #{al_projector_forward.9}
  #allocation0 [shape = 'u32[]', space=smem, size = 0x4, offset = 0x4, fixed_abs, tag = 'smem constant byte address 0x4 - core index']
  #allocation1 [shape = 'u32[72,128]{1,0:T(1,128)}', space=vmem, size = 0x9000, scoped, tag = 'internal scratch']
  %s0 = inlined_call_operand.vmem [shape: bf16[16,128], index: 0, kind: input, shape index: {}]
  %s1 = inlined_call_operand.hbm [shape: bf16[128,128], index: 1, kind: input, shape index: {}]
  %s2 = inlined_call_operand.vmem [shape: f32[1,128], index: 2, kind: input, shape index: {}]
  %s3 = inlined_call_operand.hbm [shape: f32[16,128], index: 3, kind: output, shape index: {}]
  %s4 = sld [smem:[#allocation0]]
  $region26: #{al_projector_forward.9} parent=0
    _
  %s6 = ssub.s32 1, %s4
  %s7 = scalar_select 0, %s6, %s4
  $region1: #{al_projector_forward.9} parent=0
    #allocation2 [shape = 'u8[32768]{0}', space=vmem, size = 0x8000, scoped, tag = 'input window, operand 1, single buffered']
    #allocation3 [shape = 's32[1]{0}', space=sflag, size = 0x4, scoped, tag = 'scoped memory for al_projector_forward.9']
    #allocation4 [shape = 's32[1]{0}', space=sflag, size = 0x4, scoped, tag = 'scoped memory for al_projector_forward.9']
    #allocation5 [shape = 'u8[8192]{0}', space=vmem, size = 0x2000, scoped, tag = 'output window, operand 0, single buffered']
    %8 = vsyncpa [#allocation3], 0
    %9 = vsyncpa [#allocation4], 0
    // Predicated region
    $region2: #{al_projector_forward.9} parent=1 // pred_check
      _
    $region3: #{al_projector_forward.9} parent=1 // pred_check_branch
      %11 = sbr.rel (0) target = $region5
    $region4: #{al_projector_forward.9} parent=1 // pred_region
      _
    $region5: #{al_projector_forward.9} parent=1 // pred_fallthru
      _
    // Predicated region
    $region6: #{al_projector_forward.9} parent=1 // pred_check
      _
    $region7: #{al_projector_forward.9} parent=1 // pred_check_branch
      %13 = sbr.rel (0) target = $region9
    $region8: #{al_projector_forward.9} parent=1 // pred_region
      %15 = vsyncadd [#allocation3], 0
      %s16 = sshll.u32 %s1, 4
      %s17 = int_to_ptr.hbm [resolvable:$true] %s16
      %s18 = sshll.u32 [#allocation2], 4
      %s19 = int_to_ptr.vmem [resolvable:$true] %s18
      %24 = dma.hbm_to_vmem [thread:$0]  %s17, 1024, %s19, [#allocation3], 64, 64, 4
    $region9: #{al_projector_forward.9} parent=1 // pred_fallthru
      _
    // Predicated region
    $region10: #{al_projector_forward.9} parent=1 // pred_check
      _
    $region11: #{al_projector_forward.9} parent=1 // pred_check_branch
      %26 = sbr.rel (0) target = $region13
    $region12: #{al_projector_forward.9} parent=1 // pred_region
      _
    $region13: #{al_projector_forward.9} parent=1 // pred_fallthru
      _
    // Predicated region
    $region14: #{al_projector_forward.9} parent=1 // pred_check
      _
    $region15: #{al_projector_forward.9} parent=1 // pred_check_branch
      %28 = sbr.rel (0) target = $region17
    $region16: #{al_projector_forward.9} parent=1 // pred_region
      %30 = dma.done [#allocation3], 1024
    $region17: #{al_projector_forward.9} parent=1 // pred_fallthru
      _
    %v31 = vld [vmem:[%s0] sm:$0xf]
    %v32 = vld [vmem:[%s0 + $0x4] sm:$0xf]
    %v33 = vld [vmem:[#allocation2] sm:$0xf]
    %v34 = vld [vmem:[#allocation2 + $0x4] sm:$0xf]
    %v35 = vld [vmem:[#allocation2 + $0x8] sm:$0xf]
    %v36 = vld [vmem:[#allocation2 + $0xc] sm:$0xf]
    %v37 = vld [vmem:[#allocation2 + $0x10] sm:$0xf]
    %v38 = vld [vmem:[#allocation2 + $0x14] sm:$0xf]
    %v39 = vld [vmem:[#allocation2 + $0x18] sm:$0xf]
    %v40 = vld [vmem:[#allocation2 + $0x1c] sm:$0xf]
    %v41 = vld [vmem:[#allocation2 + $0x20] sm:$0xf]
    %v42 = vld [vmem:[#allocation2 + $0x24] sm:$0xf]
    %v43 = vld [vmem:[#allocation2 + $0x28] sm:$0xf]
    %v44 = vld [vmem:[#allocation2 + $0x2c] sm:$0xf]
    %v45 = vld [vmem:[#allocation2 + $0x30] sm:$0xf]
    %v46 = vld [vmem:[#allocation2 + $0x34] sm:$0xf]
    %v47 = vld [vmem:[#allocation2 + $0x38] sm:$0xf]
    %v48 = vld [vmem:[#allocation2 + $0x3c] sm:$0xf]
    %v49 = vld [vmem:[%s2] sm:$0x1]
    %v51 = vperm.slane %v49, 0
    %v55 = vunpack.c.l.b16 %v31
    %v56 = vunpack.c.l.b16 %v32
    %v57 = vpack.c.b16 %v56, %v55
    %v75 = vunpack.c.l.b16 %v33
    %v76 = vunpack.c.l.b16 %v34
    %v77 = vunpack.c.l.b16 %v35
    %v78 = vunpack.c.l.b16 %v36
    %v79 = vunpack.c.l.b16 %v37
    %v80 = vunpack.c.l.b16 %v38
    %v81 = vunpack.c.l.b16 %v39
    %v82 = vunpack.c.l.b16 %v40
    %v83 = vunpack.c.l.b16 %v41
    %v84 = vunpack.c.l.b16 %v42
    %v85 = vunpack.c.l.b16 %v43
    %v86 = vunpack.c.l.b16 %v44
    %v87 = vunpack.c.l.b16 %v45
    %v88 = vunpack.c.l.b16 %v46
    %v89 = vunpack.c.l.b16 %v47
    %v90 = vunpack.c.l.b16 %v48
    %v91 = vpack.c.b16 %v76, %v75
    %v92 = vpack.c.b16 %v78, %v77
    %v93 = vpack.c.b16 %v80, %v79
    %v94 = vpack.c.b16 %v82, %v81
    %v95 = vpack.c.b16 %v84, %v83
    %v96 = vpack.c.b16 %v86, %v85
    %v97 = vpack.c.b16 %v88, %v87
    %v98 = vpack.c.b16 %v90, %v89
    %107 = vmatpush.bf16.msra.mxu0 %v98
    %108 = vmatpush.bf16.msra.mxu0 %v97
    %109 = vmatpush.bf16.msra.mxu0 %v96
    %110 = vmatpush.bf16.msra.mxu0 %v95
    %111 = vmatpush.bf16.msra.mxu0 %v94
    %112 = vmatpush.bf16.msra.mxu0 %v93
    %113 = vmatpush.bf16.msra.mxu0 %v92
    %114 = vmatpush.bf16.msra.mxu0 %v91
    %115 = vmatmul.bf16.gmra.mxu0 %v57
    %v116 = vpop.f32.mrf.mxu0
    %v117 = vadd.f32 %v51, %v116
    %v118 = vpop.f32.mrf.mxu0
    %v119 = vadd.f32 %v51, %v118
    %120 = vdwg.mxu0
    %121 = vst [vmem:[#allocation5] sm:$0xff] %v117
    %122 = vst [vmem:[#allocation5 + $0x8] sm:$0xff] %v119
    // Predicated region
    $region18: #{al_projector_forward.9} parent=1 // pred_check
      _
    $region19: #{al_projector_forward.9} parent=1 // pred_check_branch
      %124 = sbr.rel (0) target = $region21
    $region20: #{al_projector_forward.9} parent=1 // pred_region
      %126 = vsyncadd [#allocation4], 0
      %s127 = sshll.u32 [#allocation5], 4
      %s128 = int_to_ptr.vmem [resolvable:$true] %s127
      %s129 = sshll.u32 %s3, 4
      %s130 = int_to_ptr.hbm [resolvable:$true] %s129
      %135 = dma.vmem_to_hbm [thread:$0]  %s128, 256, %s130, [#allocation4], 128, 128, 8
    $region21: #{al_projector_forward.9} parent=1 // pred_fallthru
      _
    // Predicated region
    $region22: #{al_projector_forward.9} parent=1 // pred_check
      _
    $region23: #{al_projector_forward.9} parent=1 // pred_check_branch
      %137 = sbr.rel (0) target = $region25
    $region24: #{al_projector_forward.9} parent=1 // pred_region
      %139 = dma.done [#allocation4], 256
    $region25: #{al_projector_forward.9} parent=1 // pred_fallthru
      _
    %140 = vsyncpa [#allocation3], 1
    %141 = vsyncpa [#allocation4], 1

// kernel: al_projector_forward.7
$region0: #{al_projector_forward.7}
  #allocation0 [shape = 'u32[]', space=smem, size = 0x4, offset = 0x4, fixed_abs, tag = 'smem constant byte address 0x4 - core index']
  #allocation1 [shape = 'u32[72,128]{1,0:T(1,128)}', space=vmem, size = 0x9000, scoped, tag = 'internal scratch']
  #allocation2 [shape = 'f32[8,128]{1,0:T(8,128)}', space=vmem, size = 0x1000, scoped, tag = 'scratch operand']
  %s0 = inlined_call_operand.vmem [shape: f32[2,8,128], index: 0, kind: input, shape index: {}]
  %s1 = inlined_call_operand.vmem [shape: bf16[2,16,128], index: 1, kind: input, shape index: {}]
  %s2 = inlined_call_operand.hbm [shape: bf16[2,128,384], index: 2, kind: input, shape index: {}]
  %s3 = inlined_call_operand.vmem [shape: f32[2,1,384], index: 3, kind: input, shape index: {}]
  %s4 = inlined_call_operand.hbm [shape: bf16[2,128,128], index: 4, kind: input, shape index: {}]
  %s5 = inlined_call_operand.vmem [shape: f32[2,1,128], index: 5, kind: input, shape index: {}]
  %s6 = inlined_call_operand.vmem [shape: f32[2,1,128], index: 6, kind: input, shape index: {}]
  %s7 = inlined_call_operand.vmem [shape: f32[2,1,128], index: 7, kind: input, shape index: {}]
  %s8 = inlined_call_operand.hbm [shape: bf16[2,128,128], index: 8, kind: input, shape index: {}]
  %s9 = inlined_call_operand.vmem [shape: f32[2,1,128], index: 9, kind: input, shape index: {}]
  %s10 = inlined_call_operand.hbm [shape: bf16[2,128,256], index: 10, kind: input, shape index: {}]
  %s11 = inlined_call_operand.vmem [shape: f32[2,1,256], index: 11, kind: input, shape index: {}]
  %s12 = inlined_call_operand.hbm [shape: bf16[2,128,128], index: 12, kind: input, shape index: {}]
  %s13 = inlined_call_operand.vmem [shape: f32[2,1,128], index: 13, kind: input, shape index: {}]
  %s14 = inlined_call_operand.vmem [shape: f32[2,1,128], index: 14, kind: input, shape index: {}]
  %s15 = inlined_call_operand.vmem [shape: f32[2,1,128], index: 15, kind: input, shape index: {}]
  %s16 = inlined_call_operand.hbm [shape: bf16[2,128,256], index: 16, kind: input, shape index: {}]
  %s17 = inlined_call_operand.vmem [shape: f32[2,1,256], index: 17, kind: input, shape index: {}]
  %s18 = inlined_call_operand.hbm [shape: bf16[2,256,128], index: 18, kind: input, shape index: {}]
  %s19 = inlined_call_operand.vmem [shape: f32[2,1,128], index: 19, kind: input, shape index: {}]
  %s20 = inlined_call_operand.vmem [shape: f32[2,1,128], index: 20, kind: input, shape index: {}]
  %s21 = inlined_call_operand.vmem [shape: f32[2,1,128], index: 21, kind: input, shape index: {}]
  %s22 = inlined_call_operand.vmem [shape: f32[2,8,128], index: 22, kind: output, shape index: {}]
  %s23 = sld [smem:[#allocation0]]
  $region153: #{al_projector_forward.7} parent=0
    _
  %s25 = ssub.s32 1, %s23
  %s26 = scalar_select 0, %s25, %s23
  $region1: #{al_projector_forward.7} parent=0
    #allocation3 [shape = 'u8[196608]{0}', space=vmem, size = 0x30000, scoped, tag = 'input window, operand 2']
    #allocation4 [shape = 's32[2]{0}', space=sflag, size = 0x8, scoped, tag = 'scoped memory for al_projector_forward.7']
    #allocation5 [shape = 'u8[65536]{0}', space=vmem, size = 0x10000, scoped, tag = 'input window, operand 4']
    #allocation6 [shape = 's32[2]{0}', space=sflag, size = 0x8, scoped, tag = 'scoped memory for al_projector_forward.7']
    #allocation7 [shape = 'u8[65536]{0}', space=vmem, size = 0x10000, scoped, tag = 'input window, operand 8']
    #allocation8 [shape = 'u8[131072]{0}', space=vmem, size = 0x20000, scoped, tag = 'input window, operand 10']
    #allocation9 [shape = 's32[2]{0}', space=sflag, size = 0x8, scoped, tag = 'scoped memory for al_projector_forward.7']
    #allocation10 [shape = 'u8[65536]{0}', space=vmem, size = 0x10000, scoped, tag = 'input window, operand 12']
    #allocation11 [shape = 'u8[131072]{0}', space=vmem, size = 0x20000, scoped, tag = 'input window, operand 16']
    #allocation12 [shape = 's32[2]{0}', space=sflag, size = 0x8, scoped, tag = 'scoped memory for al_projector_forward.7']
    #allocation13 [shape = 'u8[131072]{0}', space=vmem, size = 0x20000, scoped, tag = 'input window, operand 18']
    %27 = vsyncpa [#allocation4], 0
    %s28 = scalar_lea.sflag [#allocation4], 1
    %29 = vsyncpa %s28, 0
    %30 = vsyncpa [#allocation6], 0
    %s31 = scalar_lea.sflag [#allocation6], 1
    %32 = vsyncpa %s31, 0
    %33 = vsyncpa [#allocation9], 0
    %s34 = scalar_lea.sflag [#allocation9], 1
    %35 = vsyncpa %s34, 0
    %36 = vsyncpa [#allocation12], 0
    %s37 = scalar_lea.sflag [#allocation12], 1
    %38 = vsyncpa %s37, 0
    loop: start=0, step=1, limit=6
    $region2: #{al_projector_forward.7} parent=1 // loop_pre_header
      _
    $region3: #{al_projector_forward.7} parent=1 // loop_header
      %s40 = sphi 0, %s44
      %p41 = scmp.ge.s32.totalorder %s40, 6
      %s47 = sphi 0, %s59
      %s48 = sphi 0, %s55
      %s49 = sphi 0, %s47
      %s50 = sphi 0, %s48
      %s51 = sphi 0, %s49
      %s52 = sphi 0, %s50
      %s62 = sphi 0, %s64
      %s65 = sphi 0, %s62
      %s66 = sphi 0, %s65
      %s82 = sphi 0, %s66
      %s88 = sphi 0, %s90
      %s91 = sphi 0, %s88
      %s92 = sphi 0, %s91
      %s108 = sphi 0, %s92
      %s114 = sphi 0, %s116
      %s117 = sphi 0, %s114
      %s118 = sphi 0, %s117
      %s134 = sphi 0, %s118
      %s140 = sphi 0, %s142
      %s143 = sphi 0, %s140
      %s144 = sphi 0, %s143
      %s160 = sphi 0, %s144
      %s166 = sphi 0, %s168
      %s169 = sphi 0, %s166
      %s170 = sphi 0, %s169
      %s186 = sphi 0, %s170
      %s192 = sphi 0, %s194
      %s195 = sphi 0, %s192
      %s196 = sphi 0, %s195
      %s212 = sphi 0, %s196
      %s218 = sphi 0, %s220
      %s221 = sphi 0, %s218
      %s222 = sphi 0, %s221
      %s238 = sphi 0, %s222
      %s244 = sphi 0, %s246
      %s247 = sphi 0, %s244
      %s248 = sphi 0, %s247
      %s264 = sphi 0, %s248
      %s270 = sphi 0, %s272
      %s273 = sphi 0, %s270
      %s274 = sphi 0, %s273
      %s290 = sphi 0, %s274
      %s296 = sphi 0, %s298
      %s299 = sphi 0, %s296
      %s300 = sphi 0, %s299
      %s316 = sphi 0, %s300
      %s322 = sphi 0, %s324
      %s325 = sphi 0, %s322
      %s326 = sphi 0, %s325
      %s342 = sphi 0, %s326
      %s348 = sphi 0, %s350
      %s351 = sphi 0, %s348
      %s352 = sphi 0, %s351
      %s368 = sphi 0, %s352
      %s374 = sphi 0, %s376
      %s377 = sphi 0, %s374
      %s378 = sphi 0, %s377
      %s394 = sphi 0, %s378
      %s400 = sphi 0, %s402
      %s403 = sphi 0, %s400
      %s404 = sphi 0, %s403
      %s420 = sphi 0, %s404
      %s426 = sphi 0, %s428
      %s429 = sphi 0, %s426
      %s430 = sphi 0, %s429
      %s446 = sphi 0, %s430
      %s452 = sphi 0, %s454
      %s455 = sphi 0, %s452
      %s456 = sphi 0, %s455
      %s472 = sphi 0, %s456
      %s478 = sphi 0, %s480
      %s481 = sphi 0, %s478
      %s482 = sphi 0, %s481
      %s498 = sphi 0, %s482
      %s504 = sphi 0, %s506
      %s507 = sphi 0, %s504
      %s508 = sphi 0, %s507
      %s524 = sphi 0, %s508
      %s530 = sphi 0, %s532
      %s533 = sphi 0, %s530
      %s534 = sphi 0, %s533
      %s550 = sphi 0, %s534
      %s556 = sphi 0, %s558
      %s559 = sphi 0, %s556
      %s560 = sphi 0, %s559
      %s576 = sphi 0, %s560
      %s582 = sphi 0, %s584
      %s585 = sphi 0, %s582
      %s586 = sphi 0, %s585
      %s602 = sphi 0, %s586
      %s608 = sphi 0, %s610
      %s611 = sphi 0, %s608
      %s612 = sphi 0, %s611
      %s628 = sphi 0, %s612
      %s634 = sphi 0, %s636
      %s637 = sphi 0, %s634
      %s638 = sphi 0, %s637
      %s654 = sphi 0, %s638
    $region4: #{al_projector_forward.7} parent=1 // loop_header_branch
      %43 = sbr.rel (%p41) target = $region8
    $region5: #{al_projector_forward.7} parent=1 // loop_body
      %s45 = ssub.s32 %s40, 1
      %s46 = ssub.s32 %s40, 2
      %s53 = sadd.s32 1, %s48
      %p54 = scmp.ge.s32.totalorder %s53, 2
      %s55 = scalar_select %p54, 0, %s53
      %s56 = sadd.s32 1, %s47
      %s57 = scalar_select %p54, %s56, %s47
      %p58 = scmp.ge.s32.totalorder %s57, 2
      %s59 = scalar_select %p58, 0, %s57
      %s60 = ssub.s32 %s47, %s59
      %p61 = scmp.eq.s32.totalorder %s60, 0
      %s63 = sadd.s32 %s62, 1
      %s64 = scalar_select %p61, %s62, %s63
      %p67 = pneg %p61
      %p68 = scmp.eq.s32.totalorder %s40, 3
      %p69 = por %p67, %p68
      %p70 = scmp.ne.s32.totalorder %s62, %s65
      %p71 = scmp.eq.s32.totalorder %s40, 0
      %p72 = por %p70, %p71
      %p73 = scmp.ne.s32.totalorder %s62, %s65
      %p74 = scmp.eq.s32.totalorder %s45, 3
      %p75 = por %p73, %p74
      %p76 = scmp.ne.s32.totalorder %s65, %s66
      %p77 = scmp.eq.s32.totalorder %s45, 0
      %p78 = por %p76, %p77
      %p79 = scmp.ne.s32.totalorder %s65, %s66
      %p80 = scmp.eq.s32.totalorder %s46, 3
      %p81 = por %p79, %p80
      %p83 = scmp.ne.s32.totalorder %s66, %s82
      %p84 = scmp.eq.s32.totalorder %s46, 0
      %p85 = por %p83, %p84
      %s86 = ssub.s32 %s47, %s59
      %p87 = scmp.eq.s32.totalorder %s86, 0
      %s89 = sadd.s32 %s88, 1
      %s90 = scalar_select %p87, %s88, %s89
      %p93 = pneg %p87
      %p94 = scmp.eq.s32.totalorder %s40, 3
      %p95 = por %p93, %p94
      %p96 = scmp.ne.s32.totalorder %s88, %s91
      %p97 = scmp.eq.s32.totalorder %s40, 0
      %p98 = por %p96, %p97
      %p99 = scmp.ne.s32.totalorder %s88, %s91
      %p100 = scmp.eq.s32.totalorder %s45, 3
      %p101 = por %p99, %p100
      %p102 = scmp.ne.s32.totalorder %s91, %s92
      %p103 = scmp.eq.s32.totalorder %s45, 0
      %p104 = por %p102, %p103
      %p105 = scmp.ne.s32.totalorder %s91, %s92
      %p106 = scmp.eq.s32.totalorder %s46, 3
      %p107 = por %p105, %p106
      %p109 = scmp.ne.s32.totalorder %s92, %s108
      %p110 = scmp.eq.s32.totalorder %s46, 0
      %p111 = por %p109, %p110
      %s112 = ssub.s32 %s48, %s55
      %p113 = scmp.eq.s32.totalorder %s112, 0
      %s115 = sadd.s32 %s114, 1
      %s116 = scalar_select %p113, %s114, %s115
      %p119 = pneg %p113
      %p120 = scmp.eq.s32.totalorder %s40, 3
      %p121 = por %p119, %p120
      %p122 = scmp.ne.s32.totalorder %s114, %s117
      %p123 = scmp.eq.s32.totalorder %s40, 0
      %p124 = por %p122, %p123
      %p125 = scmp.ne.s32.totalorder %s114, %s117
      %p126 = scmp.eq.s32.totalorder %s45, 3
      %p127 = por %p125, %p126
      %p128 = scmp.ne.s32.totalorder %s117, %s118
      %p129 = scmp.eq.s32.totalorder %s45, 0
      %p130 = por %p128, %p129
      %p131 = scmp.ne.s32.totalorder %s117, %s118
      %p132 = scmp.eq.s32.totalorder %s46, 3
      %p133 = por %p131, %p132
      %p135 = scmp.ne.s32.totalorder %s118, %s134
      %p136 = scmp.eq.s32.totalorder %s46, 0
      %p137 = por %p135, %p136
      %s138 = ssub.s32 %s48, %s55
      %p139 = scmp.eq.s32.totalorder %s138, 0
      %s141 = sadd.s32 %s140, 1
      %s142 = scalar_select %p139, %s140, %s141
      %p145 = pneg %p139
      %p146 = scmp.eq.s32.totalorder %s40, 3
      %p147 = por %p145, %p146
      %p148 = scmp.ne.s32.totalorder %s140, %s143
      %p149 = scmp.eq.s32.totalorder %s40, 0
      %p150 = por %p148, %p149
      %p151 = scmp.ne.s32.totalorder %s140, %s143
      %p152 = scmp.eq.s32.totalorder %s45, 3
      %p153 = por %p151, %p152
      %p154 = scmp.ne.s32.totalorder %s143, %s144
      %p155 = scmp.eq.s32.totalorder %s45, 0
      %p156 = por %p154, %p155
      %p157 = scmp.ne.s32.totalorder %s143, %s144
      %p158 = scmp.eq.s32.totalorder %s46, 3
      %p159 = por %p157, %p158
      %p161 = scmp.ne.s32.totalorder %s144, %s160
      %p162 = scmp.eq.s32.totalorder %s46, 0
      %p163 = por %p161, %p162
      %s164 = ssub.s32 %s48, %s55
      %p165 = scmp.eq.s32.totalorder %s164, 0
      %s167 = sadd.s32 %s166, 1
      %s168 = scalar_select %p165, %s166, %s167
      %p171 = pneg %p165
      %p172 = scmp.eq.s32.totalorder %s40, 3
      %p173 = por %p171, %p172
      %p174 = scmp.ne.s32.totalorder %s166, %s169
      %p175 = scmp.eq.s32.totalorder %s40, 0
      %p176 = por %p174, %p175
      %p177 = scmp.ne.s32.totalorder %s166, %s169
      %p178 = scmp.eq.s32.totalorder %s45, 3
      %p179 = por %p177, %p178
      %p180 = scmp.ne.s32.totalorder %s169, %s170
      %p181 = scmp.eq.s32.totalorder %s45, 0
      %p182 = por %p180, %p181
      %p183 = scmp.ne.s32.totalorder %s169, %s170
      %p184 = scmp.eq.s32.totalorder %s46, 3
      %p185 = por %p183, %p184
      %p187 = scmp.ne.s32.totalorder %s170, %s186
      %p188 = scmp.eq.s32.totalorder %s46, 0
      %p189 = por %p187, %p188
      %s190 = ssub.s32 %s48, %s55
      %p191 = scmp.eq.s32.totalorder %s190, 0
      %s193 = sadd.s32 %s192, 1
      %s194 = scalar_select %p191, %s192, %s193
      %p197 = pneg %p191
      %p198 = scmp.eq.s32.totalorder %s40, 3
      %p199 = por %p197, %p198
      %p200 = scmp.ne.s32.totalorder %s192, %s195
      %p201 = scmp.eq.s32.totalorder %s40, 0
      %p202 = por %p200, %p201
      %p203 = scmp.ne.s32.totalorder %s192, %s195
      %p204 = scmp.eq.s32.totalorder %s45, 3
      %p205 = por %p203, %p204
      %p206 = scmp.ne.s32.totalorder %s195, %s196
      %p207 = scmp.eq.s32.totalorder %s45, 0
      %p208 = por %p206, %p207
      %p209 = scmp.ne.s32.totalorder %s195, %s196
      %p210 = scmp.eq.s32.totalorder %s46, 3
      %p211 = por %p209, %p210
      %p213 = scmp.ne.s32.totalorder %s196, %s212
      %p214 = scmp.eq.s32.totalorder %s46, 0
      %p215 = por %p213, %p214
      %s216 = ssub.s32 %s48, %s55
      %p217 = scmp.eq.s32.totalorder %s216, 0
      %s219 = sadd.s32 %s218, 1
      %s220 = scalar_select %p217, %s218, %s219
      %p223 = pneg %p217
      %p224 = scmp.eq.s32.totalorder %s40, 3
      %p225 = por %p223, %p224
      %p226 = scmp.ne.s32.totalorder %s218, %s221
      %p227 = scmp.eq.s32.totalorder %s40, 0
      %p228 = por %p226, %p227
      %p229 = scmp.ne.s32.totalorder %s218, %s221
      %p230 = scmp.eq.s32.totalorder %s45, 3
      %p231 = por %p229, %p230
      %p232 = scmp.ne.s32.totalorder %s221, %s222
      %p233 = scmp.eq.s32.totalorder %s45, 0
      %p234 = por %p232, %p233
      %p235 = scmp.ne.s32.totalorder %s221, %s222
      %p236 = scmp.eq.s32.totalorder %s46, 3
      %p237 = por %p235, %p236
      %p239 = scmp.ne.s32.totalorder %s222, %s238
      %p240 = scmp.eq.s32.totalorder %s46, 0
      %p241 = por %p239, %p240
      %s242 = ssub.s32 %s48, %s55
      %p243 = scmp.eq.s32.totalorder %s242, 0
      %s245 = sadd.s32 %s244, 1
      %s246 = scalar_select %p243, %s244, %s245
      %p249 = pneg %p243
      %p250 = scmp.eq.s32.totalorder %s40, 3
      %p251 = por %p249, %p250
      %p252 = scmp.ne.s32.totalorder %s244, %s247
      %p253 = scmp.eq.s32.totalorder %s40, 0
      %p254 = por %p252, %p253
      %p255 = scmp.ne.s32.totalorder %s244, %s247
      %p256 = scmp.eq.s32.totalorder %s45, 3
      %p257 = por %p255, %p256
      %p258 = scmp.ne.s32.totalorder %s247, %s248
      %p259 = scmp.eq.s32.totalorder %s45, 0
      %p260 = por %p258, %p259
      %p261 = scmp.ne.s32.totalorder %s247, %s248
      %p262 = scmp.eq.s32.totalorder %s46, 3
      %p263 = por %p261, %p262
      %p265 = scmp.ne.s32.totalorder %s248, %s264
      %p266 = scmp.eq.s32.totalorder %s46, 0
      %p267 = por %p265, %p266
      %s268 = ssub.s32 %s48, %s55
      %p269 = scmp.eq.s32.totalorder %s268, 0
      %s271 = sadd.s32 %s270, 1
      %s272 = scalar_select %p269, %s270, %s271
      %p275 = pneg %p269
      %p276 = scmp.eq.s32.totalorder %s40, 3
      %p277 = por %p275, %p276
      %p278 = scmp.ne.s32.totalorder %s270, %s273
      %p279 = scmp.eq.s32.totalorder %s40, 0
      %p280 = por %p278, %p279
      %p281 = scmp.ne.s32.totalorder %s270, %s273
      %p282 = scmp.eq.s32.totalorder %s45, 3
      %p283 = por %p281, %p282
      %p284 = scmp.ne.s32.totalorder %s273, %s274
      %p285 = scmp.eq.s32.totalorder %s45, 0
      %p286 = por %p284, %p285
      %p287 = scmp.ne.s32.totalorder %s273, %s274
      %p288 = scmp.eq.s32.totalorder %s46, 3
      %p289 = por %p287, %p288
      %p291 = scmp.ne.s32.totalorder %s274, %s290
      %p292 = scmp.eq.s32.totalorder %s46, 0
      %p293 = por %p291, %p292
      %s294 = ssub.s32 %s48, %s55
      %p295 = scmp.eq.s32.totalorder %s294, 0
      %s297 = sadd.s32 %s296, 1
      %s298 = scalar_select %p295, %s296, %s297
      %p301 = pneg %p295
      %p302 = scmp.eq.s32.totalorder %s40, 3
      %p303 = por %p301, %p302
      %p304 = scmp.ne.s32.totalorder %s296, %s299
      %p305 = scmp.eq.s32.totalorder %s40, 0
      %p306 = por %p304, %p305
      %p307 = scmp.ne.s32.totalorder %s296, %s299
      %p308 = scmp.eq.s32.totalorder %s45, 3
      %p309 = por %p307, %p308
      %p310 = scmp.ne.s32.totalorder %s299, %s300
      %p311 = scmp.eq.s32.totalorder %s45, 0
      %p312 = por %p310, %p311
      %p313 = scmp.ne.s32.totalorder %s299, %s300
      %p314 = scmp.eq.s32.totalorder %s46, 3
      %p315 = por %p313, %p314
      %p317 = scmp.ne.s32.totalorder %s300, %s316
      %p318 = scmp.eq.s32.totalorder %s46, 0
      %p319 = por %p317, %p318
      %s320 = ssub.s32 %s48, %s55
      %p321 = scmp.eq.s32.totalorder %s320, 0
      %s323 = sadd.s32 %s322, 1
      %s324 = scalar_select %p321, %s322, %s323
      %p327 = pneg %p321
      %p328 = scmp.eq.s32.totalorder %s40, 3
      %p329 = por %p327, %p328
      %p330 = scmp.ne.s32.totalorder %s322, %s325
      %p331 = scmp.eq.s32.totalorder %s40, 0
      %p332 = por %p330, %p331
      %p333 = scmp.ne.s32.totalorder %s322, %s325
      %p334 = scmp.eq.s32.totalorder %s45, 3
      %p335 = por %p333, %p334
      %p336 = scmp.ne.s32.totalorder %s325, %s326
      %p337 = scmp.eq.s32.totalorder %s45, 0
      %p338 = por %p336, %p337
      %p339 = scmp.ne.s32.totalorder %s325, %s326
      %p340 = scmp.eq.s32.totalorder %s46, 3
      %p341 = por %p339, %p340
      %p343 = scmp.ne.s32.totalorder %s326, %s342
      %p344 = scmp.eq.s32.totalorder %s46, 0
      %p345 = por %p343, %p344
      %s346 = ssub.s32 %s48, %s55
      %p347 = scmp.eq.s32.totalorder %s346, 0
      %s349 = sadd.s32 %s348, 1
      %s350 = scalar_select %p347, %s348, %s349
      %p353 = pneg %p347
      %p354 = scmp.eq.s32.totalorder %s40, 3
      %p355 = por %p353, %p354
      %p356 = scmp.ne.s32.totalorder %s348, %s351
      %p357 = scmp.eq.s32.totalorder %s40, 0
      %p358 = por %p356, %p357
      %p359 = scmp.ne.s32.totalorder %s348, %s351
      %p360 = scmp.eq.s32.totalorder %s45, 3
      %p361 = por %p359, %p360
      %p362 = scmp.ne.s32.totalorder %s351, %s352
      %p363 = scmp.eq.s32.totalorder %s45, 0
      %p364 = por %p362, %p363
      %p365 = scmp.ne.s32.totalorder %s351, %s352
      %p366 = scmp.eq.s32.totalorder %s46, 3
      %p367 = por %p365, %p366
      %p369 = scmp.ne.s32.totalorder %s352, %s368
      %p370 = scmp.eq.s32.totalorder %s46, 0
      %p371 = por %p369, %p370
      %s372 = ssub.s32 %s48, %s55
      %p373 = scmp.eq.s32.totalorder %s372, 0
      %s375 = sadd.s32 %s374, 1
      %s376 = scalar_select %p373, %s374, %s375
      %p379 = pneg %p373
      %p380 = scmp.eq.s32.totalorder %s40, 3
      %p381 = por %p379, %p380
      %p382 = scmp.ne.s32.totalorder %s374, %s377
      %p383 = scmp.eq.s32.totalorder %s40, 0
      %p384 = por %p382, %p383
      %p385 = scmp.ne.s32.totalorder %s374, %s377
      %p386 = scmp.eq.s32.totalorder %s45, 3
      %p387 = por %p385, %p386
      %p388 = scmp.ne.s32.totalorder %s377, %s378
      %p389 = scmp.eq.s32.totalorder %s45, 0
      %p390 = por %p388, %p389
      %p391 = scmp.ne.s32.totalorder %s377, %s378
      %p392 = scmp.eq.s32.totalorder %s46, 3
      %p393 = por %p391, %p392
      %p395 = scmp.ne.s32.totalorder %s378, %s394
      %p396 = scmp.eq.s32.totalorder %s46, 0
      %p397 = por %p395, %p396
      %s398 = ssub.s32 %s48, %s55
      %p399 = scmp.eq.s32.totalorder %s398, 0
      %s401 = sadd.s32 %s400, 1
      %s402 = scalar_select %p399, %s400, %s401
      %p405 = pneg %p399
      %p406 = scmp.eq.s32.totalorder %s40, 3
      %p407 = por %p405, %p406
      %p408 = scmp.ne.s32.totalorder %s400, %s403
      %p409 = scmp.eq.s32.totalorder %s40, 0
      %p410 = por %p408, %p409
      %p411 = scmp.ne.s32.totalorder %s400, %s403
      %p412 = scmp.eq.s32.totalorder %s45, 3
      %p413 = por %p411, %p412
      %p414 = scmp.ne.s32.totalorder %s403, %s404
      %p415 = scmp.eq.s32.totalorder %s45, 0
      %p416 = por %p414, %p415
      %p417 = scmp.ne.s32.totalorder %s403, %s404
      %p418 = scmp.eq.s32.totalorder %s46, 3
      %p419 = por %p417, %p418
      %p421 = scmp.ne.s32.totalorder %s404, %s420
      %p422 = scmp.eq.s32.totalorder %s46, 0
      %p423 = por %p421, %p422
      %s424 = ssub.s32 %s48, %s55
      %p425 = scmp.eq.s32.totalorder %s424, 0
      %s427 = sadd.s32 %s426, 1
      %s428 = scalar_select %p425, %s426, %s427
      %p431 = pneg %p425
      %p432 = scmp.eq.s32.totalorder %s40, 3
      %p433 = por %p431, %p432
      %p434 = scmp.ne.s32.totalorder %s426, %s429
      %p435 = scmp.eq.s32.totalorder %s40, 0
      %p436 = por %p434, %p435
      %p437 = scmp.ne.s32.totalorder %s426, %s429
      %p438 = scmp.eq.s32.totalorder %s45, 3
      %p439 = por %p437, %p438
      %p440 = scmp.ne.s32.totalorder %s429, %s430
      %p441 = scmp.eq.s32.totalorder %s45, 0
      %p442 = por %p440, %p441
      %p443 = scmp.ne.s32.totalorder %s429, %s430
      %p444 = scmp.eq.s32.totalorder %s46, 3
      %p445 = por %p443, %p444
      %p447 = scmp.ne.s32.totalorder %s430, %s446
      %p448 = scmp.eq.s32.totalorder %s46, 0
      %p449 = por %p447, %p448
      %s450 = ssub.s32 %s48, %s55
      %p451 = scmp.eq.s32.totalorder %s450, 0
      %s453 = sadd.s32 %s452, 1
      %s454 = scalar_select %p451, %s452, %s453
      %p457 = pneg %p451
      %p458 = scmp.eq.s32.totalorder %s40, 3
      %p459 = por %p457, %p458
      %p460 = scmp.ne.s32.totalorder %s452, %s455
      %p461 = scmp.eq.s32.totalorder %s40, 0
      %p462 = por %p460, %p461
      %p463 = scmp.ne.s32.totalorder %s452, %s455
      %p464 = scmp.eq.s32.totalorder %s45, 3
      %p465 = por %p463, %p464
      %p466 = scmp.ne.s32.totalorder %s455, %s456
      %p467 = scmp.eq.s32.totalorder %s45, 0
      %p468 = por %p466, %p467
      %p469 = scmp.ne.s32.totalorder %s455, %s456
      %p470 = scmp.eq.s32.totalorder %s46, 3
      %p471 = por %p469, %p470
      %p473 = scmp.ne.s32.totalorder %s456, %s472
      %p474 = scmp.eq.s32.totalorder %s46, 0
      %p475 = por %p473, %p474
      %s476 = ssub.s32 %s48, %s55
      %p477 = scmp.eq.s32.totalorder %s476, 0
      %s479 = sadd.s32 %s478, 1
      %s480 = scalar_select %p477, %s478, %s479
      %p483 = pneg %p477
      %p484 = scmp.eq.s32.totalorder %s40, 3
      %p485 = por %p483, %p484
      %p486 = scmp.ne.s32.totalorder %s478, %s481
      %p487 = scmp.eq.s32.totalorder %s40, 0
      %p488 = por %p486, %p487
      %p489 = scmp.ne.s32.totalorder %s478, %s481
      %p490 = scmp.eq.s32.totalorder %s45, 3
      %p491 = por %p489, %p490
      %p492 = scmp.ne.s32.totalorder %s481, %s482
      %p493 = scmp.eq.s32.totalorder %s45, 0
      %p494 = por %p492, %p493
      %p495 = scmp.ne.s32.totalorder %s481, %s482
      %p496 = scmp.eq.s32.totalorder %s46, 3
      %p497 = por %p495, %p496
      %p499 = scmp.ne.s32.totalorder %s482, %s498
      %p500 = scmp.eq.s32.totalorder %s46, 0
      %p501 = por %p499, %p500
      %s502 = ssub.s32 %s48, %s55
      %p503 = scmp.eq.s32.totalorder %s502, 0
      %s505 = sadd.s32 %s504, 1
      %s506 = scalar_select %p503, %s504, %s505
      %p509 = pneg %p503
      %p510 = scmp.eq.s32.totalorder %s40, 3
      %p511 = por %p509, %p510
      %p512 = scmp.ne.s32.totalorder %s504, %s507
      %p513 = scmp.eq.s32.totalorder %s40, 0
      %p514 = por %p512, %p513
      %p515 = scmp.ne.s32.totalorder %s504, %s507
      %p516 = scmp.eq.s32.totalorder %s45, 3
      %p517 = por %p515, %p516
      %p518 = scmp.ne.s32.totalorder %s507, %s508
      %p519 = scmp.eq.s32.totalorder %s45, 0
      %p520 = por %p518, %p519
      %p521 = scmp.ne.s32.totalorder %s507, %s508
      %p522 = scmp.eq.s32.totalorder %s46, 3
      %p523 = por %p521, %p522
      %p525 = scmp.ne.s32.totalorder %s508, %s524
      %p526 = scmp.eq.s32.totalorder %s46, 0
      %p527 = por %p525, %p526
      %s528 = ssub.s32 %s48, %s55
      %p529 = scmp.eq.s32.totalorder %s528, 0
      %s531 = sadd.s32 %s530, 1
      %s532 = scalar_select %p529, %s530, %s531
      %p535 = pneg %p529
      %p536 = scmp.eq.s32.totalorder %s40, 3
      %p537 = por %p535, %p536
      %p538 = scmp.ne.s32.totalorder %s530, %s533
      %p539 = scmp.eq.s32.totalorder %s40, 0
      %p540 = por %p538, %p539
      %p541 = scmp.ne.s32.totalorder %s530, %s533
      %p542 = scmp.eq.s32.totalorder %s45, 3
      %p543 = por %p541, %p542
      %p544 = scmp.ne.s32.totalorder %s533, %s534
      %p545 = scmp.eq.s32.totalorder %s45, 0
      %p546 = por %p544, %p545
      %p547 = scmp.ne.s32.totalorder %s533, %s534
      %p548 = scmp.eq.s32.totalorder %s46, 3
      %p549 = por %p547, %p548
      %p551 = scmp.ne.s32.totalorder %s534, %s550
      %p552 = scmp.eq.s32.totalorder %s46, 0
      %p553 = por %p551, %p552
      %s554 = ssub.s32 %s48, %s55
      %p555 = scmp.eq.s32.totalorder %s554, 0
      %s557 = sadd.s32 %s556, 1
      %s558 = scalar_select %p555, %s556, %s557
      %p561 = pneg %p555
      %p562 = scmp.eq.s32.totalorder %s40, 3
      %p563 = por %p561, %p562
      %p564 = scmp.ne.s32.totalorder %s556, %s559
      %p565 = scmp.eq.s32.totalorder %s40, 0
      %p566 = por %p564, %p565
      %p567 = scmp.ne.s32.totalorder %s556, %s559
      %p568 = scmp.eq.s32.totalorder %s45, 3
      %p569 = por %p567, %p568
      %p570 = scmp.ne.s32.totalorder %s559, %s560
      %p571 = scmp.eq.s32.totalorder %s45, 0
      %p572 = por %p570, %p571
      %p573 = scmp.ne.s32.totalorder %s559, %s560
      %p574 = scmp.eq.s32.totalorder %s46, 3
      %p575 = por %p573, %p574
      %p577 = scmp.ne.s32.totalorder %s560, %s576
      %p578 = scmp.eq.s32.totalorder %s46, 0
      %p579 = por %p577, %p578
      %s580 = ssub.s32 %s48, %s55
      %p581 = scmp.eq.s32.totalorder %s580, 0
      %s583 = sadd.s32 %s582, 1
      %s584 = scalar_select %p581, %s582, %s583
      %p587 = pneg %p581
      %p588 = scmp.eq.s32.totalorder %s40, 3
      %p589 = por %p587, %p588
      %p590 = scmp.ne.s32.totalorder %s582, %s585
      %p591 = scmp.eq.s32.totalorder %s40, 0
      %p592 = por %p590, %p591
      %p593 = scmp.ne.s32.totalorder %s582, %s585
      %p594 = scmp.eq.s32.totalorder %s45, 3
      %p595 = por %p593, %p594
      %p596 = scmp.ne.s32.totalorder %s585, %s586
      %p597 = scmp.eq.s32.totalorder %s45, 0
      %p598 = por %p596, %p597
      %p599 = scmp.ne.s32.totalorder %s585, %s586
      %p600 = scmp.eq.s32.totalorder %s46, 3
      %p601 = por %p599, %p600
      %p603 = scmp.ne.s32.totalorder %s586, %s602
      %p604 = scmp.eq.s32.totalorder %s46, 0
      %p605 = por %p603, %p604
      %s606 = ssub.s32 %s48, %s55
      %p607 = scmp.eq.s32.totalorder %s606, 0
      %s609 = sadd.s32 %s608, 1
      %s610 = scalar_select %p607, %s608, %s609
      %p613 = pneg %p607
      %p614 = scmp.eq.s32.totalorder %s40, 3
      %p615 = por %p613, %p614
      %p616 = scmp.ne.s32.totalorder %s608, %s611
      %p617 = scmp.eq.s32.totalorder %s40, 0
      %p618 = por %p616, %p617
      %p619 = scmp.ne.s32.totalorder %s608, %s611
      %p620 = scmp.eq.s32.totalorder %s45, 3
      %p621 = por %p619, %p620
      %p622 = scmp.ne.s32.totalorder %s611, %s612
      %p623 = scmp.eq.s32.totalorder %s45, 0
      %p624 = por %p622, %p623
      %p625 = scmp.ne.s32.totalorder %s611, %s612
      %p626 = scmp.eq.s32.totalorder %s46, 3
      %p627 = por %p625, %p626
      %p629 = scmp.ne.s32.totalorder %s612, %s628
      %p630 = scmp.eq.s32.totalorder %s46, 0
      %p631 = por %p629, %p630
      %s632 = ssub.s32 %s47, %s59
      %p633 = scmp.eq.s32.totalorder %s632, 0
      %s635 = sadd.s32 %s634, 1
      %s636 = scalar_select %p633, %s634, %s635
      %p639 = pneg %p633
      %p640 = scmp.eq.s32.totalorder %s40, 3
      %p641 = por %p639, %p640
      %p642 = scmp.ne.s32.totalorder %s634, %s637
      %p643 = scmp.eq.s32.totalorder %s40, 0
      %p644 = por %p642, %p643
      %p645 = scmp.ne.s32.totalorder %s634, %s637
      %p646 = scmp.eq.s32.totalorder %s45, 3
      %p647 = por %p645, %p646
      %p648 = scmp.ne.s32.totalorder %s637, %s638
      %p649 = scmp.eq.s32.totalorder %s45, 0
      %p650 = por %p648, %p649
      %p651 = scmp.ne.s32.totalorder %s637, %s638
      %p652 = scmp.eq.s32.totalorder %s46, 3
      %p653 = por %p651, %p652
      %p655 = scmp.ne.s32.totalorder %s638, %s654
      %p656 = scmp.eq.s32.totalorder %s46, 0
      %p657 = por %p655, %p656
      %p658 = scmp.le.s32.totalorder 1, %s40
      %p659 = scmp.lt.s32.totalorder %s40, 5
      %p660 = pnand %p658, %p659
      %p661 = pneg %p660
      // Predicated region
      $region9: #{al_projector_forward.7} parent=5 // pred_check
        _
      $region10: #{al_projector_forward.7} parent=5 // pred_check_branch
        %663 = sbr.rel (%p660) target = $region12
      $region11: #{al_projector_forward.7} parent=5 // pred_region
        %s664 = ssub.s32 %s40, 1
      $region12: #{al_projector_forward.7} parent=5 // pred_fallthru
        _
      %p665 = scmp.lt.s32.totalorder %s40, 4
      // Predicated region
      $region13: #{al_projector_forward.7} parent=5 // pred_check
        %p666 = pneg %p665
      $region14: #{al_projector_forward.7} parent=5 // pred_check_branch
        %668 = sbr.rel (%p666) target = $region16
      $region15: #{al_projector_forward.7} parent=5 // pred_region
        // Predicated region
        $region17: #{al_projector_forward.7} parent=15 // pred_check
          %p669 = pneg %p72
        $region18: #{al_projector_forward.7} parent=15 // pred_check_branch
          %671 = sbr.rel (%p669) target = $region20
        $region19: #{al_projector_forward.7} parent=15 // pred_region
          %p672 = scmp.lt.s32.totalorder %s47, 1
          %s673 = scalar_select %p672, %s47, 1
          %s674 = smul.addr %s673, 8
          %s675 = scalar_lea.vmem %s0, %s674
        $region20: #{al_projector_forward.7} parent=15 // pred_fallthru
          _
        // Predicated region
        $region21: #{al_projector_forward.7} parent=15 // pred_check
          %p676 = pneg %p98
        $region22: #{al_projector_forward.7} parent=15 // pred_check_branch
          %678 = sbr.rel (%p676) target = $region24
        $region23: #{al_projector_forward.7} parent=15 // pred_region
          %p679 = scmp.lt.s32.totalorder %s47, 1
          %s680 = scalar_select %p679, %s47, 1
          %s681 = smul.addr %s680, 2
          %s682 = smul.addr %s681, 4
          %s683 = scalar_lea.vmem %s1, %s682
        $region24: #{al_projector_forward.7} parent=15 // pred_fallthru
          _
        // Predicated region
        $region25: #{al_projector_forward.7} parent=15 // pred_check
          %p684 = pneg %p124
        $region26: #{al_projector_forward.7} parent=15 // pred_check_branch
          %686 = sbr.rel (%p684) target = $region28
        $region27: #{al_projector_forward.7} parent=15 // pred_region
          %s687 = sand.u32 %s114, 1
          %s688 = scalar_lea.sflag [#allocation4], %s687
          %s689 = sand.u32 %s114, 1
          %s690 = smul.addr %s689, 192
          %s691 = scalar_lea.vmem [#allocation3], %s690
          %693 = vsyncadd %s688, 0
          %s694 = smul.addr %s48, 48
          %s695 = smul.addr %s694, 4
          %s696 = scalar_lea.hbm %s2, %s695
          %s697 = sshll.u32 %s696, 4
          %s698 = int_to_ptr.hbm [resolvable:$true] %s697
          %s699 = sshll.u32 %s691, 4
          %s700 = int_to_ptr.vmem [resolvable:$true] %s699
          %705 = dma.hbm_to_vmem [thread:$0]  %s698, 3072, %s700, %s688, 192, 192, 12
        $region28: #{al_projector_forward.7} parent=15 // pred_fallthru
          _
        // Predicated region
        $region29: #{al_projector_forward.7} parent=15 // pred_check
          %p706 = pneg %p150
        $region30: #{al_projector_forward.7} parent=15 // pred_check_branch
          %708 = sbr.rel (%p706) target = $region32
        $region31: #{al_projector_forward.7} parent=15 // pred_region
          %p709 = scmp.lt.s32.totalorder %s48, 1
          %s710 = scalar_select %p709, %s48, 1
          %s711 = smul.addr %s710, 3
          %s712 = scalar_lea.vmem %s3, %s711
        $region32: #{al_projector_forward.7} parent=15 // pred_fallthru
          _
        // Predicated region
        $region33: #{al_projector_forward.7} parent=15 // pred_check
          %p713 = pneg %p176
        $region34: #{al_projector_forward.7} parent=15 // pred_check_branch
          %715 = sbr.rel (%p713) target = $region36
        $region35: #{al_projector_forward.7} parent=15 // pred_region
          %s716 = sand.u32 %s40, 1
          %s717 = scalar_lea.sflag [#allocation6], %s716
          %s718 = sand.u32 %s166, 1
          %s719 = smul.addr %s718, 64
          %s720 = scalar_lea.vmem [#allocation5], %s719
          %722 = vsyncadd %s717, 0
          %s723 = smul.addr %s48, 16
          %s724 = smul.addr %s723, 4
          %s725 = scalar_lea.hbm %s4, %s724
          %s726 = sshll.u32 %s725, 4
          %s727 = int_to_ptr.hbm [resolvable:$true] %s726
          %s728 = sshll.u32 %s720, 4
          %s729 = int_to_ptr.vmem [resolvable:$true] %s728
          %734 = dma.hbm_to_vmem [thread:$0]  %s727, 1024, %s729, %s717, 64, 64, 4
        $region36: #{al_projector_forward.7} parent=15 // pred_fallthru
          _
        // Predicated region
        $region37: #{al_projector_forward.7} parent=15 // pred_check
          %p735 = pneg %p202
        $region38: #{al_projector_forward.7} parent=15 // pred_check_branch
          %737 = sbr.rel (%p735) target = $region40
        $region39: #{al_projector_forward.7} parent=15 // pred_region
          %p738 = scmp.lt.s32.totalorder %s48, 1
          %s739 = scalar_select %p738, %s48, 1
          %s740 = scalar_lea.vmem %s5, %s739
        $region40: #{al_projector_forward.7} parent=15 // pred_fallthru
          _
        // Predicated region
        $region41: #{al_projector_forward.7} parent=15 // pred_check
          %p741 = pneg %p228
        $region42: #{al_projector_forward.7} parent=15 // pred_check_branch
          %743 = sbr.rel (%p741) target = $region44
        $region43: #{al_projector_forward.7} parent=15 // pred_region
          %p744 = scmp.lt.s32.totalorder %s48, 1
          %s745 = scalar_select %p744, %s48, 1
          %s746 = scalar_lea.vmem %s6, %s745
        $region44: #{al_projector_forward.7} parent=15 // pred_fallthru
          _
        // Predicated region
        $region45: #{al_projector_forward.7} parent=15 // pred_check
          %p747 = pneg %p254
        $region46: #{al_projector_forward.7} parent=15 // pred_check_branch
          %749 = sbr.rel (%p747) target = $region48
        $region47: #{al_projector_forward.7} parent=15 // pred_region
          %p750 = scmp.lt.s32.totalorder %s48, 1
          %s751 = scalar_select %p750, %s48, 1
          %s752 = scalar_lea.vmem %s7, %s751
        $region48: #{al_projector_forward.7} parent=15 // pred_fallthru
          _
        // Predicated region
        $region49: #{al_projector_forward.7} parent=15 // pred_check
          %p753 = pneg %p280
        $region50: #{al_projector_forward.7} parent=15 // pred_check_branch
          %755 = sbr.rel (%p753) target = $region52
        $region51: #{al_projector_forward.7} parent=15 // pred_region
          %s756 = sand.u32 %s40, 1
          %s757 = scalar_lea.sflag [#allocation6], %s756
          %s758 = sand.u32 %s270, 1
          %s759 = smul.addr %s758, 64
          %s760 = scalar_lea.vmem [#allocation7], %s759
          %762 = vsyncadd %s757, 0
          %s763 = smul.addr %s48, 16
          %s764 = smul.addr %s763, 4
          %s765 = scalar_lea.hbm %s8, %s764
          %s766 = sshll.u32 %s765, 4
          %s767 = int_to_ptr.hbm [resolvable:$true] %s766
          %s768 = sshll.u32 %s760, 4
          %s769 = int_to_ptr.vmem [resolvable:$true] %s768
          %774 = dma.hbm_to_vmem [thread:$0]  %s767, 1024, %s769, %s757, 64, 64, 4
        $region52: #{al_projector_forward.7} parent=15 // pred_fallthru
          _
        // Predicated region
        $region53: #{al_projector_forward.7} parent=15 // pred_check
          %p775 = pneg %p306
        $region54: #{al_projector_forward.7} parent=15 // pred_check_branch
          %777 = sbr.rel (%p775) target = $region56
        $region55: #{al_projector_forward.7} parent=15 // pred_region
          %p778 = scmp.lt.s32.totalorder %s48, 1
          %s779 = scalar_select %p778, %s48, 1
          %s780 = scalar_lea.vmem %s9, %s779
        $region56: #{al_projector_forward.7} parent=15 // pred_fallthru
          _
        // Predicated region
        $region57: #{al_projector_forward.7} parent=15 // pred_check
          %p781 = pneg %p332
        $region58: #{al_projector_forward.7} parent=15 // pred_check_branch
          %783 = sbr.rel (%p781) target = $region60
        $region59: #{al_projector_forward.7} parent=15 // pred_region
          %s784 = sand.u32 %s40, 1
          %s785 = scalar_lea.sflag [#allocation9], %s784
          %s786 = sand.u32 %s322, 1
          %s787 = smul.addr %s786, 128
          %s788 = scalar_lea.vmem [#allocation8], %s787
          %790 = vsyncadd %s785, 0
          %s791 = smul.addr %s48, 32
          %s792 = smul.addr %s791, 4
          %s793 = scalar_lea.hbm %s10, %s792
          %s794 = sshll.u32 %s793, 4
          %s795 = int_to_ptr.hbm [resolvable:$true] %s794
          %s796 = sshll.u32 %s788, 4
          %s797 = int_to_ptr.vmem [resolvable:$true] %s796
          %802 = dma.hbm_to_vmem [thread:$0]  %s795, 2048, %s797, %s785, 128, 128, 8
        $region60: #{al_projector_forward.7} parent=15 // pred_fallthru
          _
        // Predicated region
        $region61: #{al_projector_forward.7} parent=15 // pred_check
          %p803 = pneg %p358
        $region62: #{al_projector_forward.7} parent=15 // pred_check_branch
          %805 = sbr.rel (%p803) target = $region64
        $region63: #{al_projector_forward.7} parent=15 // pred_region
          %p806 = scmp.lt.s32.totalorder %s48, 1
          %s807 = scalar_select %p806, %s48, 1
          %s808 = smul.addr %s807, 2
          %s809 = scalar_lea.vmem %s11, %s808
        $region64: #{al_projector_forward.7} parent=15 // pred_fallthru
          _
        // Predicated region
        $region65: #{al_projector_forward.7} parent=15 // pred_check
          %p810 = pneg %p384
        $region66: #{al_projector_forward.7} parent=15 // pred_check_branch
          %812 = sbr.rel (%p810) target = $region68
        $region67: #{al_projector_forward.7} parent=15 // pred_region
          %s813 = sand.u32 %s40, 1
          %s814 = scalar_lea.sflag [#allocation9], %s813
          %s815 = sand.u32 %s374, 1
          %s816 = smul.addr %s815, 64
          %s817 = scalar_lea.vmem [#allocation10], %s816
          %819 = vsyncadd %s814, 0
          %s820 = smul.addr %s48, 16
          %s821 = smul.addr %s820, 4
          %s822 = scalar_lea.hbm %s12, %s821
          %s823 = sshll.u32 %s822, 4
          %s824 = int_to_ptr.hbm [resolvable:$true] %s823
          %s825 = sshll.u32 %s817, 4
          %s826 = int_to_ptr.vmem [resolvable:$true] %s825
          %831 = dma.hbm_to_vmem [thread:$0]  %s824, 1024, %s826, %s814, 64, 64, 4
        $region68: #{al_projector_forward.7} parent=15 // pred_fallthru
          _
        // Predicated region
        $region69: #{al_projector_forward.7} parent=15 // pred_check
          %p832 = pneg %p410
        $region70: #{al_projector_forward.7} parent=15 // pred_check_branch
          %834 = sbr.rel (%p832) target = $region72
        $region71: #{al_projector_forward.7} parent=15 // pred_region
          %p835 = scmp.lt.s32.totalorder %s48, 1
          %s836 = scalar_select %p835, %s48, 1
          %s837 = scalar_lea.vmem %s13, %s836
        $region72: #{al_projector_forward.7} parent=15 // pred_fallthru
          _
        // Predicated region
        $region73: #{al_projector_forward.7} parent=15 // pred_check
          %p838 = pneg %p436
        $region74: #{al_projector_forward.7} parent=15 // pred_check_branch
          %840 = sbr.rel (%p838) target = $region76
        $region75: #{al_projector_forward.7} parent=15 // pred_region
          %p841 = scmp.lt.s32.totalorder %s48, 1
          %s842 = scalar_select %p841, %s48, 1
          %s843 = scalar_lea.vmem %s14, %s842
        $region76: #{al_projector_forward.7} parent=15 // pred_fallthru
          _
        // Predicated region
        $region77: #{al_projector_forward.7} parent=15 // pred_check
          %p844 = pneg %p462
        $region78: #{al_projector_forward.7} parent=15 // pred_check_branch
          %846 = sbr.rel (%p844) target = $region80
        $region79: #{al_projector_forward.7} parent=15 // pred_region
          %p847 = scmp.lt.s32.totalorder %s48, 1
          %s848 = scalar_select %p847, %s48, 1
          %s849 = scalar_lea.vmem %s15, %s848
        $region80: #{al_projector_forward.7} parent=15 // pred_fallthru
          _
        // Predicated region
        $region81: #{al_projector_forward.7} parent=15 // pred_check
          %p850 = pneg %p488
        $region82: #{al_projector_forward.7} parent=15 // pred_check_branch
          %852 = sbr.rel (%p850) target = $region84
        $region83: #{al_projector_forward.7} parent=15 // pred_region
          %s853 = sand.u32 %s40, 1
          %s854 = scalar_lea.sflag [#allocation12], %s853
          %s855 = sand.u32 %s478, 1
          %s856 = smul.addr %s855, 128
          %s857 = scalar_lea.vmem [#allocation11], %s856
          %859 = vsyncadd %s854, 0
          %s860 = smul.addr %s48, 32
          %s861 = smul.addr %s860, 4
          %s862 = scalar_lea.hbm %s16, %s861
          %s863 = sshll.u32 %s862, 4
          %s864 = int_to_ptr.hbm [resolvable:$true] %s863
          %s865 = sshll.u32 %s857, 4
          %s866 = int_to_ptr.vmem [resolvable:$true] %s865
          %871 = dma.hbm_to_vmem [thread:$0]  %s864, 2048, %s866, %s854, 128, 128, 8
        $region84: #{al_projector_forward.7} parent=15 // pred_fallthru
          _
        // Predicated region
        $region85: #{al_projector_forward.7} parent=15 // pred_check
          %p872 = pneg %p514
        $region86: #{al_projector_forward.7} parent=15 // pred_check_branch
          %874 = sbr.rel (%p872) target = $region88
        $region87: #{al_projector_forward.7} parent=15 // pred_region
          %p875 = scmp.lt.s32.totalorder %s48, 1
          %s876 = scalar_select %p875, %s48, 1
          %s877 = smul.addr %s876, 2
          %s878 = scalar_lea.vmem %s17, %s877
        $region88: #{al_projector_forward.7} parent=15 // pred_fallthru
          _
        // Predicated region
        $region89: #{al_projector_forward.7} parent=15 // pred_check
          %p879 = pneg %p540
        $region90: #{al_projector_forward.7} parent=15 // pred_check_branch
          %881 = sbr.rel (%p879) target = $region92
        $region91: #{al_projector_forward.7} parent=15 // pred_region
          %s882 = sand.u32 %s40, 1
          %s883 = scalar_lea.sflag [#allocation12], %s882
          %s884 = sand.u32 %s530, 1
          %s885 = smul.addr %s884, 128
          %s886 = scalar_lea.vmem [#allocation13], %s885
          %888 = vsyncadd %s883, 0
          %s889 = smul.addr %s48, 32
          %s890 = smul.addr %s889, 4
          %s891 = scalar_lea.hbm %s18, %s890
          %s892 = sshll.u32 %s891, 4
          %s893 = int_to_ptr.hbm [resolvable:$true] %s892
          %s894 = sshll.u32 %s886, 4
          %s895 = int_to_ptr.vmem [resolvable:$true] %s894
          %900 = dma.hbm_to_vmem [thread:$0]  %s893, 2048, %s895, %s883, 64, 64, 4
        $region92: #{al_projector_forward.7} parent=15 // pred_fallthru
          _
        // Predicated region
        $region93: #{al_projector_forward.7} parent=15 // pred_check
          %p901 = pneg %p566
        $region94: #{al_projector_forward.7} parent=15 // pred_check_branch
          %903 = sbr.rel (%p901) target = $region96
        $region95: #{al_projector_forward.7} parent=15 // pred_region
          %p904 = scmp.lt.s32.totalorder %s48, 1
          %s905 = scalar_select %p904, %s48, 1
          %s906 = scalar_lea.vmem %s19, %s905
        $region96: #{al_projector_forward.7} parent=15 // pred_fallthru
          _
        // Predicated region
        $region97: #{al_projector_forward.7} parent=15 // pred_check
          %p907 = pneg %p592
        $region98: #{al_projector_forward.7} parent=15 // pred_check_branch
          %909 = sbr.rel (%p907) target = $region100
        $region99: #{al_projector_forward.7} parent=15 // pred_region
          %p910 = scmp.lt.s32.totalorder %s48, 1
          %s911 = scalar_select %p910, %s48, 1
          %s912 = scalar_lea.vmem %s20, %s911
        $region100: #{al_projector_forward.7} parent=15 // pred_fallthru
          _
        // Predicated region
        $region101: #{al_projector_forward.7} parent=15 // pred_check
          %p913 = pneg %p618
        $region102: #{al_projector_forward.7} parent=15 // pred_check_branch
          %915 = sbr.rel (%p913) target = $region104
        $region103: #{al_projector_forward.7} parent=15 // pred_region
          %p916 = scmp.lt.s32.totalorder %s48, 1
          %s917 = scalar_select %p916, %s48, 1
          %s918 = scalar_lea.vmem %s21, %s917
        $region104: #{al_projector_forward.7} parent=15 // pred_fallthru
          _
      $region16: #{al_projector_forward.7} parent=5 // pred_fallthru
        _
      %p919 = scmp.le.s32.totalorder 1, %s40
      %p920 = scmp.lt.s32.totalorder %s40, 5
      %p921 = pnand %p919, %p920
      %p922 = pneg %p921
      // Predicated region
      $region105: #{al_projector_forward.7} parent=5 // pred_check
        _
      $region106: #{al_projector_forward.7} parent=5 // pred_check_branch
        %924 = sbr.rel (%p921) target = $region108
      $region107: #{al_projector_forward.7} parent=5 // pred_region
        %s925 = ssub.s32 %s40, 1
        %s926 = sand.u32 %s117, 1
        %s927 = scalar_lea.sflag [#allocation4], %s926
        %s928 = sand.u32 %s117, 1
        %s929 = smul.addr %s928, 192
        %s930 = scalar_lea.vmem [#allocation3], %s929
        // Predicated region
        $region109: #{al_projector_forward.7} parent=107 // pred_check
          %p931 = pneg %p130
        $region110: #{al_projector_forward.7} parent=107 // pred_check_branch
          %933 = sbr.rel (%p931) target = $region112
        $region111: #{al_projector_forward.7} parent=107 // pred_region
          %935 = dma.done %s927, 3072
        $region112: #{al_projector_forward.7} parent=107 // pred_fallthru
          _
        %s936 = sand.u32 %s45, 1
        %s937 = scalar_lea.sflag [#allocation6], %s936
        %s938 = sand.u32 %s169, 1
        %s939 = smul.addr %s938, 64
        %s940 = scalar_lea.vmem [#allocation5], %s939
        // Predicated region
        $region113: #{al_projector_forward.7} parent=107 // pred_check
          %p941 = pneg %p182
        $region114: #{al_projector_forward.7} parent=107 // pred_check_branch
          %943 = sbr.rel (%p941) target = $region116
        $region115: #{al_projector_forward.7} parent=107 // pred_region
          %945 = dma.done %s937, 1024
        $region116: #{al_projector_forward.7} parent=107 // pred_fallthru
          _
        %s946 = sand.u32 %s45, 1
        %s947 = scalar_lea.sflag [#allocation6], %s946
        %s948 = sand.u32 %s273, 1
        %s949 = smul.addr %s948, 64
        %s950 = scalar_lea.vmem [#allocation7], %s949
        // Predicated region
        $region117: #{al_projector_forward.7} parent=107 // pred_check
          %p951 = pneg %p286
        $region118: #{al_projector_forward.7} parent=107 // pred_check_branch
          %953 = sbr.rel (%p951) target = $region120
        $region119: #{al_projector_forward.7} parent=107 // pred_region
          %955 = dma.done %s947, 1024
        $region120: #{al_projector_forward.7} parent=107 // pred_fallthru
          _
        %s956 = sand.u32 %s45, 1
        %s957 = scalar_lea.sflag [#allocation9], %s956
        %s958 = sand.u32 %s325, 1
        %s959 = smul.addr %s958, 128
        %s960 = scalar_lea.vmem [#allocation8], %s959
        // Predicated region
        $region121: #{al_projector_forward.7} parent=107 // pred_check
          %p961 = pneg %p338
        $region122: #{al_projector_forward.7} parent=107 // pred_check_branch
          %963 = sbr.rel (%p961) target = $region124
        $region123: #{al_projector_forward.7} parent=107 // pred_region
          %965 = dma.done %s957, 2048
        $region124: #{al_projector_forward.7} parent=107 // pred_fallthru
          _
        %s966 = sand.u32 %s45, 1
        %s967 = scalar_lea.sflag [#allocation9], %s966
        %s968 = sand.u32 %s377, 1
        %s969 = smul.addr %s968, 64
        %s970 = scalar_lea.vmem [#allocation10], %s969
        // Predicated region
        $region125: #{al_projector_forward.7} parent=107 // pred_check
          %p971 = pneg %p390
        $region126: #{al_projector_forward.7} parent=107 // pred_check_branch
          %973 = sbr.rel (%p971) target = $region128
        $region127: #{al_projector_forward.7} parent=107 // pred_region
          %975 = dma.done %s967, 1024
        $region128: #{al_projector_forward.7} parent=107 // pred_fallthru
          _
        %s976 = sand.u32 %s45, 1
        %s977 = scalar_lea.sflag [#allocation12], %s976
        %s978 = sand.u32 %s481, 1
        %s979 = smul.addr %s978, 128
        %s980 = scalar_lea.vmem [#allocation11], %s979
        // Predicated region
        $region129: #{al_projector_forward.7} parent=107 // pred_check
          %p981 = pneg %p494
        $region130: #{al_projector_forward.7} parent=107 // pred_check_branch
          %983 = sbr.rel (%p981) target = $region132
        $region131: #{al_projector_forward.7} parent=107 // pred_region
          %985 = dma.done %s977, 2048
        $region132: #{al_projector_forward.7} parent=107 // pred_fallthru
          _
        %s986 = sand.u32 %s45, 1
        %s987 = scalar_lea.sflag [#allocation12], %s986
        %s988 = sand.u32 %s533, 1
        %s989 = smul.addr %s988, 128
        %s990 = scalar_lea.vmem [#allocation13], %s989
        // Predicated region
        $region133: #{al_projector_forward.7} parent=107 // pred_check
          %p991 = pneg %p546
        $region134: #{al_projector_forward.7} parent=107 // pred_check_branch
          %993 = sbr.rel (%p991) target = $region136
        $region135: #{al_projector_forward.7} parent=107 // pred_region
          %995 = dma.done %s987, 2048
        $region136: #{al_projector_forward.7} parent=107 // pred_fallthru
          _
        %p996 = scmp.lt.s32.totalorder %s49, 1
        %s997 = scalar_select %p996, %s49, 1
        %s998 = smul.addr %s997, 8
        %s999 = scalar_lea.vmem %s0, %s998
        %p1000 = pneg %p78
        %p1001 = pneg %p75
        %p1002 = scmp.lt.s32.totalorder %s49, 1
        %s1003 = scalar_select %p1002, %s49, 1
        %s1004 = smul.addr %s1003, 2
        %s1005 = smul.addr %s1004, 4
        %s1006 = scalar_lea.vmem %s1, %s1005
        %p1007 = pneg %p104
        %p1008 = pneg %p101
        %s1009 = sand.u32 %s117, 1
        %s1010 = scalar_lea.sflag [#allocation4], %s1009
        %s1011 = sand.u32 %s117, 1
        %s1012 = smul.addr %s1011, 192
        %s1013 = scalar_lea.vmem [#allocation3], %s1012
        %p1014 = pneg %p130
        %p1015 = pneg %p127
        %p1016 = scmp.lt.s32.totalorder %s50, 1
        %s1017 = scalar_select %p1016, %s50, 1
        %s1018 = smul.addr %s1017, 3
        %s1019 = scalar_lea.vmem %s3, %s1018
        %p1020 = pneg %p156
        %p1021 = pneg %p153
        %s1022 = sand.u32 %s45, 1
        %s1023 = scalar_lea.sflag [#allocation6], %s1022
        %s1024 = sand.u32 %s169, 1
        %s1025 = smul.addr %s1024, 64
        %s1026 = scalar_lea.vmem [#allocation5], %s1025
        %p1027 = pneg %p182
        %p1028 = pneg %p179
        %p1029 = scmp.lt.s32.totalorder %s50, 1
        %s1030 = scalar_select %p1029, %s50, 1
        %s1031 = scalar_lea.vmem %s5, %s1030
        %p1032 = pneg %p208
        %p1033 = pneg %p205
        %p1034 = scmp.lt.s32.totalorder %s50, 1
        %s1035 = scalar_select %p1034, %s50, 1
        %s1036 = scalar_lea.vmem %s6, %s1035
        %p1037 = pneg %p234
        %p1038 = pneg %p231
        %p1039 = scmp.lt.s32.totalorder %s50, 1
        %s1040 = scalar_select %p1039, %s50, 1
        %s1041 = scalar_lea.vmem %s7, %s1040
        %p1042 = pneg %p260
        %p1043 = pneg %p257
        %s1044 = sand.u32 %s45, 1
        %s1045 = scalar_lea.sflag [#allocation6], %s1044
        %s1046 = sand.u32 %s273, 1
        %s1047 = smul.addr %s1046, 64
        %s1048 = scalar_lea.vmem [#allocation7], %s1047
        %p1049 = pneg %p286
        %p1050 = pneg %p283
        %p1051 = scmp.lt.s32.totalorder %s50, 1
        %s1052 = scalar_select %p1051, %s50, 1
        %s1053 = scalar_lea.vmem %s9, %s1052
        %p1054 = pneg %p312
        %p1055 = pneg %p309
        %s1056 = sand.u32 %s45, 1
        %s1057 = scalar_lea.sflag [#allocation9], %s1056
        %s1058 = sand.u32 %s325, 1
        %s1059 = smul.addr %s1058, 128
        %s1060 = scalar_lea.vmem [#allocation8], %s1059
        %p1061 = pneg %p338
        %p1062 = pneg %p335
        %p1063 = scmp.lt.s32.totalorder %s50, 1
        %s1064 = scalar_select %p1063, %s50, 1
        %s1065 = smul.addr %s1064, 2
        %s1066 = scalar_lea.vmem %s11, %s1065
        %p1067 = pneg %p364
        %p1068 = pneg %p361
        %s1069 = sand.u32 %s45, 1
        %s1070 = scalar_lea.sflag [#allocation9], %s1069
        %s1071 = sand.u32 %s377, 1
        %s1072 = smul.addr %s1071, 64
        %s1073 = scalar_lea.vmem [#allocation10], %s1072
        %p1074 = pneg %p390
        %p1075 = pneg %p387
        %p1076 = scmp.lt.s32.totalorder %s50, 1
        %s1077 = scalar_select %p1076, %s50, 1
        %s1078 = scalar_lea.vmem %s13, %s1077
        %p1079 = pneg %p416
        %p1080 = pneg %p413
        %p1081 = scmp.lt.s32.totalorder %s50, 1
        %s1082 = scalar_select %p1081, %s50, 1
        %s1083 = scalar_lea.vmem %s14, %s1082
        %p1084 = pneg %p442
        %p1085 = pneg %p439
        %p1086 = scmp.lt.s32.totalorder %s50, 1
        %s1087 = scalar_select %p1086, %s50, 1
        %s1088 = scalar_lea.vmem %s15, %s1087
        %p1089 = pneg %p468
        %p1090 = pneg %p465
        %s1091 = sand.u32 %s45, 1
        %s1092 = scalar_lea.sflag [#allocation12], %s1091
        %s1093 = sand.u32 %s481, 1
        %s1094 = smul.addr %s1093, 128
        %s1095 = scalar_lea.vmem [#allocation11], %s1094
        %p1096 = pneg %p494
        %p1097 = pneg %p491
        %p1098 = scmp.lt.s32.totalorder %s50, 1
        %s1099 = scalar_select %p1098, %s50, 1
        %s1100 = smul.addr %s1099, 2
        %s1101 = scalar_lea.vmem %s17, %s1100
        %p1102 = pneg %p520
        %p1103 = pneg %p517
        %s1104 = sand.u32 %s45, 1
        %s1105 = scalar_lea.sflag [#allocation12], %s1104
        %s1106 = sand.u32 %s533, 1
        %s1107 = smul.addr %s1106, 128
        %s1108 = scalar_lea.vmem [#allocation13], %s1107
        %p1109 = pneg %p546
        %p1110 = pneg %p543
        %p1111 = scmp.lt.s32.totalorder %s50, 1
        %s1112 = scalar_select %p1111, %s50, 1
        %s1113 = scalar_lea.vmem %s19, %s1112
        %p1114 = pneg %p572
        %p1115 = pneg %p569
        %p1116 = scmp.lt.s32.totalorder %s50, 1
        %s1117 = scalar_select %p1116, %s50, 1
        %s1118 = scalar_lea.vmem %s20, %s1117
        %p1119 = pneg %p598
        %p1120 = pneg %p595
        %p1121 = scmp.lt.s32.totalorder %s50, 1
        %s1122 = scalar_select %p1121, %s50, 1
        %s1123 = scalar_lea.vmem %s21, %s1122
        %p1124 = pneg %p624
        %p1125 = pneg %p621
        %p1126 = pneg %p650
        %p1127 = pneg %p647
        %p1128 = scmp.lt.s32.totalorder %s49, 1
        %s1129 = scalar_select %p1128, %s49, 1
        %s1130 = smul.addr %s1129, 8
        %s1131 = scalar_lea.vmem %s22, %s1130
        %p1132 = scmp.lt.s32.totalorder %s49, 1
        %s1133 = scalar_select %p1132, %s49, 1
        %s1134 = smul.addr %s1133, 8
        %s1135 = scalar_lea.vmem %s0, %s1134
        %p1136 = scmp.lt.s32.totalorder %s49, 1
        %s1137 = scalar_select %p1136, %s49, 1
        %s1138 = smul.addr %s1137, 2
        %s1139 = smul.addr %s1138, 4
        %s1140 = scalar_lea.vmem %s1, %s1139
        %p1141 = scmp.lt.s32.totalorder %s50, 1
        %s1142 = scalar_select %p1141, %s50, 1
        %s1143 = smul.addr %s1142, 3
        %s1144 = scalar_lea.vmem %s3, %s1143
        %p1145 = scmp.lt.s32.totalorder %s50, 1
        %s1146 = scalar_select %p1145, %s50, 1
        %s1147 = scalar_lea.vmem %s5, %s1146
        %p1148 = scmp.lt.s32.totalorder %s50, 1
        %s1149 = scalar_select %p1148, %s50, 1
        %s1150 = scalar_lea.vmem %s6, %s1149
        %p1151 = scmp.lt.s32.totalorder %s50, 1
        %s1152 = scalar_select %p1151, %s50, 1
        %s1153 = scalar_lea.vmem %s7, %s1152
        %p1154 = scmp.lt.s32.totalorder %s50, 1
        %s1155 = scalar_select %p1154, %s50, 1
        %s1156 = scalar_lea.vmem %s9, %s1155
        %p1157 = scmp.lt.s32.totalorder %s50, 1
        %s1158 = scalar_select %p1157, %s50, 1
        %s1159 = smul.addr %s1158, 2
        %s1160 = scalar_lea.vmem %s11, %s1159
        %p1161 = scmp.lt.s32.totalorder %s50, 1
        %s1162 = scalar_select %p1161, %s50, 1
        %s1163 = scalar_lea.vmem %s13, %s1162
        %p1164 = scmp.lt.s32.totalorder %s50, 1
        %s1165 = scalar_select %p1164, %s50, 1
        %s1166 = scalar_lea.vmem %s14, %s1165
        %p1167 = scmp.lt.s32.totalorder %s50, 1
        %s1168 = scalar_select %p1167, %s50, 1
        %s1169 = scalar_lea.vmem %s15, %s1168
        %p1170 = scmp.lt.s32.totalorder %s50, 1
        %s1171 = scalar_select %p1170, %s50, 1
        %s1172 = smul.addr %s1171, 2
        %s1173 = scalar_lea.vmem %s17, %s1172
        %p1174 = scmp.lt.s32.totalorder %s50, 1
        %s1175 = scalar_select %p1174, %s50, 1
        %s1176 = scalar_lea.vmem %s19, %s1175
        %p1177 = scmp.lt.s32.totalorder %s50, 1
        %s1178 = scalar_select %p1177, %s50, 1
        %s1179 = scalar_lea.vmem %s20, %s1178
        %p1180 = scmp.lt.s32.totalorder %s50, 1
        %s1181 = scalar_select %p1180, %s50, 1
        %s1182 = scalar_lea.vmem %s21, %s1181
        %p1183 = scmp.lt.s32.totalorder %s49, 1
        %s1184 = scalar_select %p1183, %s49, 1
        %s1185 = smul.addr %s1184, 8
        %s1186 = scalar_lea.vmem %s22, %s1185
        %p1188 = scmp.eq.s32.totalorder %s50, 0
        // Predicated region
        $region137: #{al_projector_forward.7} parent=107 // pred_check
          %p1189 = pneg %p1188
        $region138: #{al_projector_forward.7} parent=107 // pred_check_branch
          %1191 = sbr.rel (%p1189) target = $region140
        $region139: #{al_projector_forward.7} parent=107 // pred_region
          %v1192 = vld [vmem:[%s1135] sm:$0xff]
          %1193 = vst [vmem:[#allocation2] sm:$0xff] %v1192
        $region140: #{al_projector_forward.7} parent=107 // pred_fallthru
          _
        %v1194 = vld [vmem:[#allocation2] sm:$0xff]
        %v1195 = vld [vmem:[%s1140] sm:$0xf]
        %v1196 = vld [vmem:[%s1140 + $0x4] sm:$0xf]
        %v1197 = vpack.c.bf16 %v1194, %v1194
        %v1198 = vld [vmem:[%s930] sm:$0xff]
        %v1199 = vld [vmem:[%s930 + $0x8] sm:$0xf]
        %v1200 = vld [vmem:[%s930 + $0xc] sm:$0xff]
        %v1201 = vld [vmem:[%s930 + $0x14] sm:$0xf]
        %v1202 = vld [vmem:[%s930 + $0x18] sm:$0xff]
        %v1203 = vld [vmem:[%s930 + $0x20] sm:$0xf]
        %v1204 = vld [vmem:[%s930 + $0x24] sm:$0xff]
        %v1205 = vld [vmem:[%s930 + $0x2c] sm:$0xf]
        %v1206 = vld [vmem:[%s930 + $0x30] sm:$0xff]
        %v1207 = vld [vmem:[%s930 + $0x38] sm:$0xf]
        %v1208 = vld [vmem:[%s930 + $0x3c] sm:$0xff]
        %v1209 = vld [vmem:[%s930 + $0x44] sm:$0xf]
        %v1210 = vld [vmem:[%s930 + $0x48] sm:$0xff]
        %v1211 = vld [vmem:[%s930 + $0x50] sm:$0xf]
        %v1212 = vld [vmem:[%s930 + $0x54] sm:$0xff]
        %v1213 = vld [vmem:[%s930 + $0x5c] sm:$0xf]
        %v1214 = vld [vmem:[%s930 + $0x60] sm:$0xff]
        %v1215 = vld [vmem:[%s930 + $0x68] sm:$0xf]
        %v1216 = vld [vmem:[%s930 + $0x6c] sm:$0xff]
        %v1217 = vld [vmem:[%s930 + $0x74] sm:$0xf]
        %v1218 = vld [vmem:[%s930 + $0x78] sm:$0xff]
        %v1219 = vld [vmem:[%s930 + $0x80] sm:$0xf]
        %v1220 = vld [vmem:[%s930 + $0x84] sm:$0xff]
        %v1221 = vld [vmem:[%s930 + $0x8c] sm:$0xf]
        %v1222 = vld [vmem:[%s930 + $0x90] sm:$0xff]
        %v1223 = vld [vmem:[%s930 + $0x98] sm:$0xf]
        %v1224 = vld [vmem:[%s930 + $0x9c] sm:$0xff]
        %v1225 = vld [vmem:[%s930 + $0xa4] sm:$0xf]
        %v1226 = vld [vmem:[%s930 + $0xa8] sm:$0xff]
        %v1227 = vld [vmem:[%s930 + $0xb0] sm:$0xf]
        %v1228 = vld [vmem:[%s930 + $0xb4] sm:$0xff]
        %v1229 = vld [vmem:[%s930 + $0xbc] sm:$0xf]
        %v1230 = vld [vmem:[%s1144] sm:$0x7]
        %v1232 = vperm.slane %v1230, 0
        %v1233 = vperm.slane %v1230, 1
        %v1234 = vperm.slane %v1230, 2
        %v1270 = vunpack.c.l.b16 %v1198
        %v1271 = vunpack.c.h.b16 %v1198
        %v1272 = vunpack.c.l.b16 %v1199
        %v1273 = vunpack.c.l.b16 %v1200
        %v1274 = vunpack.c.h.b16 %v1200
        %v1275 = vunpack.c.l.b16 %v1201
        %v1276 = vunpack.c.l.b16 %v1202
        %v1277 = vunpack.c.h.b16 %v1202
        %v1278 = vunpack.c.l.b16 %v1203
        %v1279 = vunpack.c.l.b16 %v1204
        %v1280 = vunpack.c.h.b16 %v1204
        %v1281 = vunpack.c.l.b16 %v1205
        %v1282 = vunpack.c.l.b16 %v1206
        %v1283 = vunpack.c.h.b16 %v1206
        %v1284 = vunpack.c.l.b16 %v1207
        %v1285 = vunpack.c.l.b16 %v1208
        %v1286 = vunpack.c.h.b16 %v1208
        %v1287 = vunpack.c.l.b16 %v1209
        %v1288 = vunpack.c.l.b16 %v1210
        %v1289 = vunpack.c.h.b16 %v1210
        %v1290 = vunpack.c.l.b16 %v1211
        %v1291 = vunpack.c.l.b16 %v1212
        %v1292 = vunpack.c.h.b16 %v1212
        %v1293 = vunpack.c.l.b16 %v1213
        %v1294 = vunpack.c.l.b16 %v1214
        %v1295 = vunpack.c.h.b16 %v1214
        %v1296 = vunpack.c.l.b16 %v1215
        %v1297 = vunpack.c.l.b16 %v1216
        %v1298 = vunpack.c.h.b16 %v1216
        %v1299 = vunpack.c.l.b16 %v1217
        %v1300 = vunpack.c.l.b16 %v1218
        %v1301 = vunpack.c.h.b16 %v1218
        %v1302 = vunpack.c.l.b16 %v1219
        %v1303 = vunpack.c.l.b16 %v1220
        %v1304 = vunpack.c.h.b16 %v1220
        %v1305 = vunpack.c.l.b16 %v1221
        %v1306 = vunpack.c.l.b16 %v1222
        %v1307 = vunpack.c.h.b16 %v1222
        %v1308 = vunpack.c.l.b16 %v1223
        %v1309 = vunpack.c.l.b16 %v1224
        %v1310 = vunpack.c.h.b16 %v1224
        %v1311 = vunpack.c.l.b16 %v1225
        %v1312 = vunpack.c.l.b16 %v1226
        %v1313 = vunpack.c.h.b16 %v1226
        %v1314 = vunpack.c.l.b16 %v1227
        %v1315 = vunpack.c.l.b16 %v1228
        %v1316 = vunpack.c.h.b16 %v1228
        %v1317 = vunpack.c.l.b16 %v1229
        %v1318 = vpack.c.b16 %v1273, %v1270
        %v1319 = vpack.c.b16 %v1274, %v1271
        %v1320 = vpack.c.b16 %v1275, %v1272
        %v1321 = vpack.c.b16 %v1279, %v1276
        %v1322 = vpack.c.b16 %v1280, %v1277
        %v1323 = vpack.c.b16 %v1281, %v1278
        %v1324 = vpack.c.b16 %v1285, %v1282
        %v1325 = vpack.c.b16 %v1286, %v1283
        %v1326 = vpack.c.b16 %v1287, %v1284
        %v1327 = vpack.c.b16 %v1291, %v1288
        %v1328 = vpack.c.b16 %v1292, %v1289
        %v1329 = vpack.c.b16 %v1293, %v1290
        %v1330 = vpack.c.b16 %v1297, %v1294
        %v1331 = vpack.c.b16 %v1298, %v1295
        %v1332 = vpack.c.b16 %v1299, %v1296
        %v1333 = vpack.c.b16 %v1303, %v1300
        %v1334 = vpack.c.b16 %v1304, %v1301
        %v1335 = vpack.c.b16 %v1305, %v1302
        %v1336 = vpack.c.b16 %v1309, %v1306
        %v1337 = vpack.c.b16 %v1310, %v1307
        %v1338 = vpack.c.b16 %v1311, %v1308
        %v1339 = vpack.c.b16 %v1315, %v1312
        %v1340 = vpack.c.b16 %v1316, %v1313
        %v1341 = vpack.c.b16 %v1317, %v1314
        %1366 = vmatpush.bf16.msra.mxu0 %v1339
        %1367 = vmatpush.bf16.msra.mxu0 %v1336
        %1368 = vmatpush.bf16.msra.mxu0 %v1333
        %1369 = vmatpush.bf16.msra.mxu0 %v1330
        %1370 = vmatpush.bf16.msra.mxu0 %v1327
        %1371 = vmatpush.bf16.msra.mxu0 %v1324
        %1372 = vmatpush.bf16.msra.mxu0 %v1321
        %1373 = vmatpush.bf16.msra.mxu0 %v1318
        %1374 = vmatmul.bf16.gmra.mxu0 %v1197
        %v1375 = vpop.f32.mrf.mxu0
        %v1376 = vadd.f32 %v1232, %v1375
        %v1377 = vpop.f32.mrf.mxu0
        %1378 = vdwg.mxu0
        %1379 = vmatpush.bf16.msra.mxu0 %v1340
        %1380 = vmatpush.bf16.msra.mxu0 %v1337
        %1381 = vmatpush.bf16.msra.mxu0 %v1334
        %1382 = vmatpush.bf16.msra.mxu0 %v1331
        %1383 = vmatpush.bf16.msra.mxu0 %v1328
        %1384 = vmatpush.bf16.msra.mxu0 %v1325
        %1385 = vmatpush.bf16.msra.mxu0 %v1322
        %1386 = vmatpush.bf16.msra.mxu0 %v1319
        %1387 = vmatmul.bf16.gmra.mxu0 %v1197
        %v1388 = vpop.f32.mrf.mxu0
        %v1389 = vadd.f32 %v1233, %v1388
        %v1390 = vpop.f32.mrf.mxu0
        %1391 = vdwg.mxu0
        %1392 = vmatpush.bf16.msra.mxu0 %v1341
        %1393 = vmatpush.bf16.msra.mxu0 %v1338
        %1394 = vmatpush.bf16.msra.mxu0 %v1335
        %1395 = vmatpush.bf16.msra.mxu0 %v1332
        %1396 = vmatpush.bf16.msra.mxu0 %v1329
        %1397 = vmatpush.bf16.msra.mxu0 %v1326
        %1398 = vmatpush.bf16.msra.mxu0 %v1323
        %1399 = vmatpush.bf16.msra.mxu0 %v1320
        %1400 = vmatmul.bf16.gmra.mxu0 %v1197
        %v1401 = vpop.f32.mrf.mxu0
        %v1402 = vadd.f32 %v1234, %v1401
        %v1403 = vpop.f32.mrf.mxu0
        %1404 = vdwg.mxu0
        %v1405 = vld [vmem:[%s940] sm:$0xf]
        %v1406 = vld [vmem:[%s940 + $0x4] sm:$0xf]
        %v1407 = vld [vmem:[%s940 + $0x8] sm:$0xf]
        %v1408 = vld [vmem:[%s940 + $0xc] sm:$0xf]
        %v1409 = vld [vmem:[%s940 + $0x10] sm:$0xf]
        %v1410 = vld [vmem:[%s940 + $0x14] sm:$0xf]
        %v1411 = vld [vmem:[%s940 + $0x18] sm:$0xf]
        %v1412 = vld [vmem:[%s940 + $0x1c] sm:$0xf]
        %v1413 = vld [vmem:[%s940 + $0x20] sm:$0xf]
        %v1414 = vld [vmem:[%s940 + $0x24] sm:$0xf]
        %v1415 = vld [vmem:[%s940 + $0x28] sm:$0xf]
        %v1416 = vld [vmem:[%s940 + $0x2c] sm:$0xf]
        %v1417 = vld [vmem:[%s940 + $0x30] sm:$0xf]
        %v1418 = vld [vmem:[%s940 + $0x34] sm:$0xf]
        %v1419 = vld [vmem:[%s940 + $0x38] sm:$0xf]
        %v1420 = vld [vmem:[%s940 + $0x3c] sm:$0xf]
        %v1421 = vld [vmem:[%s1147] sm:$0x1]
        %v1422 = vpack.c.bf16 %v1376, %v1376
        %v1423 = vpack.c.bf16 %v1389, %v1389
        %v1424 = vpack.c.bf16 %v1402, %v1402
        %vm1425 = vcmask 261120
        %v1427 = vsel %vm1425, %v1422, 0
        %v1430 = vsel %vm1425, %v1423, 0
        %1432 = vmatpush.bf16.xpose.msra.mxu0 0
        %1433 = vmatpush.bf16.xpose.msra.mxu0 0
        %1434 = vmatpush.bf16.xpose.msra.mxu0 0
        %1435 = vmatpush.bf16.xpose.msra.mxu0 0
        %1436 = vmatpush.bf16.xpose.msra.mxu0 0
        %1437 = vmatpush.bf16.xpose.msra.mxu0 0
        %1438 = vmatpush.bf16.xpose.msra.mxu0 0
        %1439 = vmatpush.bf16.xpose.msra.mxu0 %v1430
        %1440 = vmatmul.bf16.gmra.mxu0 %v1427
        %v1441 = vpop.f32.mrf.mxu0
        %v1442 = vadd.f32 0.0, %v1441
        %v1443 = vpop.f32.mrf.mxu0
        %1444 = vdwg.mxu0
        %v1445 = vmul.f32 %v1442, 0.17677669
        %vm1446 = vcmask 64512
        %v1447 = vsel %vm1446, %v1445, -inf
        %1448 = vmax.xlane.f32.xlu0 %v1447
        %v1449 = vpop.xlane.xlu0 %1448
        %v1450 = vsub.f32 %v1445, %v1449
        %v1451 = vmul.f32 %v1450, 1.442695
        %v1452 = vpow.pop %v1451
        %v1453 = vsel %vm1446, %v1452, 0.0
        %1454 = vadd.xlane.f32.xlu0 %v1453
        %v1455 = vpop.xlane.xlu0 %1454
        %v1456 = vrcp.pop %v1455
        %v1457 = vmul.f32 %v1452, %v1456
        %v1458 = vpack.c.bf16 %v1457, %v1457
        %v1460 = vsel %vm1446, %v1458, 0
        %vm1462 = vcmask 1043456
        %v1464 = vsel %vm1462, %v1424, 0
        %1466 = vmatpush.bf16.msra.mxu0 0
        %1467 = vmatpush.bf16.msra.mxu0 0
        %1468 = vmatpush.bf16.msra.mxu0 0
        %1469 = vmatpush.bf16.msra.mxu0 0
        %1470 = vmatpush.bf16.msra.mxu0 0
        %1471 = vmatpush.bf16.msra.mxu0 0
        %1472 = vmatpush.bf16.msra.mxu0 0
        %1473 = vmatpush.bf16.msra.mxu0 %v1464
        %1474 = vmatmul.bf16.gmra.mxu0 %v1460
        %v1475 = vpop.f32.mrf.mxu0
        %v1476 = vadd.f32 0.0, %v1475
        %v1477 = vpop.f32.mrf.mxu0
        %1478 = vdwg.mxu0
        %1480 = vrot.lane.b32.xlu0 %v1422, 96
        %v1481 = vpop.permute.xlu0 %1480
        %1483 = vrot.lane.b32.xlu0 %v1423, 96
        %v1484 = vpop.permute.xlu0 %1483
        %v1486 = vsel %vm1425, %v1481, 0
        %v1489 = vsel %vm1425, %v1484, 0
        %1491 = vmatpush.bf16.xpose.msra.mxu0 0
        %1492 = vmatpush.bf16.xpose.msra.mxu0 0
        %1493 = vmatpush.bf16.xpose.msra.mxu0 0
        %1494 = vmatpush.bf16.xpose.msra.mxu0 0
        %1495 = vmatpush.bf16.xpose.msra.mxu0 0
        %1496 = vmatpush.bf16.xpose.msra.mxu0 0
        %1497 = vmatpush.bf16.xpose.msra.mxu0 0
        %1498 = vmatpush.bf16.xpose.msra.mxu0 %v1489
        %1499 = vmatmul.bf16.gmra.mxu0 %v1486
        %v1500 = vpop.f32.mrf.mxu0
        %v1501 = vadd.f32 0.0, %v1500
        %v1502 = vpop.f32.mrf.mxu0
        %1503 = vdwg.mxu0
        %v1504 = vmul.f32 %v1501, 0.17677669
        %v1505 = vsel %vm1446, %v1504, -inf
        %1506 = vmax.xlane.f32.xlu0 %v1505
        %v1507 = vpop.xlane.xlu0 %1506
        %v1508 = vsub.f32 %v1504, %v1507
        %v1509 = vmul.f32 %v1508, 1.442695
        %v1510 = vpow.pop %v1509
        %v1511 = vsel %vm1446, %v1510, 0.0
        %1512 = vadd.xlane.f32.xlu0 %v1511
        %v1513 = vpop.xlane.xlu0 %1512
        %v1514 = vrcp.pop %v1513
        %v1515 = vmul.f32 %v1510, %v1514
        %v1516 = vpack.c.bf16 %v1515, %v1515
        %1518 = vrot.lane.b32.xlu0 %v1424, 96
        %v1519 = vpop.permute.xlu0 %1518
        %v1521 = vsel %vm1446, %v1516, 0
        %v1524 = vsel %vm1462, %v1519, 0
        %1526 = vmatpush.bf16.msra.mxu0 0
        %1527 = vmatpush.bf16.msra.mxu0 0
        %1528 = vmatpush.bf16.msra.mxu0 0
        %1529 = vmatpush.bf16.msra.mxu0 0
        %1530 = vmatpush.bf16.msra.mxu0 0
        %1531 = vmatpush.bf16.msra.mxu0 0
        %1532 = vmatpush.bf16.msra.mxu0 0
        %1533 = vmatpush.bf16.msra.mxu0 %v1524
        %1534 = vmatmul.bf16.gmra.mxu0 %v1521
        %v1535 = vpop.f32.mrf.mxu0
        %v1536 = vadd.f32 0.0, %v1535
        %v1537 = vpop.f32.mrf.mxu0
        %1538 = vdwg.mxu0
        %1539 = vrot.lane.b32.xlu0 %v1422, 64
        %v1540 = vpop.permute.xlu0 %1539
        %1541 = vrot.lane.b32.xlu0 %v1423, 64
        %v1542 = vpop.permute.xlu0 %1541
        %v1544 = vsel %vm1425, %v1540, 0
        %v1547 = vsel %vm1425, %v1542, 0
        %1549 = vmatpush.bf16.xpose.msra.mxu0 0
        %1550 = vmatpush.bf16.xpose.msra.mxu0 0
        %1551 = vmatpush.bf16.xpose.msra.mxu0 0
        %1552 = vmatpush.bf16.xpose.msra.mxu0 0
        %1553 = vmatpush.bf16.xpose.msra.mxu0 0
        %1554 = vmatpush.bf16.xpose.msra.mxu0 0
        %1555 = vmatpush.bf16.xpose.msra.mxu0 0
        %1556 = vmatpush.bf16.xpose.msra.mxu0 %v1547
        %1557 = vmatmul.bf16.gmra.mxu0 %v1544
        %v1558 = vpop.f32.mrf.mxu0
        %v1559 = vadd.f32 0.0, %v1558
        %v1560 = vpop.f32.mrf.mxu0
        %1561 = vdwg.mxu0
        %v1562 = vmul.f32 %v1559, 0.17677669
        %v1563 = vsel %vm1446, %v1562, -inf
        %1564 = vmax.xlane.f32.xlu0 %v1563
        %v1565 = vpop.xlane.xlu0 %1564
        %v1566 = vsub.f32 %v1562, %v1565
        %v1567 = vmul.f32 %v1566, 1.442695
        %v1568 = vpow.pop %v1567
        %v1569 = vsel %vm1446, %v1568, 0.0
        %1570 = vadd.xlane.f32.xlu0 %v1569
        %v1571 = vpop.xlane.xlu0 %1570
        %v1572 = vrcp.pop %v1571
        %v1573 = vmul.f32 %v1568, %v1572
        %v1574 = vpack.c.bf16 %v1573, %v1573
        %1575 = vrot.lane.b32.xlu0 %v1424, 64
        %v1576 = vpop.permute.xlu0 %1575
        %v1578 = vsel %vm1446, %v1574, 0
        %v1581 = vsel %vm1462, %v1576, 0
        %1583 = vmatpush.bf16.msra.mxu0 0
        %1584 = vmatpush.bf16.msra.mxu0 0
        %1585 = vmatpush.bf16.msra.mxu0 0
        %1586 = vmatpush.bf16.msra.mxu0 0
        %1587 = vmatpush.bf16.msra.mxu0 0
        %1588 = vmatpush.bf16.msra.mxu0 0
        %1589 = vmatpush.bf16.msra.mxu0 0
        %1590 = vmatpush.bf16.msra.mxu0 %v1581
        %1591 = vmatmul.bf16.gmra.mxu0 %v1578
        %v1592 = vpop.f32.mrf.mxu0
        %v1593 = vadd.f32 0.0, %v1592
        %v1594 = vpop.f32.mrf.mxu0
        %1595 = vdwg.mxu0
        %1596 = vrot.lane.b32.xlu0 %v1422, 32
        %v1597 = vpop.permute.xlu0 %1596
        %1598 = vrot.lane.b32.xlu0 %v1423, 32
        %v1599 = vpop.permute.xlu0 %1598
        %v1601 = vsel %vm1425, %v1597, 0
        %v1604 = vsel %vm1425, %v1599, 0
        %1606 = vmatpush.bf16.xpose.msra.mxu0 0
        %1607 = vmatpush.bf16.xpose.msra.mxu0 0
        %1608 = vmatpush.bf16.xpose.msra.mxu0 0
        %1609 = vmatpush.bf16.xpose.msra.mxu0 0
        %1610 = vmatpush.bf16.xpose.msra.mxu0 0
        %1611 = vmatpush.bf16.xpose.msra.mxu0 0
        %1612 = vmatpush.bf16.xpose.msra.mxu0 0
        %1613 = vmatpush.bf16.xpose.msra.mxu0 %v1604
        %1614 = vmatmul.bf16.gmra.mxu0 %v1601
        %v1615 = vpop.f32.mrf.mxu0
        %v1616 = vadd.f32 0.0, %v1615
        %v1617 = vpop.f32.mrf.mxu0
        %1618 = vdwg.mxu0
        %v1619 = vmul.f32 %v1616, 0.17677669
        %v1620 = vsel %vm1446, %v1619, -inf
        %1621 = vmax.xlane.f32.xlu0 %v1620
        %v1622 = vpop.xlane.xlu0 %1621
        %v1623 = vsub.f32 %v1619, %v1622
        %v1624 = vmul.f32 %v1623, 1.442695
        %v1625 = vpow.pop %v1624
        %v1626 = vsel %vm1446, %v1625, 0.0
        %1627 = vadd.xlane.f32.xlu0 %v1626
        %v1628 = vpop.xlane.xlu0 %1627
        %v1629 = vrcp.pop %v1628
        %v1630 = vmul.f32 %v1625, %v1629
        %v1631 = vpack.c.bf16 %v1630, %v1630
        %1632 = vrot.lane.b32.xlu0 %v1424, 32
        %v1633 = vpop.permute.xlu0 %1632
        %v1635 = vsel %vm1446, %v1631, 0
        %v1638 = vsel %vm1462, %v1633, 0
        %1640 = vmatpush.bf16.msra.mxu0 0
        %1641 = vmatpush.bf16.msra.mxu0 0
        %1642 = vmatpush.bf16.msra.mxu0 0
        %1643 = vmatpush.bf16.msra.mxu0 0
        %1644 = vmatpush.bf16.msra.mxu0 0
        %1645 = vmatpush.bf16.msra.mxu0 0
        %1646 = vmatpush.bf16.msra.mxu0 0
        %1647 = vmatpush.bf16.msra.mxu0 %v1638
        %1648 = vmatmul.bf16.gmra.mxu0 %v1635
        %v1649 = vpop.f32.mrf.mxu0
        %v1650 = vadd.f32 0.0, %v1649
        %v1651 = vpop.f32.mrf.mxu0
        %1652 = vdwg.mxu0
        %1654 = vrot.lane.b32.xlu0 %v1536, 32
        %v1655 = vpop.permute.xlu0 %1654
        %1658 = vrot.lane.b32.xlu0 %v1593, 64
        %v1659 = vpop.permute.xlu0 %1658
        %1662 = vrot.lane.b32.xlu0 %v1650, 96
        %v1663 = vpop.permute.xlu0 %1662
        %v1665 = vsel %vm1425, %v1476, %v1655
        %vm1666 = vcmask 523264
        %v1667 = vsel %vm1666, %v1665, %v1659
        %vm1668 = vcmask 785408
        %v1669 = vsel %vm1668, %v1667, %v1663
        %v1670 = vpack.c.bf16 %v1669, %v1669
        %v1672 = vperm.slane %v1421, 0
        %v1690 = vunpack.c.l.b16 %v1405
        %v1691 = vunpack.c.l.b16 %v1406
        %v1692 = vunpack.c.l.b16 %v1407
        %v1693 = vunpack.c.l.b16 %v1408
        %v1694 = vunpack.c.l.b16 %v1409
        %v1695 = vunpack.c.l.b16 %v1410
        %v1696 = vunpack.c.l.b16 %v1411
        %v1697 = vunpack.c.l.b16 %v1412
        %v1698 = vunpack.c.l.b16 %v1413
        %v1699 = vunpack.c.l.b16 %v1414
        %v1700 = vunpack.c.l.b16 %v1415
        %v1701 = vunpack.c.l.b16 %v1416
        %v1702 = vunpack.c.l.b16 %v1417
        %v1703 = vunpack.c.l.b16 %v1418
        %v1704 = vunpack.c.l.b16 %v1419
        %v1705 = vunpack.c.l.b16 %v1420
        %v1706 = vpack.c.b16 %v1691, %v1690
        %v1707 = vpack.c.b16 %v1693, %v1692
        %v1708 = vpack.c.b16 %v1695, %v1694
        %v1709 = vpack.c.b16 %v1697, %v1696
        %v1710 = vpack.c.b16 %v1699, %v1698
        %v1711 = vpack.c.b16 %v1701, %v1700
        %v1712 = vpack.c.b16 %v1703, %v1702
        %v1713 = vpack.c.b16 %v1705, %v1704
        %1722 = vmatpush.bf16.msra.mxu0 %v1713
        %1723 = vmatpush.bf16.msra.mxu0 %v1712
        %1724 = vmatpush.bf16.msra.mxu0 %v1711
        %1725 = vmatpush.bf16.msra.mxu0 %v1710
        %1726 = vmatpush.bf16.msra.mxu0 %v1709
        %1727 = vmatpush.bf16.msra.mxu0 %v1708
        %1728 = vmatpush.bf16.msra.mxu0 %v1707
        %1729 = vmatpush.bf16.msra.mxu0 %v1706
        %1730 = vmatmul.bf16.gmra.mxu0 %v1670
        %v1731 = vpop.f32.mrf.mxu0
        %v1732 = vadd.f32 %v1672, %v1731
        %v1733 = vpop.f32.mrf.mxu0
        %1734 = vdwg.mxu0
        %v1735 = vadd.f32 %v1732, %v1194
        %v1736 = vld [vmem:[%s1150] sm:$0x1]
        %v1737 = vld [vmem:[%s1153] sm:$0x1]
        %1738 = vadd.xlane.f32.xlu0 %v1735
        %v1739 = vpop.xlane.xlu0 %1738
        %v1740 = vrcp.pop 128.0
        %v1741 = vmul.f32 128.0, %v1740
        %v1742 = vsub.f32 1.0, %v1741
        %v1743 = vmul.f32 %v1740, %v1742
        %v1744 = vadd.f32 %v1740, %v1743
        %vm1745 = vweird.f32 %v1740
        %v1746 = vsel %vm1745, %v1740, %v1744
        %v1747 = vmul.f32 %v1739, %v1746
        %v1748 = vsub.f32 %v1735, %v1747
        %v1749 = vmul.f32 %v1748, %v1748
        %1750 = vadd.xlane.f32.xlu0 %v1749
        %v1751 = vpop.xlane.xlu0 %1750
        %v1752 = vmul.f32 %v1751, %v1746
        %v1753 = vadd.f32 %v1752, 1e-12
        %v1754 = vrsqrt.pop %v1753
        %v1755 = vmul.f32 %v1754, %v1753
        %v1756 = vmul.f32 %v1755, %v1754
        %v1757 = vmul.f32 0.5, %v1756
        %v1758 = vsub.f32 1.5, %v1757
        %v1759 = vmul.f32 %v1754, %v1758
        %vm1760 = vweird.f32 %v1753
        %vm1761 = vweird.f32 %v1754
        %vm1762 = vmor %vm1760, %vm1761
        %v1763 = vsel %vm1762, %v1754, %v1759
        %v1764 = vmul.f32 %v1748, %v1763
        %v1766 = vperm.slane %v1736, 0
        %v1768 = vmul.f32 %v1764, %v1766
        %v1770 = vperm.slane %v1737, 0
        %v1772 = vadd.f32 %v1768, %v1770
        %v1773 = vpack.c.bf16 %v1772, %v1772
        %v1774 = vld [vmem:[%s950] sm:$0xf]
        %v1775 = vld [vmem:[%s950 + $0x4] sm:$0xf]
        %v1776 = vld [vmem:[%s950 + $0x8] sm:$0xf]
        %v1777 = vld [vmem:[%s950 + $0xc] sm:$0xf]
        %v1778 = vld [vmem:[%s950 + $0x10] sm:$0xf]
        %v1779 = vld [vmem:[%s950 + $0x14] sm:$0xf]
        %v1780 = vld [vmem:[%s950 + $0x18] sm:$0xf]
        %v1781 = vld [vmem:[%s950 + $0x1c] sm:$0xf]
        %v1782 = vld [vmem:[%s950 + $0x20] sm:$0xf]
        %v1783 = vld [vmem:[%s950 + $0x24] sm:$0xf]
        %v1784 = vld [vmem:[%s950 + $0x28] sm:$0xf]
        %v1785 = vld [vmem:[%s950 + $0x2c] sm:$0xf]
        %v1786 = vld [vmem:[%s950 + $0x30] sm:$0xf]
        %v1787 = vld [vmem:[%s950 + $0x34] sm:$0xf]
        %v1788 = vld [vmem:[%s950 + $0x38] sm:$0xf]
        %v1789 = vld [vmem:[%s950 + $0x3c] sm:$0xf]
        %v1790 = vld [vmem:[%s1156] sm:$0x1]
        %v1792 = vperm.slane %v1790, 0
        %v1810 = vunpack.c.l.b16 %v1774
        %v1811 = vunpack.c.l.b16 %v1775
        %v1812 = vunpack.c.l.b16 %v1776
        %v1813 = vunpack.c.l.b16 %v1777
        %v1814 = vunpack.c.l.b16 %v1778
        %v1815 = vunpack.c.l.b16 %v1779
        %v1816 = vunpack.c.l.b16 %v1780
        %v1817 = vunpack.c.l.b16 %v1781
        %v1818 = vunpack.c.l.b16 %v1782
        %v1819 = vunpack.c.l.b16 %v1783
        %v1820 = vunpack.c.l.b16 %v1784
        %v1821 = vunpack.c.l.b16 %v1785
        %v1822 = vunpack.c.l.b16 %v1786
        %v1823 = vunpack.c.l.b16 %v1787
        %v1824 = vunpack.c.l.b16 %v1788
        %v1825 = vunpack.c.l.b16 %v1789
        %v1826 = vpack.c.b16 %v1811, %v1810
        %v1827 = vpack.c.b16 %v1813, %v1812
        %v1828 = vpack.c.b16 %v1815, %v1814
        %v1829 = vpack.c.b16 %v1817, %v1816
        %v1830 = vpack.c.b16 %v1819, %v1818
        %v1831 = vpack.c.b16 %v1821, %v1820
        %v1832 = vpack.c.b16 %v1823, %v1822
        %v1833 = vpack.c.b16 %v1825, %v1824
        %1842 = vmatpush.bf16.msra.mxu0 %v1833
        %1843 = vmatpush.bf16.msra.mxu0 %v1832
        %1844 = vmatpush.bf16.msra.mxu0 %v1831
        %1845 = vmatpush.bf16.msra.mxu0 %v1830
        %1846 = vmatpush.bf16.msra.mxu0 %v1829
        %1847 = vmatpush.bf16.msra.mxu0 %v1828
        %1848 = vmatpush.bf16.msra.mxu0 %v1827
        %1849 = vmatpush.bf16.msra.mxu0 %v1826
        %1850 = vmatmul.bf16.gmra.mxu0 %v1773
        %v1851 = vpop.f32.mrf.mxu0
        %v1852 = vadd.f32 %v1792, %v1851
        %v1853 = vpop.f32.mrf.mxu0
        %1854 = vdwg.mxu0
        %v1855 = vld [vmem:[%s960] sm:$0xff]
        %v1856 = vld [vmem:[%s960 + $0x8] sm:$0xff]
        %v1857 = vld [vmem:[%s960 + $0x10] sm:$0xff]
        %v1858 = vld [vmem:[%s960 + $0x18] sm:$0xff]
        %v1859 = vld [vmem:[%s960 + $0x20] sm:$0xff]
        %v1860 = vld [vmem:[%s960 + $0x28] sm:$0xff]
        %v1861 = vld [vmem:[%s960 + $0x30] sm:$0xff]
        %v1862 = vld [vmem:[%s960 + $0x38] sm:$0xff]
        %v1863 = vld [vmem:[%s960 + $0x40] sm:$0xff]
        %v1864 = vld [vmem:[%s960 + $0x48] sm:$0xff]
        %v1865 = vld [vmem:[%s960 + $0x50] sm:$0xff]
        %v1866 = vld [vmem:[%s960 + $0x58] sm:$0xff]
        %v1867 = vld [vmem:[%s960 + $0x60] sm:$0xff]
        %v1868 = vld [vmem:[%s960 + $0x68] sm:$0xff]
        %v1869 = vld [vmem:[%s960 + $0x70] sm:$0xff]
        %v1870 = vld [vmem:[%s960 + $0x78] sm:$0xff]
        %v1871 = vld [vmem:[%s1160] sm:$0x3]
        %v1873 = vperm.slane %v1871, 0
        %v1874 = vperm.slane %v1871, 1
        %v1879 = vunpack.c.l.b16 %v1195
        %v1880 = vunpack.c.l.b16 %v1196
        %v1881 = vpack.c.b16 %v1880, %v1879
        %v1899 = vunpack.c.l.b16 %v1855
        %v1900 = vunpack.c.h.b16 %v1855
        %v1901 = vunpack.c.l.b16 %v1856
        %v1902 = vunpack.c.h.b16 %v1856
        %v1903 = vunpack.c.l.b16 %v1857
        %v1904 = vunpack.c.h.b16 %v1857
        %v1905 = vunpack.c.l.b16 %v1858
        %v1906 = vunpack.c.h.b16 %v1858
        %v1907 = vunpack.c.l.b16 %v1859
        %v1908 = vunpack.c.h.b16 %v1859
        %v1909 = vunpack.c.l.b16 %v1860
        %v1910 = vunpack.c.h.b16 %v1860
        %v1911 = vunpack.c.l.b16 %v1861
        %v1912 = vunpack.c.h.b16 %v1861
        %v1913 = vunpack.c.l.b16 %v1862
        %v1914 = vunpack.c.h.b16 %v1862
        %v1915 = vunpack.c.l.b16 %v1863
        %v1916 = vunpack.c.h.b16 %v1863
        %v1917 = vunpack.c.l.b16 %v1864
        %v1918 = vunpack.c.h.b16 %v1864
        %v1919 = vunpack.c.l.b16 %v1865
        %v1920 = vunpack.c.h.b16 %v1865
        %v1921 = vunpack.c.l.b16 %v1866
        %v1922 = vunpack.c.h.b16 %v1866
        %v1923 = vunpack.c.l.b16 %v1867
        %v1924 = vunpack.c.h.b16 %v1867
        %v1925 = vunpack.c.l.b16 %v1868
        %v1926 = vunpack.c.h.b16 %v1868
        %v1927 = vunpack.c.l.b16 %v1869
        %v1928 = vunpack.c.h.b16 %v1869
        %v1929 = vunpack.c.l.b16 %v1870
        %v1930 = vunpack.c.h.b16 %v1870
        %v1931 = vpack.c.b16 %v1901, %v1899
        %v1932 = vpack.c.b16 %v1902, %v1900
        %v1933 = vpack.c.b16 %v1905, %v1903
        %v1934 = vpack.c.b16 %v1906, %v1904
        %v1935 = vpack.c.b16 %v1909, %v1907
        %v1936 = vpack.c.b16 %v1910, %v1908
        %v1937 = vpack.c.b16 %v1913, %v1911
        %v1938 = vpack.c.b16 %v1914, %v1912
        %v1939 = vpack.c.b16 %v1917, %v1915
        %v1940 = vpack.c.b16 %v1918, %v1916
        %v1941 = vpack.c.b16 %v1921, %v1919
        %v1942 = vpack.c.b16 %v1922, %v1920
        %v1943 = vpack.c.b16 %v1925, %v1923
        %v1944 = vpack.c.b16 %v1926, %v1924
        %v1945 = vpack.c.b16 %v1929, %v1927
        %v1946 = vpack.c.b16 %v1930, %v1928
        %1963 = vmatpush.bf16.msra.mxu0 %v1945
        %1964 = vmatpush.bf16.msra.mxu0 %v1943
        %1965 = vmatpush.bf16.msra.mxu0 %v1941
        %1966 = vmatpush.bf16.msra.mxu0 %v1939
        %1967 = vmatpush.bf16.msra.mxu0 %v1937
        %1968 = vmatpush.bf16.msra.mxu0 %v1935
        %1969 = vmatpush.bf16.msra.mxu0 %v1933
        %1970 = vmatpush.bf16.msra.mxu0 %v1931
        %1971 = vmatmul.bf16.gmra.mxu0 %v1881
        %v1972 = vpop.f32.mrf.mxu0
        %v1973 = vadd.f32 %v1873, %v1972
        %v1974 = vpop.f32.mrf.mxu0
        %v1975 = vadd.f32 %v1873, %v1974
        %1976 = vdwg.mxu0
        %1977 = vmatpush.bf16.msra.mxu0 %v1946
        %1978 = vmatpush.bf16.msra.mxu0 %v1944
        %1979 = vmatpush.bf16.msra.mxu0 %v1942
        %1980 = vmatpush.bf16.msra.mxu0 %v1940
        %1981 = vmatpush.bf16.msra.mxu0 %v1938
        %1982 = vmatpush.bf16.msra.mxu0 %v1936
        %1983 = vmatpush.bf16.msra.mxu0 %v1934
        %1984 = vmatpush.bf16.msra.mxu0 %v1932
        %1985 = vmatmul.bf16.gmra.mxu0 %v1881
        %v1986 = vpop.f32.mrf.mxu0
        %v1987 = vadd.f32 %v1874, %v1986
        %v1988 = vpop.f32.mrf.mxu0
        %v1989 = vadd.f32 %v1874, %v1988
        %1990 = vdwg.mxu0
        %v1991 = vld [vmem:[%s970] sm:$0xf]
        %v1992 = vld [vmem:[%s970 + $0x4] sm:$0xf]
        %v1993 = vld [vmem:[%s970 + $0x8] sm:$0xf]
        %v1994 = vld [vmem:[%s970 + $0xc] sm:$0xf]
        %v1995 = vld [vmem:[%s970 + $0x10] sm:$0xf]
        %v1996 = vld [vmem:[%s970 + $0x14] sm:$0xf]
        %v1997 = vld [vmem:[%s970 + $0x18] sm:$0xf]
        %v1998 = vld [vmem:[%s970 + $0x1c] sm:$0xf]
        %v1999 = vld [vmem:[%s970 + $0x20] sm:$0xf]
        %v2000 = vld [vmem:[%s970 + $0x24] sm:$0xf]
        %v2001 = vld [vmem:[%s970 + $0x28] sm:$0xf]
        %v2002 = vld [vmem:[%s970 + $0x2c] sm:$0xf]
        %v2003 = vld [vmem:[%s970 + $0x30] sm:$0xf]
        %v2004 = vld [vmem:[%s970 + $0x34] sm:$0xf]
        %v2005 = vld [vmem:[%s970 + $0x38] sm:$0xf]
        %v2006 = vld [vmem:[%s970 + $0x3c] sm:$0xf]
        %v2007 = vld [vmem:[%s1163] sm:$0x1]
        %v2008 = vpack.c.bf16 %v1852, %v1852
        %v2009 = vpack.c.bf16 %v1975, %v1973
        %v2010 = vpack.c.bf16 %v1989, %v1987
        %v2012 = vsel %vm1425, %v2008, 0
        %v2015 = vsel %vm1425, %v2009, 0
        %2017 = vmatpush.bf16.xpose.msra.mxu0 0
        %2018 = vmatpush.bf16.xpose.msra.mxu0 0
        %2019 = vmatpush.bf16.xpose.msra.mxu0 0
        %2020 = vmatpush.bf16.xpose.msra.mxu0 0
        %2021 = vmatpush.bf16.xpose.msra.mxu0 0
        %2022 = vmatpush.bf16.xpose.msra.mxu0 0
        %2023 = vmatpush.bf16.xpose.msra.mxu0 0
        %2024 = vmatpush.bf16.xpose.msra.mxu0 %v2015
        %2025 = vmatmul.bf16.gmra.mxu0 %v2012
        %v2026 = vpop.f32.mrf.mxu0
        %v2027 = vadd.f32 0.0, %v2026
        %v2028 = vpop.f32.mrf.mxu0
        %2029 = vdwg.mxu0
        %v2030 = vmul.f32 %v2027, 0.17677669
        %vm2031 = vcmask 130048
        %v2032 = vsel %vm2031, %v2030, -inf
        %2033 = vmax.xlane.f32.xlu0 %v2032
        %v2034 = vpop.xlane.xlu0 %2033
        %v2035 = vsub.f32 %v2030, %v2034
        %v2036 = vmul.f32 %v2035, 1.442695
        %v2037 = vpow.pop %v2036
        %v2038 = vsel %vm2031, %v2037, 0.0
        %2039 = vadd.xlane.f32.xlu0 %v2038
        %v2040 = vpop.xlane.xlu0 %2039
        %v2041 = vrcp.pop %v2040
        %v2042 = vmul.f32 %v2037, %v2041
        %v2043 = vpack.c.bf16 %v2042, %v2042
        %v2045 = vsel %vm2031, %v2043, 0
        %2047 = vmatpush.bf16.msra.mxu0 0
        %2048 = vmatpush.bf16.msra.mxu0 0
        %2049 = vmatpush.bf16.msra.mxu0 0
        %2050 = vmatpush.bf16.msra.mxu0 0
        %2051 = vmatpush.bf16.msra.mxu0 0
        %2052 = vmatpush.bf16.msra.mxu0 0
        %2053 = vmatpush.bf16.msra.mxu0 0
        %2054 = vmatpush.bf16.msra.mxu0 %v2010
        %2055 = vmatmul.bf16.gmra.mxu0 %v2045
        %v2056 = vpop.f32.mrf.mxu0
        %v2057 = vadd.f32 0.0, %v2056
        %v2058 = vpop.f32.mrf.mxu0
        %2059 = vdwg.mxu0
        %2061 = vrot.lane.b32.xlu0 %v2008, 96
        %v2062 = vpop.permute.xlu0 %2061
        %2064 = vrot.lane.b32.xlu0 %v2009, 96
        %v2065 = vpop.permute.xlu0 %2064
        %v2067 = vsel %vm1425, %v2062, 0
        %v2070 = vsel %vm1425, %v2065, 0
        %2072 = vmatpush.bf16.xpose.msra.mxu0 0
        %2073 = vmatpush.bf16.xpose.msra.mxu0 0
        %2074 = vmatpush.bf16.xpose.msra.mxu0 0
        %2075 = vmatpush.bf16.xpose.msra.mxu0 0
        %2076 = vmatpush.bf16.xpose.msra.mxu0 0
        %2077 = vmatpush.bf16.xpose.msra.mxu0 0
        %2078 = vmatpush.bf16.xpose.msra.mxu0 0
        %2079 = vmatpush.bf16.xpose.msra.mxu0 %v2070
        %2080 = vmatmul.bf16.gmra.mxu0 %v2067
        %v2081 = vpop.f32.mrf.mxu0
        %v2082 = vadd.f32 0.0, %v2081
        %v2083 = vpop.f32.mrf.mxu0
        %2084 = vdwg.mxu0
        %v2085 = vmul.f32 %v2082, 0.17677669
        %v2086 = vsel %vm2031, %v2085, -inf
        %2087 = vmax.xlane.f32.xlu0 %v2086
        %v2088 = vpop.xlane.xlu0 %2087
        %v2089 = vsub.f32 %v2085, %v2088
        %v2090 = vmul.f32 %v2089, 1.442695
        %v2091 = vpow.pop %v2090
        %v2092 = vsel %vm2031, %v2091, 0.0
        %2093 = vadd.xlane.f32.xlu0 %v2092
        %v2094 = vpop.xlane.xlu0 %2093
        %v2095 = vrcp.pop %v2094
        %v2096 = vmul.f32 %v2091, %v2095
        %v2097 = vpack.c.bf16 %v2096, %v2096
        %2099 = vrot.lane.b32.xlu0 %v2010, 96
        %v2100 = vpop.permute.xlu0 %2099
        %v2103 = vsel %vm2031, %v2097, 0
        %2105 = vmatpush.bf16.msra.mxu0 0
        %2106 = vmatpush.bf16.msra.mxu0 0
        %2107 = vmatpush.bf16.msra.mxu0 0
        %2108 = vmatpush.bf16.msra.mxu0 0
        %2109 = vmatpush.bf16.msra.mxu0 0
        %2110 = vmatpush.bf16.msra.mxu0 0
        %2111 = vmatpush.bf16.msra.mxu0 0
        %2112 = vmatpush.bf16.msra.mxu0 %v2100
        %2113 = vmatmul.bf16.gmra.mxu0 %v2103
        %v2114 = vpop.f32.mrf.mxu0
        %v2115 = vadd.f32 0.0, %v2114
        %v2116 = vpop.f32.mrf.mxu0
        %2117 = vdwg.mxu0
        %2118 = vrot.lane.b32.xlu0 %v2008, 64
        %v2119 = vpop.permute.xlu0 %2118
        %2120 = vrot.lane.b32.xlu0 %v2009, 64
        %v2121 = vpop.permute.xlu0 %2120
        %v2123 = vsel %vm1425, %v2119, 0
        %v2126 = vsel %vm1425, %v2121, 0
        %2128 = vmatpush.bf16.xpose.msra.mxu0 0
        %2129 = vmatpush.bf16.xpose.msra.mxu0 0
        %2130 = vmatpush.bf16.xpose.msra.mxu0 0
        %2131 = vmatpush.bf16.xpose.msra.mxu0 0
        %2132 = vmatpush.bf16.xpose.msra.mxu0 0
        %2133 = vmatpush.bf16.xpose.msra.mxu0 0
        %2134 = vmatpush.bf16.xpose.msra.mxu0 0
        %2135 = vmatpush.bf16.xpose.msra.mxu0 %v2126
        %2136 = vmatmul.bf16.gmra.mxu0 %v2123
        %v2137 = vpop.f32.mrf.mxu0
        %v2138 = vadd.f32 0.0, %v2137
        %v2139 = vpop.f32.mrf.mxu0
        %2140 = vdwg.mxu0
        %v2141 = vmul.f32 %v2138, 0.17677669
        %v2142 = vsel %vm2031, %v2141, -inf
        %2143 = vmax.xlane.f32.xlu0 %v2142
        %v2144 = vpop.xlane.xlu0 %2143
        %v2145 = vsub.f32 %v2141, %v2144
        %v2146 = vmul.f32 %v2145, 1.442695
        %v2147 = vpow.pop %v2146
        %v2148 = vsel %vm2031, %v2147, 0.0
        %2149 = vadd.xlane.f32.xlu0 %v2148
        %v2150 = vpop.xlane.xlu0 %2149
        %v2151 = vrcp.pop %v2150
        %v2152 = vmul.f32 %v2147, %v2151
        %v2153 = vpack.c.bf16 %v2152, %v2152
        %2154 = vrot.lane.b32.xlu0 %v2010, 64
        %v2155 = vpop.permute.xlu0 %2154
        %v2158 = vsel %vm2031, %v2153, 0
        %2160 = vmatpush.bf16.msra.mxu0 0
        %2161 = vmatpush.bf16.msra.mxu0 0
        %2162 = vmatpush.bf16.msra.mxu0 0
        %2163 = vmatpush.bf16.msra.mxu0 0
        %2164 = vmatpush.bf16.msra.mxu0 0
        %2165 = vmatpush.bf16.msra.mxu0 0
        %2166 = vmatpush.bf16.msra.mxu0 0
        %2167 = vmatpush.bf16.msra.mxu0 %v2155
        %2168 = vmatmul.bf16.gmra.mxu0 %v2158
        %v2169 = vpop.f32.mrf.mxu0
        %v2170 = vadd.f32 0.0, %v2169
        %v2171 = vpop.f32.mrf.mxu0
        %2172 = vdwg.mxu0
        %2173 = vrot.lane.b32.xlu0 %v2008, 32
        %v2174 = vpop.permute.xlu0 %2173
        %2175 = vrot.lane.b32.xlu0 %v2009, 32
        %v2176 = vpop.permute.xlu0 %2175
        %v2178 = vsel %vm1425, %v2174, 0
        %v2181 = vsel %vm1425, %v2176, 0
        %2183 = vmatpush.bf16.xpose.msra.mxu0 0
        %2184 = vmatpush.bf16.xpose.msra.mxu0 0
        %2185 = vmatpush.bf16.xpose.msra.mxu0 0
        %2186 = vmatpush.bf16.xpose.msra.mxu0 0
        %2187 = vmatpush.bf16.xpose.msra.mxu0 0
        %2188 = vmatpush.bf16.xpose.msra.mxu0 0
        %2189 = vmatpush.bf16.xpose.msra.mxu0 0
        %2190 = vmatpush.bf16.xpose.msra.mxu0 %v2181
        %2191 = vmatmul.bf16.gmra.mxu0 %v2178
        %v2192 = vpop.f32.mrf.mxu0
        %v2193 = vadd.f32 0.0, %v2192
        %v2194 = vpop.f32.mrf.mxu0
        %2195 = vdwg.mxu0
        %v2196 = vmul.f32 %v2193, 0.17677669
        %v2197 = vsel %vm2031, %v2196, -inf
        %2198 = vmax.xlane.f32.xlu0 %v2197
        %v2199 = vpop.xlane.xlu0 %2198
        %v2200 = vsub.f32 %v2196, %v2199
        %v2201 = vmul.f32 %v2200, 1.442695
        %v2202 = vpow.pop %v2201
        %v2203 = vsel %vm2031, %v2202, 0.0
        %2204 = vadd.xlane.f32.xlu0 %v2203
        %v2205 = vpop.xlane.xlu0 %2204
        %v2206 = vrcp.pop %v2205
        %v2207 = vmul.f32 %v2202, %v2206
        %v2208 = vpack.c.bf16 %v2207, %v2207
        %2209 = vrot.lane.b32.xlu0 %v2010, 32
        %v2210 = vpop.permute.xlu0 %2209
        %v2213 = vsel %vm2031, %v2208, 0
        %2215 = vmatpush.bf16.msra.mxu0 0
        %2216 = vmatpush.bf16.msra.mxu0 0
        %2217 = vmatpush.bf16.msra.mxu0 0
        %2218 = vmatpush.bf16.msra.mxu0 0
        %2219 = vmatpush.bf16.msra.mxu0 0
        %2220 = vmatpush.bf16.msra.mxu0 0
        %2221 = vmatpush.bf16.msra.mxu0 0
        %2222 = vmatpush.bf16.msra.mxu0 %v2210
        %2223 = vmatmul.bf16.gmra.mxu0 %v2213
        %v2224 = vpop.f32.mrf.mxu0
        %v2225 = vadd.f32 0.0, %v2224
        %v2226 = vpop.f32.mrf.mxu0
        %2227 = vdwg.mxu0
        %2229 = vrot.lane.b32.xlu0 %v2115, 32
        %v2230 = vpop.permute.xlu0 %2229
        %2233 = vrot.lane.b32.xlu0 %v2170, 64
        %v2234 = vpop.permute.xlu0 %2233
        %2237 = vrot.lane.b32.xlu0 %v2225, 96
        %v2238 = vpop.permute.xlu0 %2237
        %v2240 = vsel %vm1425, %v2057, %v2230
        %v2241 = vsel %vm1666, %v2240, %v2234
        %v2242 = vsel %vm1668, %v2241, %v2238
        %v2243 = vpack.c.bf16 %v2242, %v2242
        %v2245 = vperm.slane %v2007, 0
        %v2263 = vunpack.c.l.b16 %v1991
        %v2264 = vunpack.c.l.b16 %v1992
        %v2265 = vunpack.c.l.b16 %v1993
        %v2266 = vunpack.c.l.b16 %v1994
        %v2267 = vunpack.c.l.b16 %v1995
        %v2268 = vunpack.c.l.b16 %v1996
        %v2269 = vunpack.c.l.b16 %v1997
        %v2270 = vunpack.c.l.b16 %v1998
        %v2271 = vunpack.c.l.b16 %v1999
        %v2272 = vunpack.c.l.b16 %v2000
        %v2273 = vunpack.c.l.b16 %v2001
        %v2274 = vunpack.c.l.b16 %v2002
        %v2275 = vunpack.c.l.b16 %v2003
        %v2276 = vunpack.c.l.b16 %v2004
        %v2277 = vunpack.c.l.b16 %v2005
        %v2278 = vunpack.c.l.b16 %v2006
        %v2279 = vpack.c.b16 %v2264, %v2263
        %v2280 = vpack.c.b16 %v2266, %v2265
        %v2281 = vpack.c.b16 %v2268, %v2267
        %v2282 = vpack.c.b16 %v2270, %v2269
        %v2283 = vpack.c.b16 %v2272, %v2271
        %v2284 = vpack.c.b16 %v2274, %v2273
        %v2285 = vpack.c.b16 %v2276, %v2275
        %v2286 = vpack.c.b16 %v2278, %v2277
        %2295 = vmatpush.bf16.msra.mxu0 %v2286
        %2296 = vmatpush.bf16.msra.mxu0 %v2285
        %2297 = vmatpush.bf16.msra.mxu0 %v2284
        %2298 = vmatpush.bf16.msra.mxu0 %v2283
        %2299 = vmatpush.bf16.msra.mxu0 %v2282
        %2300 = vmatpush.bf16.msra.mxu0 %v2281
        %2301 = vmatpush.bf16.msra.mxu0 %v2280
        %2302 = vmatpush.bf16.msra.mxu0 %v2279
        %2303 = vmatmul.bf16.gmra.mxu0 %v2243
        %v2304 = vpop.f32.mrf.mxu0
        %v2305 = vadd.f32 %v2245, %v2304
        %v2306 = vpop.f32.mrf.mxu0
        %2307 = vdwg.mxu0
        %v2308 = vadd.f32 %v2305, %v1772
        %v2309 = vld [vmem:[%s1166] sm:$0x1]
        %v2310 = vld [vmem:[%s1169] sm:$0x1]
        %2311 = vadd.xlane.f32.xlu0 %v2308
        %v2312 = vpop.xlane.xlu0 %2311
        %v2313 = vmul.f32 %v2312, %v1746
        %v2314 = vsub.f32 %v2308, %v2313
        %v2315 = vmul.f32 %v2314, %v2314
        %2316 = vadd.xlane.f32.xlu0 %v2315
        %v2317 = vpop.xlane.xlu0 %2316
        %v2318 = vmul.f32 %v2317, %v1746
        %v2319 = vadd.f32 %v2318, 1e-12
        %v2320 = vrsqrt.pop %v2319
        %v2321 = vmul.f32 %v2320, %v2319
        %v2322 = vmul.f32 %v2321, %v2320
        %v2323 = vmul.f32 0.5, %v2322
        %v2324 = vsub.f32 1.5, %v2323
        %v2325 = vmul.f32 %v2320, %v2324
        %vm2326 = vweird.f32 %v2319
        %vm2327 = vweird.f32 %v2320
        %vm2328 = vmor %vm2326, %vm2327
        %v2329 = vsel %vm2328, %v2320, %v2325
        %v2330 = vmul.f32 %v2314, %v2329
        %v2332 = vperm.slane %v2309, 0
        %v2334 = vmul.f32 %v2330, %v2332
        %v2336 = vperm.slane %v2310, 0
        %v2338 = vadd.f32 %v2334, %v2336
        %v2339 = vpack.c.bf16 %v2338, %v2338
        %v2340 = vld [vmem:[%s980] sm:$0xff]
        %v2341 = vld [vmem:[%s980 + $0x8] sm:$0xff]
        %v2342 = vld [vmem:[%s980 + $0x10] sm:$0xff]
        %v2343 = vld [vmem:[%s980 + $0x18] sm:$0xff]
        %v2344 = vld [vmem:[%s980 + $0x20] sm:$0xff]
        %v2345 = vld [vmem:[%s980 + $0x28] sm:$0xff]
        %v2346 = vld [vmem:[%s980 + $0x30] sm:$0xff]
        %v2347 = vld [vmem:[%s980 + $0x38] sm:$0xff]
        %v2348 = vld [vmem:[%s980 + $0x40] sm:$0xff]
        %v2349 = vld [vmem:[%s980 + $0x48] sm:$0xff]
        %v2350 = vld [vmem:[%s980 + $0x50] sm:$0xff]
        %v2351 = vld [vmem:[%s980 + $0x58] sm:$0xff]
        %v2352 = vld [vmem:[%s980 + $0x60] sm:$0xff]
        %v2353 = vld [vmem:[%s980 + $0x68] sm:$0xff]
        %v2354 = vld [vmem:[%s980 + $0x70] sm:$0xff]
        %v2355 = vld [vmem:[%s980 + $0x78] sm:$0xff]
        %v2356 = vld [vmem:[%s1173] sm:$0x3]
        %v2358 = vperm.slane %v2356, 0
        %v2359 = vperm.slane %v2356, 1
        %v2378 = vunpack.c.l.b16 %v2340
        %v2379 = vunpack.c.h.b16 %v2340
        %v2380 = vunpack.c.l.b16 %v2341
        %v2381 = vunpack.c.h.b16 %v2341
        %v2382 = vunpack.c.l.b16 %v2342
        %v2383 = vunpack.c.h.b16 %v2342
        %v2384 = vunpack.c.l.b16 %v2343
        %v2385 = vunpack.c.h.b16 %v2343
        %v2386 = vunpack.c.l.b16 %v2344
        %v2387 = vunpack.c.h.b16 %v2344
        %v2388 = vunpack.c.l.b16 %v2345
        %v2389 = vunpack.c.h.b16 %v2345
        %v2390 = vunpack.c.l.b16 %v2346
        %v2391 = vunpack.c.h.b16 %v2346
        %v2392 = vunpack.c.l.b16 %v2347
        %v2393 = vunpack.c.h.b16 %v2347
        %v2394 = vunpack.c.l.b16 %v2348
        %v2395 = vunpack.c.h.b16 %v2348
        %v2396 = vunpack.c.l.b16 %v2349
        %v2397 = vunpack.c.h.b16 %v2349
        %v2398 = vunpack.c.l.b16 %v2350
        %v2399 = vunpack.c.h.b16 %v2350
        %v2400 = vunpack.c.l.b16 %v2351
        %v2401 = vunpack.c.h.b16 %v2351
        %v2402 = vunpack.c.l.b16 %v2352
        %v2403 = vunpack.c.h.b16 %v2352
        %v2404 = vunpack.c.l.b16 %v2353
        %v2405 = vunpack.c.h.b16 %v2353
        %v2406 = vunpack.c.l.b16 %v2354
        %v2407 = vunpack.c.h.b16 %v2354
        %v2408 = vunpack.c.l.b16 %v2355
        %v2409 = vunpack.c.h.b16 %v2355
        %v2410 = vpack.c.b16 %v2380, %v2378
        %v2411 = vpack.c.b16 %v2381, %v2379
        %v2412 = vpack.c.b16 %v2384, %v2382
        %v2413 = vpack.c.b16 %v2385, %v2383
        %v2414 = vpack.c.b16 %v2388, %v2386
        %v2415 = vpack.c.b16 %v2389, %v2387
        %v2416 = vpack.c.b16 %v2392, %v2390
        %v2417 = vpack.c.b16 %v2393, %v2391
        %v2418 = vpack.c.b16 %v2396, %v2394
        %v2419 = vpack.c.b16 %v2397, %v2395
        %v2420 = vpack.c.b16 %v2400, %v2398
        %v2421 = vpack.c.b16 %v2401, %v2399
        %v2422 = vpack.c.b16 %v2404, %v2402
        %v2423 = vpack.c.b16 %v2405, %v2403
        %v2424 = vpack.c.b16 %v2408, %v2406
        %v2425 = vpack.c.b16 %v2409, %v2407
        %2442 = vmatpush.bf16.msra.mxu0 %v2424
        %2443 = vmatpush.bf16.msra.mxu0 %v2422
        %2444 = vmatpush.bf16.msra.mxu0 %v2420
        %2445 = vmatpush.bf16.msra.mxu0 %v2418
        %2446 = vmatpush.bf16.msra.mxu0 %v2416
        %2447 = vmatpush.bf16.msra.mxu0 %v2414
        %2448 = vmatpush.bf16.msra.mxu0 %v2412
        %2449 = vmatpush.bf16.msra.mxu0 %v2410
        %2450 = vmatmul.bf16.gmra.mxu0 %v2339
        %v2451 = vpop.f32.mrf.mxu0
        %v2452 = vadd.f32 %v2358, %v2451
        %v2453 = vpop.f32.mrf.mxu0
        %2454 = vdwg.mxu0
        %2455 = vmatpush.bf16.msra.mxu0 %v2425
        %2456 = vmatpush.bf16.msra.mxu0 %v2423
        %2457 = vmatpush.bf16.msra.mxu0 %v2421
        %2458 = vmatpush.bf16.msra.mxu0 %v2419
        %2459 = vmatpush.bf16.msra.mxu0 %v2417
        %2460 = vmatpush.bf16.msra.mxu0 %v2415
        %2461 = vmatpush.bf16.msra.mxu0 %v2413
        %2462 = vmatpush.bf16.msra.mxu0 %v2411
        %2463 = vmatmul.bf16.gmra.mxu0 %v2339
        %v2464 = vpop.f32.mrf.mxu0
        %v2465 = vadd.f32 %v2359, %v2464
        %v2466 = vpop.f32.mrf.mxu0
        %2467 = vdwg.mxu0
        %v2468 = vmul.f32 %v2452, 0.70710677
        %v2469 = vmul.f32 %v2465, 0.70710677
        %v2470 = vand.u32 2147483647, %v2468
        %v2471 = vand.u32 2147483647, %v2469
        %v2472 = vmul.f32 %v2470, 0.3275911
        %v2473 = vmul.f32 %v2471, 0.3275911
        %v2474 = vadd.f32 %v2472, 1.0
        %v2475 = vadd.f32 %v2473, 1.0
        %v2476 = vrcp.pop %v2474
        %v2477 = vmul.f32 %v2474, %v2476
        %v2478 = vsub.f32 1.0, %v2477
        %v2479 = vmul.f32 %v2476, %v2478
        %v2480 = vadd.f32 %v2476, %v2479
        %vm2481 = vweird.f32 %v2474
        %vm2482 = vweird.f32 %v2476
        %vm2483 = vmor %vm2481, %vm2482
        %v2484 = vsel %vm2483, %v2476, %v2480
        %v2485 = vand.u32 2147483647, %v2474
        %vm2486 = vcmp.eq.f32.partialorder %v2485, 8.507059e+37
        %v2487 = vand.u32 %v2474, 2147483648
        %v2488 = vor.u32 1.1754944e-38, %v2487
        %v2489 = vsel %vm2486, %v2488, %v2484
        %v2490 = vmul.f32 1.0, %v2489
        %v2491 = vrcp.pop %v2475
        %v2492 = vmul.f32 %v2475, %v2491
        %v2493 = vsub.f32 1.0, %v2492
        %v2494 = vmul.f32 %v2491, %v2493
        %v2495 = vadd.f32 %v2491, %v2494
        %vm2496 = vweird.f32 %v2475
        %vm2497 = vweird.f32 %v2491
        %vm2498 = vmor %vm2496, %vm2497
        %v2499 = vsel %vm2498, %v2491, %v2495
        %v2500 = vand.u32 2147483647, %v2475
        %vm2501 = vcmp.eq.f32.partialorder %v2500, 8.507059e+37
        %v2502 = vand.u32 %v2475, 2147483648
        %v2503 = vor.u32 1.1754944e-38, %v2502
        %v2504 = vsel %vm2501, %v2503, %v2499
        %v2505 = vmul.f32 1.0, %v2504
        %v2506 = vmul.f32 %v2490, 1.0614054
        %v2507 = vmul.f32 %v2505, 1.0614054
        %v2508 = vadd.f32 %v2506, -1.4531521
        %v2509 = vadd.f32 %v2507, -1.4531521
        %v2510 = vmul.f32 %v2490, %v2508
        %v2511 = vmul.f32 %v2505, %v2509
        %v2512 = vadd.f32 %v2510, 1.4214138
        %v2513 = vadd.f32 %v2511, 1.4214138
        %v2514 = vmul.f32 %v2490, %v2512
        %v2515 = vmul.f32 %v2505, %v2513
        %v2516 = vadd.f32 %v2514, -0.28449672
        %v2517 = vadd.f32 %v2515, -0.28449672
        %v2518 = vmul.f32 %v2490, %v2516
        %v2519 = vmul.f32 %v2505, %v2517
        %v2520 = vadd.f32 %v2518, 0.2548296
        %v2521 = vadd.f32 %v2519, 0.2548296
        %v2522 = vmul.f32 %v2490, %v2520
        %v2523 = vmul.f32 %v2505, %v2521
        %v2524 = vsub.f32 0.0, %v2470
        %v2525 = vsub.f32 0.0, %v2471
        %v2526 = vmul.f32 %v2524, %v2470
        %v2527 = vmul.f32 %v2525, %v2471
        %v2528 = vmul.f32 %v2526, 1.442695
        %v2529 = vpow.pop %v2528
        %v2530 = vmul.f32 %v2527, 1.442695
        %v2531 = vpow.pop %v2530
        %v2532 = vmul.f32 %v2522, %v2529
        %v2533 = vmul.f32 %v2523, %v2531
        %v2534 = vsub.f32 1.0, %v2532
        %v2535 = vsub.f32 1.0, %v2533
        %vm2536 = vcmp.ge.f32.partialorder %v2468, 0.0
        %vm2537 = vcmp.ge.f32.partialorder %v2469, 0.0
        %v2538 = vsub.f32 0.0, %v2534
        %v2539 = vsub.f32 0.0, %v2535
        %v2540 = vsel %vm2536, %v2534, %v2538
        %v2541 = vsel %vm2537, %v2535, %v2539
        %v2542 = vmul.f32 %v2452, 0.5
        %v2543 = vmul.f32 %v2465, 0.5
        %v2544 = vadd.f32 %v2540, 1.0
        %v2545 = vadd.f32 %v2541, 1.0
        %v2546 = vmul.f32 %v2542, %v2544
        %v2547 = vmul.f32 %v2543, %v2545
        %v2548 = vpack.c.bf16 %v2546, %v2546
        %v2549 = vpack.c.bf16 %v2547, %v2547
        %v2550 = vld [vmem:[%s990] sm:$0xf]
        %v2551 = vld [vmem:[%s990 + $0x4] sm:$0xf]
        %v2552 = vld [vmem:[%s990 + $0x8] sm:$0xf]
        %v2553 = vld [vmem:[%s990 + $0xc] sm:$0xf]
        %v2554 = vld [vmem:[%s990 + $0x10] sm:$0xf]
        %v2555 = vld [vmem:[%s990 + $0x14] sm:$0xf]
        %v2556 = vld [vmem:[%s990 + $0x18] sm:$0xf]
        %v2557 = vld [vmem:[%s990 + $0x1c] sm:$0xf]
        %v2558 = vld [vmem:[%s990 + $0x20] sm:$0xf]
        %v2559 = vld [vmem:[%s990 + $0x24] sm:$0xf]
        %v2560 = vld [vmem:[%s990 + $0x28] sm:$0xf]
        %v2561 = vld [vmem:[%s990 + $0x2c] sm:$0xf]
        %v2562 = vld [vmem:[%s990 + $0x30] sm:$0xf]
        %v2563 = vld [vmem:[%s990 + $0x34] sm:$0xf]
        %v2564 = vld [vmem:[%s990 + $0x38] sm:$0xf]
        %v2565 = vld [vmem:[%s990 + $0x3c] sm:$0xf]
        %v2566 = vld [vmem:[%s990 + $0x40] sm:$0xf]
        %v2567 = vld [vmem:[%s990 + $0x44] sm:$0xf]
        %v2568 = vld [vmem:[%s990 + $0x48] sm:$0xf]
        %v2569 = vld [vmem:[%s990 + $0x4c] sm:$0xf]
        %v2570 = vld [vmem:[%s990 + $0x50] sm:$0xf]
        %v2571 = vld [vmem:[%s990 + $0x54] sm:$0xf]
        %v2572 = vld [vmem:[%s990 + $0x58] sm:$0xf]
        %v2573 = vld [vmem:[%s990 + $0x5c] sm:$0xf]
        %v2574 = vld [vmem:[%s990 + $0x60] sm:$0xf]
        %v2575 = vld [vmem:[%s990 + $0x64] sm:$0xf]
        %v2576 = vld [vmem:[%s990 + $0x68] sm:$0xf]
        %v2577 = vld [vmem:[%s990 + $0x6c] sm:$0xf]
        %v2578 = vld [vmem:[%s990 + $0x70] sm:$0xf]
        %v2579 = vld [vmem:[%s990 + $0x74] sm:$0xf]
        %v2580 = vld [vmem:[%s990 + $0x78] sm:$0xf]
        %v2581 = vld [vmem:[%s990 + $0x7c] sm:$0xf]
        %v2582 = vld [vmem:[%s1176] sm:$0x1]
        %v2584 = vperm.slane %v2582, 0
        %v2618 = vunpack.c.l.b16 %v2550
        %v2619 = vunpack.c.l.b16 %v2551
        %v2620 = vunpack.c.l.b16 %v2552
        %v2621 = vunpack.c.l.b16 %v2553
        %v2622 = vunpack.c.l.b16 %v2554
        %v2623 = vunpack.c.l.b16 %v2555
        %v2624 = vunpack.c.l.b16 %v2556
        %v2625 = vunpack.c.l.b16 %v2557
        %v2626 = vunpack.c.l.b16 %v2558
        %v2627 = vunpack.c.l.b16 %v2559
        %v2628 = vunpack.c.l.b16 %v2560
        %v2629 = vunpack.c.l.b16 %v2561
        %v2630 = vunpack.c.l.b16 %v2562
        %v2631 = vunpack.c.l.b16 %v2563
        %v2632 = vunpack.c.l.b16 %v2564
        %v2633 = vunpack.c.l.b16 %v2565
        %v2634 = vunpack.c.l.b16 %v2566
        %v2635 = vunpack.c.l.b16 %v2567
        %v2636 = vunpack.c.l.b16 %v2568
        %v2637 = vunpack.c.l.b16 %v2569
        %v2638 = vunpack.c.l.b16 %v2570
        %v2639 = vunpack.c.l.b16 %v2571
        %v2640 = vunpack.c.l.b16 %v2572
        %v2641 = vunpack.c.l.b16 %v2573
        %v2642 = vunpack.c.l.b16 %v2574
        %v2643 = vunpack.c.l.b16 %v2575
        %v2644 = vunpack.c.l.b16 %v2576
        %v2645 = vunpack.c.l.b16 %v2577
        %v2646 = vunpack.c.l.b16 %v2578
        %v2647 = vunpack.c.l.b16 %v2579
        %v2648 = vunpack.c.l.b16 %v2580
        %v2649 = vunpack.c.l.b16 %v2581
        %v2650 = vpack.c.b16 %v2619, %v2618
        %v2651 = vpack.c.b16 %v2621, %v2620
        %v2652 = vpack.c.b16 %v2623, %v2622
        %v2653 = vpack.c.b16 %v2625, %v2624
        %v2654 = vpack.c.b16 %v2627, %v2626
        %v2655 = vpack.c.b16 %v2629, %v2628
        %v2656 = vpack.c.b16 %v2631, %v2630
        %v2657 = vpack.c.b16 %v2633, %v2632
        %v2658 = vpack.c.b16 %v2635, %v2634
        %v2659 = vpack.c.b16 %v2637, %v2636
        %v2660 = vpack.c.b16 %v2639, %v2638
        %v2661 = vpack.c.b16 %v2641, %v2640
        %v2662 = vpack.c.b16 %v2643, %v2642
        %v2663 = vpack.c.b16 %v2645, %v2644
        %v2664 = vpack.c.b16 %v2647, %v2646
        %v2665 = vpack.c.b16 %v2649, %v2648
        %2682 = vmatpush.bf16.msra.mxu0 %v2657
        %2683 = vmatpush.bf16.msra.mxu0 %v2656
        %2684 = vmatpush.bf16.msra.mxu0 %v2655
        %2685 = vmatpush.bf16.msra.mxu0 %v2654
        %2686 = vmatpush.bf16.msra.mxu0 %v2653
        %2687 = vmatpush.bf16.msra.mxu0 %v2652
        %2688 = vmatpush.bf16.msra.mxu0 %v2651
        %2689 = vmatpush.bf16.msra.mxu0 %v2650
        %2690 = vmatmul.bf16.gmra.mxu0 %v2548
        %v2691 = vpop.f32.mrf.mxu0
        %v2692 = vadd.f32 %v2584, %v2691
        %v2693 = vpop.f32.mrf.mxu0
        %2694 = vdwg.mxu0
        %2695 = vmatpush.bf16.msra.mxu0 %v2665
        %2696 = vmatpush.bf16.msra.mxu0 %v2664
        %2697 = vmatpush.bf16.msra.mxu0 %v2663
        %2698 = vmatpush.bf16.msra.mxu0 %v2662
        %2699 = vmatpush.bf16.msra.mxu0 %v2661
        %2700 = vmatpush.bf16.msra.mxu0 %v2660
        %2701 = vmatpush.bf16.msra.mxu0 %v2659
        %2702 = vmatpush.bf16.msra.mxu0 %v2658
        %2703 = vmatmul.bf16.gmra.mxu0 %v2549
        %v2704 = vpop.f32.mrf.mxu0
        %v2705 = vadd.f32 %v2692, %v2704
        %v2706 = vpop.f32.mrf.mxu0
        %2707 = vdwg.mxu0
        %v2708 = vadd.f32 %v2705, %v2338
        %v2709 = vld [vmem:[%s1179] sm:$0x1]
        %v2710 = vld [vmem:[%s1182] sm:$0x1]
        %2711 = vadd.xlane.f32.xlu0 %v2708
        %v2712 = vpop.xlane.xlu0 %2711
        %v2713 = vmul.f32 %v2712, %v1746
        %v2714 = vsub.f32 %v2708, %v2713
        %v2715 = vmul.f32 %v2714, %v2714
        %2716 = vadd.xlane.f32.xlu0 %v2715
        %v2717 = vpop.xlane.xlu0 %2716
        %v2718 = vmul.f32 %v2717, %v1746
        %v2719 = vadd.f32 %v2718, 1e-12
        %v2720 = vrsqrt.pop %v2719
        %v2721 = vmul.f32 %v2720, %v2719
        %v2722 = vmul.f32 %v2721, %v2720
        %v2723 = vmul.f32 0.5, %v2722
        %v2724 = vsub.f32 1.5, %v2723
        %v2725 = vmul.f32 %v2720, %v2724
        %vm2726 = vweird.f32 %v2719
        %vm2727 = vweird.f32 %v2720
        %vm2728 = vmor %vm2726, %vm2727
        %v2729 = vsel %vm2728, %v2720, %v2725
        %v2730 = vmul.f32 %v2714, %v2729
        %v2732 = vperm.slane %v2709, 0
        %v2734 = vmul.f32 %v2730, %v2732
        %v2736 = vperm.slane %v2710, 0
        %v2738 = vadd.f32 %v2734, %v2736
        %2739 = vst [vmem:[#allocation2] sm:$0xff] %v2738
        %2740 = vst [vmem:[%s1186] sm:$0xff] %v2738
        %p2741 = scmp.lt.s32.totalorder %s49, 1
        %s2742 = scalar_select %p2741, %s49, 1
        %s2743 = smul.addr %s2742, 8
        %s2744 = scalar_lea.vmem %s22, %s2743
        // Predicated region
        $region141: #{al_projector_forward.7} parent=107 // pred_check
          %p2745 = pneg %p647
        $region142: #{al_projector_forward.7} parent=107 // pred_check_branch
          %2747 = sbr.rel (%p2745) target = $region144
        $region143: #{al_projector_forward.7} parent=107 // pred_region
          _
        $region144: #{al_projector_forward.7} parent=107 // pred_fallthru
          _
      $region108: #{al_projector_forward.7} parent=5 // pred_fallthru
        _
      %p2748 = scmp.le.s32.totalorder 2, %s40
      // Predicated region
      $region145: #{al_projector_forward.7} parent=5 // pred_check
        %p2749 = pneg %p2748
      $region146: #{al_projector_forward.7} parent=5 // pred_check_branch
        %2751 = sbr.rel (%p2749) target = $region148
      $region147: #{al_projector_forward.7} parent=5 // pred_region
        %s2752 = ssub.s32 %s40, 2
        // Predicated region
        $region149: #{al_projector_forward.7} parent=147 // pred_check
          %p2753 = pneg %p653
        $region150: #{al_projector_forward.7} parent=147 // pred_check_branch
          %2755 = sbr.rel (%p2753) target = $region152
        $region151: #{al_projector_forward.7} parent=147 // pred_region
          %p2756 = scmp.lt.s32.totalorder %s51, 1
          %s2757 = scalar_select %p2756, %s51, 1
          %s2758 = smul.addr %s2757, 8
          %s2759 = scalar_lea.vmem %s22, %s2758
        $region152: #{al_projector_forward.7} parent=147 // pred_fallthru
          _
      $region148: #{al_projector_forward.7} parent=5 // pred_fallthru
        _
    $region6: #{al_projector_forward.7} parent=1 // loop_footer
      %s44 = sadd.s32 1, %s40
    $region7: #{al_projector_forward.7} parent=1 // loop_footer_branch
      %39 = sbr.rel target = $region3
    $region8: #{al_projector_forward.7} parent=1 // loop_exit
      _
    %2760 = vsyncpa [#allocation4], 1
    %s2761 = scalar_lea.sflag [#allocation4], 1
    %2762 = vsyncpa %s2761, 1
    %2763 = vsyncpa [#allocation6], 1
    %s2764 = scalar_lea.sflag [#allocation6], 1
    %2765 = vsyncpa %s2764, 1
    %2766 = vsyncpa [#allocation9], 1
    %s2767 = scalar_lea.sflag [#allocation9], 1
    %2768 = vsyncpa %s2767, 1
    %2769 = vsyncpa [#allocation12], 1
    %s2770 = scalar_lea.sflag [#allocation12], 1
    %2771 = vsyncpa %s2770, 1

</llo_original>
